<compile_context>
chip_gen: v6e
topology: v6e:2x2x1
jax: 0.10.0
libtpu: 0.0.40
codegen_flags: <defaults>
</compile_context>

<pallas_src>
import functools

import jax
import jax.numpy as jnp
import numpy as np
from jax import lax
from jax.experimental import pallas as pl
from jax.experimental.pallas import tpu as pltpu

# Set to jnp.bfloat16 on v6e/v7x for 2x MXU throughput (accumulation stays f32).
MATMUL_DTYPE = jnp.float32

_TAPS = tuple((kh, kw) for kh in range(3) for kw in range(3))


# --------------------------------------------------------------------------
# In-kernel helpers
# --------------------------------------------------------------------------
def _im2col_dot(src_ref, w_ref, p_ref, *, cin, cin_pad, wp, lc):
    """3x3 conv over the flat zero-padded stream as a single MXU matmul.

    src_ref : (cin, L)            flat padded activation stream
    w_ref   : (cout, 9*cin_pad)   reshaped (and sublane-padded) weights
    p_ref   : (9*cin_pad, lc)     VMEM patch scratch
    Returns (cout, lc) f32.
    """
    if cin_pad != cin:
        # Padding rows multiply against zero weight columns, but must not hold
        # uninitialized (possibly NaN) VMEM.  Only hit by the tiny Cin=3 conv.
        p_ref[...] = jnp.zeros_like(p_ref)
    for t, (kh, kw) in enumerate(_TAPS):
        shift = kh * wp + kw
        p_ref[t * cin_pad:t * cin_pad + cin, :] = (
            src_ref[:, shift:shift + lc].astype(p_ref.dtype))
    return jnp.dot(w_ref[...], p_ref[...], preferred_element_type=jnp.float32)


def _store_flat(o_ref, y, *, wp, lc):
    """Write y (cout, lc) back in flat padded layout (offset wp+1) and zero the
    global head/tail halo columns.  Interior halo columns were already zeroed
    by the interior mask applied to y."""
    cout = o_ref.shape[0]
    total = o_ref.shape[1]
    zeros = jnp.zeros((cout, wp + 1), o_ref.dtype)
    o_ref[:, 0:wp + 1] = zeros
    o_ref[:, wp + 1:wp + 1 + lc] = y.astype(o_ref.dtype)
    o_ref[:, wp + 1 + lc:total] = zeros


# --------------------------------------------------------------------------
# Kernels
# --------------------------------------------------------------------------
def _conv_kernel(x_ref, w_ref, mask_ref, bias_ref, o_ref, p_ref,
                 *, cin, cin_pad, wp, lc):
    """conv3x3 (+ per-channel output bias, used to fuse add_mean)."""
    y = _im2col_dot(x_ref, w_ref, p_ref, cin=cin, cin_pad=cin_pad, wp=wp, lc=lc)
    y = (y + bias_ref[...]) * mask_ref[...]
    _store_flat(o_ref, y, wp=wp, lc=lc)


def _conv_residual_kernel(x_ref, w_ref, res_ref, mask_ref, o_ref, p_ref,
                          *, cin, cin_pad, wp, lc):
    """conv3x3 + residual add (conv_mid + long skip connection)."""
    y = _im2col_dot(x_ref, w_ref, p_ref, cin=cin, cin_pad=cin_pad, wp=wp, lc=lc)
    y = (y + res_ref[:, wp + 1:wp + 1 + lc]) * mask_ref[...]
    _store_flat(o_ref, y, wp=wp, lc=lc)


def _resblock_kernel(x_ref, w1_ref, w2_ref, mask_ref, o_ref, p_ref, mid_ref,
                     *, cin, cin_pad, wp, lc):
    """Fused EDSR residual block: conv3x3 -> ReLU -> conv3x3 -> *0.1 -> +x."""
    # conv1 + ReLU, written back in flat padded layout so conv2 reuses the
    # same shifted-slice patch construction.
    y1 = _im2col_dot(x_ref, w1_ref, p_ref, cin=cin, cin_pad=cin_pad, wp=wp, lc=lc)
    y1 = jnp.maximum(y1, 0.0) * mask_ref[...]
    _store_flat(mid_ref, y1, wp=wp, lc=lc)

    # conv2 * 0.1 + identity
    y2 = _im2col_dot(mid_ref, w2_ref, p_ref, cin=cin, cin_pad=cin_pad, wp=wp, lc=lc)
    y2 = (y2 * 0.1 + x_ref[:, wp + 1:wp + 1 + lc]) * mask_ref[...]
    _store_flat(o_ref, y2, wp=wp, lc=lc)


# --------------------------------------------------------------------------
# pallas_call builders (single grid step: batch folded into the flat axis)
# --------------------------------------------------------------------------
def _flat_conv(x_flat, wmat, mask, bias, *, wp):
    cin, total = x_flat.shape
    cout, kdim = wmat.shape
    lc = total - 2 * wp - 2
    kernel = functools.partial(_conv_kernel, cin=cin, cin_pad=kdim // 9,
                               wp=wp, lc=lc)
    return pl.pallas_call(
        kernel,
        out_shape=jax.ShapeDtypeStruct((cout, total), jnp.float32),
        grid=(1,),
        in_specs=[
            pl.BlockSpec((cin, total), lambda i: (0, 0)),
            pl.BlockSpec((cout, kdim), lambda i: (0, 0)),
            pl.BlockSpec((1, lc), lambda i: (0, 0)),
            pl.BlockSpec((cout, 1), lambda i: (0, 0)),
        ],
        out_specs=pl.BlockSpec((cout, total), lambda i: (0, 0)),
        scratch_shapes=[pltpu.VMEM((kdim, lc), MATMUL_DTYPE)],
        compiler_params=pltpu.CompilerParams(
            dimension_semantics=("arbitrary",)),
    )(x_flat, wmat, mask, bias)


def _flat_conv_residual(x_flat, wmat, residual, mask, *, wp):
    cin, total = x_flat.shape
    cout, kdim = wmat.shape
    lc = total - 2 * wp - 2
    kernel = functools.partial(_conv_residual_kernel, cin=cin,
                               cin_pad=kdim // 9, wp=wp, lc=lc)
    return pl.pallas_call(
        kernel,
        out_shape=jax.ShapeDtypeStruct((cout, total), jnp.float32),
        grid=(1,),
        in_specs=[
            pl.BlockSpec((cin, total), lambda i: (0, 0)),
            pl.BlockSpec((cout, kdim), lambda i: (0, 0)),
            pl.BlockSpec((cout, total), lambda i: (0, 0)),
            pl.BlockSpec((1, lc), lambda i: (0, 0)),
        ],
        out_specs=pl.BlockSpec((cout, total), lambda i: (0, 0)),
        scratch_shapes=[pltpu.VMEM((kdim, lc), MATMUL_DTYPE)],
        compiler_params=pltpu.CompilerParams(
            dimension_semantics=("arbitrary",)),
    )(x_flat, wmat, residual, mask)


def _flat_resblock(x_flat, w1mat, w2mat, mask, *, wp):
    cin, total = x_flat.shape
    cout, kdim = w1mat.shape
    lc = total - 2 * wp - 2
    kernel = functools.partial(_resblock_kernel, cin=cin, cin_pad=kdim // 9,
                               wp=wp, lc=lc)
    return pl.pallas_call(
        kernel,
        out_shape=jax.ShapeDtypeStruct((cout, total), jnp.float32),
        grid=(1,),
        in_specs=[
            pl.BlockSpec((cin, total), lambda i: (0, 0)),
            pl.BlockSpec((cout, kdim), lambda i: (0, 0)),
            pl.BlockSpec((cout, kdim), lambda i: (0, 0)),
            pl.BlockSpec((1, lc), lambda i: (0, 0)),
        ],
        out_specs=pl.BlockSpec((cout, total), lambda i: (0, 0)),
        scratch_shapes=[pltpu.VMEM((kdim, lc), MATMUL_DTYPE),
                        pltpu.VMEM((cout, total), jnp.float32)],
        compiler_params=pltpu.CompilerParams(
            dimension_semantics=("arbitrary",)),
    )(x_flat, w1mat, w2mat, mask)


# --------------------------------------------------------------------------
# Host-side layout / parameter helpers
# --------------------------------------------------------------------------
def _flatten_padded(x_nchw):
    """(N, C, H, W) -> flat zero-padded stream (C, N*(H+2)*(W+2))."""
    n, c, h, w = x_nchw.shape
    xp = jnp.pad(x_nchw, ((0, 0), (0, 0), (1, 1), (1, 1)))
    return jnp.transpose(xp, (1, 0, 2, 3)).reshape(c, n * (h + 2) * (w + 2))


def _unflatten(x_flat, n, h, w):
    """Flat padded stream (C, N*(H+2)*(W+2)) -> (N, C, H, W) interior."""
    c = x_flat.shape[0]
    x = x_flat.reshape(c, n, h + 2, w + 2)
    return jnp.transpose(x, (1, 0, 2, 3))[:, :, 1:h + 1, 1:w + 1]


def _interior_mask(n, h, w):
    """1.0 at conv output columns that map to real pixels, 0.0 at halo/junk."""
    wp = w + 2
    lp = (h + 2) * wp
    lc = n * lp - 2 * wp - 2
    p = jnp.arange(lc, dtype=jnp.int32)
    a = p % lp
    valid = ((a // wp) < h) & ((a % wp) < w)
    return valid.astype(jnp.float32).reshape(1, lc)


def _wmat(w_oihw):
    """PyTorch (Cout, Cin, 3, 3) -> (Cout, 9*Cin_pad) matmul weights; Cin is
    padded to a multiple of 8 with zero columns so patch stores stay aligned."""
    cout, cin = w_oihw.shape[:2]
    cin_pad = -(-cin // 8) * 8
    w = jnp.transpose(w_oihw, (0, 2, 3, 1))  # (cout, kh, kw, cin)
    if cin_pad != cin:
        w = jnp.pad(w, ((0, 0), (0, 0), (0, 0), (0, cin_pad - cin)))
    return w.reshape(cout, 9 * cin_pad).astype(MATMUL_DTYPE)


def _pixel_shuffle(x_nchw, r):
    n, c, h, w = x_nchw.shape
    co = c // (r * r)
    x = x_nchw.reshape(n, co, r, r, h, w)
    x = jnp.transpose(x, (0, 1, 4, 2, 5, 3))
    return x.reshape(n, co, h * r, w * r)


# --------------------------------------------------------------------------
# Full EDSR Net forward
# --------------------------------------------------------------------------
def edsr_forward(x_nchw, params):
    n, _, h, w = x_nchw.shape
    wp = w + 2
    mean = params["rgb_mean"].reshape(1, 3, 1, 1)
    dim = params["w_input"].shape[0]

    # TODO(synk): MeanShift (frozen identity 1x1 conv + bias) has no conv work;
    # sub_mean is a host-side constant shift, add_mean is fused as conv_output's
    # per-channel output bias inside the Pallas kernel.
    x_flat = _flatten_padded(x_nchw - mean)
    mask = _interior_mask(n, h, w)
    zeros_dim = jnp.zeros((dim, 1), jnp.float32)

    out = _flat_conv(x_flat, _wmat(params["w_input"]), mask, zeros_dim, wp=wp)
    residual = out
    for bw1, bw2 in params["res_blocks"]:
        out = _flat_resblock(out, _wmat(bw1), _wmat(bw2), mask, wp=wp)
    out = _flat_conv_residual(out, _wmat(params["w_mid"]), residual, mask, wp=wp)

    up = _flat_conv(out, _wmat(params["w_up"]), mask,
                    jnp.zeros((4 * dim, 1), jnp.float32), wp=wp)

    # TODO(synk): PixelShuffle + re-padding is a pure layout permutation; kept
    # as XLA reshape/transpose glue rather than a dedicated Pallas kernel.
    up_img = _pixel_shuffle(_unflatten(up, n, h, w), 2)     # (N, dim, 2H, 2W)

    h2, w2x = 2 * h, 2 * w
    wp2 = w2x + 2
    mask2 = _interior_mask(n, h2, w2x)
    out_flat = _flat_conv(_flatten_padded(up_img), _wmat(params["w_output"]),
                          mask2, params["rgb_mean"].reshape(3, 1), wp=wp2)
    return _unflatten(out_flat, n, h2, w2x)


# --------------------------------------------------------------------------
# Pure-JAX reference of the PyTorch forward (for the correctness check)
# --------------------------------------------------------------------------
def _reference_forward(x_nchw, params):
    mean = params["rgb_mean"].reshape(1, 3, 1, 1)
    dn = ("NCHW", "OIHW", "NCHW")

    def conv(x, wgt):
        return lax.conv_general_dilated(x, wgt, (1, 1), "SAME",
                                        dimension_numbers=dn)

    out = conv(x_nchw - mean, params["w_input"])
    residual = out
    for bw1, bw2 in params["res_blocks"]:
        out = conv(jnp.maximum(conv(out, bw1), 0.0), bw2) * 0.1 + out
    out = conv(out, params["w_mid"]) + residual
    out = _pixel_shuffle(conv(out, params["w_up"]), 2)
    out = conv(out, params["w_output"]) + mean
    return out


if __name__ == "__main__":
    # Small shapes consistent with the module: 3-channel RGB input, internal
    # dim=8, 2 residual blocks, 16x16 images, batch 2 (2x upscale -> 32x32).
    N, H, W = 2, 16, 16
    DIM, NUM_BLOCK = 8, 2

    key = jax.random.PRNGKey(0)
    keys = jax.random.split(key, 6 + 2 * NUM_BLOCK)

    def conv_w(k, cout, cin):
        # PyTorch init in Net.__init__: normal(0, sqrt(2 / (k*k*out_channels)))
        std = float(np.sqrt(2.0 / (3 * 3 * cout)))
        return std * jax.random.normal(k, (cout, cin, 3, 3), jnp.float32)

    params = {
        "rgb_mean": jnp.array([0.4488, 0.4371, 0.4040], jnp.float32),
        "w_input": conv_w(keys[0], DIM, 3),
        "res_blocks": [(conv_w(keys[2 + 2 * i], DIM, DIM),
                        conv_w(keys[3 + 2 * i], DIM, DIM))
                       for i in range(NUM_BLOCK)],
        "w_mid": conv_w(keys[1], DIM, DIM),
        "w_up": conv_w(keys[2 + 2 * NUM_BLOCK], 4 * DIM, DIM),
        "w_output": conv_w(keys[3 + 2 * NUM_BLOCK], 3, DIM),
    }
    x = jax.random.uniform(keys[4 + 2 * NUM_BLOCK], (N, 3, H, W), jnp.float32)

    y = jax.jit(edsr_forward)(x, params)
    y = jax.block_until_ready(y)
    assert y.shape == (N, 3, 2 * H, 2 * W), y.shape

    y_ref = jax.jit(_reference_forward)(x, params)
    np.testing.assert_allclose(np.asarray(y), np.asarray(y_ref),
                               rtol=2e-3, atol=2e-3)

    print("KERNEL_OK")
</pallas_src>

<mosaic_0001>
module attributes {stable_mosaic.version = 11 : i64} {
  func.func @_conv_kernel(%arg0: i32, %arg1: memref<3x648xf32, #tpu.memory_space<vmem>>, %arg2: memref<8x72xf32, #tpu.memory_space<vmem>>, %arg3: memref<1x610xf32, #tpu.memory_space<vmem>>, %arg4: memref<8x1xf32, #tpu.memory_space<vmem>>, %arg5: memref<8x648xf32, #tpu.memory_space<vmem>>, %arg6: memref<72x610xf32, #tpu.memory_space<vmem>>) attributes {dimension_semantics = [#tpu.dimension_semantics<arbitrary>], iteration_bounds = array<i64: 1>, scalar_prefetch = 0 : i64, scratch_operands = 1 : i64, tpu.core_type = #tpu.core_type<tc>, window_params = [{pipeline_mode = #tpu.pipeline_mode<synchronous>, transform_indices = @transform_0, window_bounds = array<i64: 3, 648>}, {pipeline_mode = #tpu.pipeline_mode<synchronous>, transform_indices = @transform_1, window_bounds = array<i64: 8, 72>}, {pipeline_mode = #tpu.pipeline_mode<synchronous>, transform_indices = @transform_2, window_bounds = array<i64: 1, 610>}, {pipeline_mode = #tpu.pipeline_mode<synchronous>, transform_indices = @transform_3, window_bounds = array<i64: 8, 1>}, {pipeline_mode = #tpu.pipeline_mode<synchronous>, transform_indices = @transform_4, window_bounds = array<i64: 8, 648>}]} {
    %cst = arith.constant 0.000000e+00 : f32
    %0 = vector.broadcast %cst : f32 to vector<72x610xf32>
    %c0 = arith.constant 0 : index
    %c0_0 = arith.constant 0 : index
    %1 = vector.load %arg6[%c0, %c0_0] : memref<72x610xf32, #tpu.memory_space<vmem>>, vector<72x610xf32>
    tpu.vector_store %arg6[%c0, %c0_0], %0 {strides = array<i32>} : memref<72x610xf32, #tpu.memory_space<vmem>>, vector<72x610xf32>,
    %c0_1 = arith.constant 0 : index
    %c0_2 = arith.constant 0 : index
    %2 = vector.load %arg1[%c0_1, %c0_2] : memref<3x648xf32, #tpu.memory_space<vmem>>, vector<3x610xf32>
    %c0_3 = arith.constant 0 : index
    %c0_4 = arith.constant 0 : index
    %3 = vector.load %arg6[%c0_3, %c0_4] : memref<72x610xf32, #tpu.memory_space<vmem>>, vector<3x610xf32>
    tpu.vector_store %arg6[%c0_3, %c0_4], %2 {strides = array<i32>} : memref<72x610xf32, #tpu.memory_space<vmem>>, vector<3x610xf32>,
    %c0_5 = arith.constant 0 : index
    %c1 = arith.constant 1 : index
    %4 = vector.load %arg1[%c0_5, %c1] : memref<3x648xf32, #tpu.memory_space<vmem>>, vector<3x610xf32>
    %c8 = arith.constant 8 : index
    %c0_6 = arith.constant 0 : index
    %5 = vector.load %arg6[%c8, %c0_6] : memref<72x610xf32, #tpu.memory_space<vmem>>, vector<3x610xf32>
    tpu.vector_store %arg6[%c8, %c0_6], %4 {strides = array<i32>} : memref<72x610xf32, #tpu.memory_space<vmem>>, vector<3x610xf32>,
    %c0_7 = arith.constant 0 : index
    %c2 = arith.constant 2 : index
    %6 = vector.load %arg1[%c0_7, %c2] : memref<3x648xf32, #tpu.memory_space<vmem>>, vector<3x610xf32>
    %c16 = arith.constant 16 : index
    %c0_8 = arith.constant 0 : index
    %7 = vector.load %arg6[%c16, %c0_8] : memref<72x610xf32, #tpu.memory_space<vmem>>, vector<3x610xf32>
    tpu.vector_store %arg6[%c16, %c0_8], %6 {strides = array<i32>} : memref<72x610xf32, #tpu.memory_space<vmem>>, vector<3x610xf32>,
    %c0_9 = arith.constant 0 : index
    %c18 = arith.constant 18 : index
    %8 = vector.load %arg1[%c0_9, %c18] : memref<3x648xf32, #tpu.memory_space<vmem>>, vector<3x610xf32>
    %c24 = arith.constant 24 : index
    %c0_10 = arith.constant 0 : index
    %9 = vector.load %arg6[%c24, %c0_10] : memref<72x610xf32, #tpu.memory_space<vmem>>, vector<3x610xf32>
    tpu.vector_store %arg6[%c24, %c0_10], %8 {strides = array<i32>} : memref<72x610xf32, #tpu.memory_space<vmem>>, vector<3x610xf32>,
    %c0_11 = arith.constant 0 : index
    %c19 = arith.constant 19 : index
    %10 = vector.load %arg1[%c0_11, %c19] : memref<3x648xf32, #tpu.memory_space<vmem>>, vector<3x610xf32>
    %c32 = arith.constant 32 : index
    %c0_12 = arith.constant 0 : index
    %11 = vector.load %arg6[%c32, %c0_12] : memref<72x610xf32, #tpu.memory_space<vmem>>, vector<3x610xf32>
    tpu.vector_store %arg6[%c32, %c0_12], %10 {strides = array<i32>} : memref<72x610xf32, #tpu.memory_space<vmem>>, vector<3x610xf32>,
    %c0_13 = arith.constant 0 : index
    %c20 = arith.constant 20 : index
    %12 = vector.load %arg1[%c0_13, %c20] : memref<3x648xf32, #tpu.memory_space<vmem>>, vector<3x610xf32>
    %c40 = arith.constant 40 : index
    %c0_14 = arith.constant 0 : index
    %13 = vector.load %arg6[%c40, %c0_14] : memref<72x610xf32, #tpu.memory_space<vmem>>, vector<3x610xf32>
    tpu.vector_store %arg6[%c40, %c0_14], %12 {strides = array<i32>} : memref<72x610xf32, #tpu.memory_space<vmem>>, vector<3x610xf32>,
    %c0_15 = arith.constant 0 : index
    %c36 = arith.constant 36 : index
    %14 = vector.load %arg1[%c0_15, %c36] : memref<3x648xf32, #tpu.memory_space<vmem>>, vector<3x610xf32>
    %c48 = arith.constant 48 : index
    %c0_16 = arith.constant 0 : index
    %15 = vector.load %arg6[%c48, %c0_16] : memref<72x610xf32, #tpu.memory_space<vmem>>, vector<3x610xf32>
    tpu.vector_store %arg6[%c48, %c0_16], %14 {strides = array<i32>} : memref<72x610xf32, #tpu.memory_space<vmem>>, vector<3x610xf32>,
    %c0_17 = arith.constant 0 : index
    %c37 = arith.constant 37 : index
    %16 = vector.load %arg1[%c0_17, %c37] : memref<3x648xf32, #tpu.memory_space<vmem>>, vector<3x610xf32>
    %c56 = arith.constant 56 : index
    %c0_18 = arith.constant 0 : index
    %17 = vector.load %arg6[%c56, %c0_18] : memref<72x610xf32, #tpu.memory_space<vmem>>, vector<3x610xf32>
    tpu.vector_store %arg6[%c56, %c0_18], %16 {strides = array<i32>} : memref<72x610xf32, #tpu.memory_space<vmem>>, vector<3x610xf32>,
    %c0_19 = arith.constant 0 : index
    %c38 = arith.constant 38 : index
    %18 = vector.load %arg1[%c0_19, %c38] : memref<3x648xf32, #tpu.memory_space<vmem>>, vector<3x610xf32>
    %c64 = arith.constant 64 : index
    %c0_20 = arith.constant 0 : index
    %19 = vector.load %arg6[%c64, %c0_20] : memref<72x610xf32, #tpu.memory_space<vmem>>, vector<3x610xf32>
    tpu.vector_store %arg6[%c64, %c0_20], %18 {strides = array<i32>} : memref<72x610xf32, #tpu.memory_space<vmem>>, vector<3x610xf32>,
    %c0_21 = arith.constant 0 : index
    %c0_22 = arith.constant 0 : index
    %20 = vector.load %arg2[%c0_21, %c0_22] : memref<8x72xf32, #tpu.memory_space<vmem>>, vector<8x72xf32>
    %c0_23 = arith.constant 0 : index
    %c0_24 = arith.constant 0 : index
    %21 = vector.load %arg6[%c0_23, %c0_24] : memref<72x610xf32, #tpu.memory_space<vmem>>, vector<72x610xf32>
    %cst_25 = arith.constant dense<0.000000e+00> : vector<8x610xf32>
    %22 = tpu.matmul %20, %21, %cst_25 {dimension_numbers = #tpu.dot_dimension_numbers<[1], [0], [0], [1], [0, 0, 1, 1], [], []>} : vector<8x72xf32>, vector<72x610xf32>, vector<8x610xf32> -> vector<8x610xf32>
    %c0_26 = arith.constant 0 : index
    %c0_27 = arith.constant 0 : index
    %23 = vector.load %arg4[%c0_26, %c0_27] : memref<8x1xf32, #tpu.memory_space<vmem>>, vector<8x1xf32>
    %24 = vector.broadcast %23 : vector<8x1xf32> to vector<8x610xf32>
    %25 = arith.addf %22, %24 : vector<8x610xf32>
    %c0_28 = arith.constant 0 : index
    %c0_29 = arith.constant 0 : index
    %26 = vector.load %arg3[%c0_28, %c0_29] : memref<1x610xf32, #tpu.memory_space<vmem>>, vector<1x610xf32>
    %27 = vector.broadcast %26 : vector<1x610xf32> to vector<8x610xf32>
    %28 = arith.mulf %25, %27 : vector<8x610xf32>
    %cst_30 = arith.constant 0.000000e+00 : f32
    %29 = vector.broadcast %cst_30 : f32 to vector<8x19xf32>
    %c0_31 = arith.constant 0 : index
    %c0_32 = arith.constant 0 : index
    %30 = vector.load %arg5[%c0_31, %c0_32] : memref<8x648xf32, #tpu.memory_space<vmem>>, vector<8x19xf32>
    tpu.vector_store %arg5[%c0_31, %c0_32], %29 {strides = array<i32>} : memref<8x648xf32, #tpu.memory_space<vmem>>, vector<8x19xf32>,
    %c0_33 = arith.constant 0 : index
    %c19_34 = arith.constant 19 : index
    %31 = vector.load %arg5[%c0_33, %c19_34] : memref<8x648xf32, #tpu.memory_space<vmem>>, vector<8x610xf32>
    tpu.vector_store %arg5[%c0_33, %c19_34], %28 {strides = array<i32>} : memref<8x648xf32, #tpu.memory_space<vmem>>, vector<8x610xf32>,
    %c0_35 = arith.constant 0 : index
    %c629 = arith.constant 629 : index
    %32 = vector.load %arg5[%c0_35, %c629] : memref<8x648xf32, #tpu.memory_space<vmem>>, vector<8x19xf32>
    tpu.vector_store %arg5[%c0_35, %c629], %29 {strides = array<i32>} : memref<8x648xf32, #tpu.memory_space<vmem>>, vector<8x19xf32>,
    return
  }
  func.func @transform_0(%arg0: i32) -> (i32, i32) {
    %c0_i32 = arith.constant 0 : i32
    %c0_i32_0 = arith.constant 0 : i32
    %c0_i32_1 = arith.constant 0 : i32
    return %c0_i32, %c0_i32_0 : i32, i32
  }
  func.func @transform_1(%arg0: i32) -> (i32, i32) {
    %c0_i32 = arith.constant 0 : i32
    %c0_i32_0 = arith.constant 0 : i32
    %c0_i32_1 = arith.constant 0 : i32
    return %c0_i32, %c0_i32_0 : i32, i32
  }
  func.func @transform_2(%arg0: i32) -> (i32, i32) {
    %c0_i32 = arith.constant 0 : i32
    %c0_i32_0 = arith.constant 0 : i32
    %c0_i32_1 = arith.constant 0 : i32
    return %c0_i32, %c0_i32_0 : i32, i32
  }
  func.func @transform_3(%arg0: i32) -> (i32, i32) {
    %c0_i32 = arith.constant 0 : i32
    %c0_i32_0 = arith.constant 0 : i32
    %c0_i32_1 = arith.constant 0 : i32
    return %c0_i32, %c0_i32_0 : i32, i32
  }
  func.func @transform_4(%arg0: i32) -> (i32, i32) {
    %c0_i32 = arith.constant 0 : i32
    %c0_i32_0 = arith.constant 0 : i32
    %c0_i32_1 = arith.constant 0 : i32
    return %c0_i32, %c0_i32_0 : i32, i32
  }
}

module attributes {stable_mosaic.version = 11 : i64} {
  func.func @_resblock_kernel(%arg0: i32, %arg1: memref<8x648xf32, #tpu.memory_space<vmem>>, %arg2: memref<8x72xf32, #tpu.memory_space<vmem>>, %arg3: memref<8x72xf32, #tpu.memory_space<vmem>>, %arg4: memref<1x610xf32, #tpu.memory_space<vmem>>, %arg5: memref<8x648xf32, #tpu.memory_space<vmem>>, %arg6: memref<72x610xf32, #tpu.memory_space<vmem>>, %arg7: memref<8x648xf32, #tpu.memory_space<vmem>>) attributes {dimension_semantics = [#tpu.dimension_semantics<arbitrary>], iteration_bounds = array<i64: 1>, scalar_prefetch = 0 : i64, scratch_operands = 2 : i64, tpu.core_type = #tpu.core_type<tc>, window_params = [{pipeline_mode = #tpu.pipeline_mode<synchronous>, transform_indices = @transform_0, window_bounds = array<i64: 8, 648>}, {pipeline_mode = #tpu.pipeline_mode<synchronous>, transform_indices = @transform_1, window_bounds = array<i64: 8, 72>}, {pipeline_mode = #tpu.pipeline_mode<synchronous>, transform_indices = @transform_2, window_bounds = array<i64: 8, 72>}, {pipeline_mode = #tpu.pipeline_mode<synchronous>, transform_indices = @transform_3, window_bounds = array<i64: 1, 610>}, {pipeline_mode = #tpu.pipeline_mode<synchronous>, transform_indices = @transform_4, window_bounds = array<i64: 8, 648>}]} {
    %c0 = arith.constant 0 : index
    %c0_0 = arith.constant 0 : index
    %0 = vector.load %arg1[%c0, %c0_0] : memref<8x648xf32, #tpu.memory_space<vmem>>, vector<8x610xf32>
    %c0_1 = arith.constant 0 : index
    %c0_2 = arith.constant 0 : index
    %1 = vector.load %arg6[%c0_1, %c0_2] : memref<72x610xf32, #tpu.memory_space<vmem>>, vector<8x610xf32>
    tpu.vector_store %arg6[%c0_1, %c0_2], %0 {strides = array<i32>} : memref<72x610xf32, #tpu.memory_space<vmem>>, vector<8x610xf32>,
    %c0_3 = arith.constant 0 : index
    %c1 = arith.constant 1 : index
    %2 = vector.load %arg1[%c0_3, %c1] : memref<8x648xf32, #tpu.memory_space<vmem>>, vector<8x610xf32>
    %c8 = arith.constant 8 : index
    %c0_4 = arith.constant 0 : index
    %3 = vector.load %arg6[%c8, %c0_4] : memref<72x610xf32, #tpu.memory_space<vmem>>, vector<8x610xf32>
    tpu.vector_store %arg6[%c8, %c0_4], %2 {strides = array<i32>} : memref<72x610xf32, #tpu.memory_space<vmem>>, vector<8x610xf32>,
    %c0_5 = arith.constant 0 : index
    %c2 = arith.constant 2 : index
    %4 = vector.load %arg1[%c0_5, %c2] : memref<8x648xf32, #tpu.memory_space<vmem>>, vector<8x610xf32>
    %c16 = arith.constant 16 : index
    %c0_6 = arith.constant 0 : index
    %5 = vector.load %arg6[%c16, %c0_6] : memref<72x610xf32, #tpu.memory_space<vmem>>, vector<8x610xf32>
    tpu.vector_store %arg6[%c16, %c0_6], %4 {strides = array<i32>} : memref<72x610xf32, #tpu.memory_space<vmem>>, vector<8x610xf32>,
    %c0_7 = arith.constant 0 : index
    %c18 = arith.constant 18 : index
    %6 = vector.load %arg1[%c0_7, %c18] : memref<8x648xf32, #tpu.memory_space<vmem>>, vector<8x610xf32>
    %c24 = arith.constant 24 : index
    %c0_8 = arith.constant 0 : index
    %7 = vector.load %arg6[%c24, %c0_8] : memref<72x610xf32, #tpu.memory_space<vmem>>, vector<8x610xf32>
    tpu.vector_store %arg6[%c24, %c0_8], %6 {strides = array<i32>} : memref<72x610xf32, #tpu.memory_space<vmem>>, vector<8x610xf32>,
    %c0_9 = arith.constant 0 : index
    %c19 = arith.constant 19 : index
    %8 = vector.load %arg1[%c0_9, %c19] : memref<8x648xf32, #tpu.memory_space<vmem>>, vector<8x610xf32>
    %c32 = arith.constant 32 : index
    %c0_10 = arith.constant 0 : index
    %9 = vector.load %arg6[%c32, %c0_10] : memref<72x610xf32, #tpu.memory_space<vmem>>, vector<8x610xf32>
    tpu.vector_store %arg6[%c32, %c0_10], %8 {strides = array<i32>} : memref<72x610xf32, #tpu.memory_space<vmem>>, vector<8x610xf32>,
    %c0_11 = arith.constant 0 : index
    %c20 = arith.constant 20 : index
    %10 = vector.load %arg1[%c0_11, %c20] : memref<8x648xf32, #tpu.memory_space<vmem>>, vector<8x610xf32>
    %c40 = arith.constant 40 : index
    %c0_12 = arith.constant 0 : index
    %11 = vector.load %arg6[%c40, %c0_12] : memref<72x610xf32, #tpu.memory_space<vmem>>, vector<8x610xf32>
    tpu.vector_store %arg6[%c40, %c0_12], %10 {strides = array<i32>} : memref<72x610xf32, #tpu.memory_space<vmem>>, vector<8x610xf32>,
    %c0_13 = arith.constant 0 : index
    %c36 = arith.constant 36 : index
    %12 = vector.load %arg1[%c0_13, %c36] : memref<8x648xf32, #tpu.memory_space<vmem>>, vector<8x610xf32>
    %c48 = arith.constant 48 : index
    %c0_14 = arith.constant 0 : index
    %13 = vector.load %arg6[%c48, %c0_14] : memref<72x610xf32, #tpu.memory_space<vmem>>, vector<8x610xf32>
    tpu.vector_store %arg6[%c48, %c0_14], %12 {strides = array<i32>} : memref<72x610xf32, #tpu.memory_space<vmem>>, vector<8x610xf32>,
    %c0_15 = arith.constant 0 : index
    %c37 = arith.constant 37 : index
    %14 = vector.load %arg1[%c0_15, %c37] : memref<8x648xf32, #tpu.memory_space<vmem>>, vector<8x610xf32>
    %c56 = arith.constant 56 : index
    %c0_16 = arith.constant 0 : index
    %15 = vector.load %arg6[%c56, %c0_16] : memref<72x610xf32, #tpu.memory_space<vmem>>, vector<8x610xf32>
    tpu.vector_store %arg6[%c56, %c0_16], %14 {strides = array<i32>} : memref<72x610xf32, #tpu.memory_space<vmem>>, vector<8x610xf32>,
    %c0_17 = arith.constant 0 : index
    %c38 = arith.constant 38 : index
    %16 = vector.load %arg1[%c0_17, %c38] : memref<8x648xf32, #tpu.memory_space<vmem>>, vector<8x610xf32>
    %c64 = arith.constant 64 : index
    %c0_18 = arith.constant 0 : index
    %17 = vector.load %arg6[%c64, %c0_18] : memref<72x610xf32, #tpu.memory_space<vmem>>, vector<8x610xf32>
    tpu.vector_store %arg6[%c64, %c0_18], %16 {strides = array<i32>} : memref<72x610xf32, #tpu.memory_space<vmem>>, vector<8x610xf32>,
    %c0_19 = arith.constant 0 : index
    %c0_20 = arith.constant 0 : index
    %18 = vector.load %arg2[%c0_19, %c0_20] : memref<8x72xf32, #tpu.memory_space<vmem>>, vector<8x72xf32>
    %c0_21 = arith.constant 0 : index
    %c0_22 = arith.constant 0 : index
    %19 = vector.load %arg6[%c0_21, %c0_22] : memref<72x610xf32, #tpu.memory_space<vmem>>, vector<72x610xf32>
    %cst = arith.constant dense<0.000000e+00> : vector<8x610xf32>
    %20 = tpu.matmul %18, %19, %cst {dimension_numbers = #tpu.dot_dimension_numbers<[1], [0], [0], [1], [0, 0, 1, 1], [], []>} : vector<8x72xf32>, vector<72x610xf32>, vector<8x610xf32> -> vector<8x610xf32>
    %cst_23 = arith.constant 0.000000e+00 : f32
    %21 = vector.broadcast %cst_23 : f32 to vector<8x610xf32>
    %22 = arith.maximumf %20, %21 : vector<8x610xf32>
    %c0_24 = arith.constant 0 : index
    %c0_25 = arith.constant 0 : index
    %23 = vector.load %arg4[%c0_24, %c0_25] : memref<1x610xf32, #tpu.memory_space<vmem>>, vector<1x610xf32>
    %24 = vector.broadcast %23 : vector<1x610xf32> to vector<8x610xf32>
    %25 = arith.mulf %22, %24 : vector<8x610xf32>
    %cst_26 = arith.constant 0.000000e+00 : f32
    %26 = vector.broadcast %cst_26 : f32 to vector<8x19xf32>
    %c0_27 = arith.constant 0 : index
    %c0_28 = arith.constant 0 : index
    %27 = vector.load %arg7[%c0_27, %c0_28] : memref<8x648xf32, #tpu.memory_space<vmem>>, vector<8x19xf32>
    tpu.vector_store %arg7[%c0_27, %c0_28], %26 {strides = array<i32>} : memref<8x648xf32, #tpu.memory_space<vmem>>, vector<8x19xf32>,
    %c0_29 = arith.constant 0 : index
    %c19_30 = arith.constant 19 : index
    %28 = vector.load %arg7[%c0_29, %c19_30] : memref<8x648xf32, #tpu.memory_space<vmem>>, vector<8x610xf32>
    tpu.vector_store %arg7[%c0_29, %c19_30], %25 {strides = array<i32>} : memref<8x648xf32, #tpu.memory_space<vmem>>, vector<8x610xf32>,
    %c0_31 = arith.constant 0 : index
    %c629 = arith.constant 629 : index
    %29 = vector.load %arg7[%c0_31, %c629] : memref<8x648xf32, #tpu.memory_space<vmem>>, vector<8x19xf32>
    tpu.vector_store %arg7[%c0_31, %c629], %26 {strides = array<i32>} : memref<8x648xf32, #tpu.memory_space<vmem>>, vector<8x19xf32>,
    %c0_32 = arith.constant 0 : index
    %c0_33 = arith.constant 0 : index
    %30 = vector.load %arg7[%c0_32, %c0_33] : memref<8x648xf32, #tpu.memory_space<vmem>>, vector<8x610xf32>
    %c0_34 = arith.constant 0 : index
    %c0_35 = arith.constant 0 : index
    %31 = vector.load %arg6[%c0_34, %c0_35] : memref<72x610xf32, #tpu.memory_space<vmem>>, vector<8x610xf32>
    tpu.vector_store %arg6[%c0_34, %c0_35], %30 {strides = array<i32>} : memref<72x610xf32, #tpu.memory_space<vmem>>, vector<8x610xf32>,
    %c0_36 = arith.constant 0 : index
    %c1_37 = arith.constant 1 : index
    %32 = vector.load %arg7[%c0_36, %c1_37] : memref<8x648xf32, #tpu.memory_space<vmem>>, vector<8x610xf32>
    %c8_38 = arith.constant 8 : index
    %c0_39 = arith.constant 0 : index
    %33 = vector.load %arg6[%c8_38, %c0_39] : memref<72x610xf32, #tpu.memory_space<vmem>>, vector<8x610xf32>
    tpu.vector_store %arg6[%c8_38, %c0_39], %32 {strides = array<i32>} : memref<72x610xf32, #tpu.memory_space<vmem>>, vector<8x610xf32>,
    %c0_40 = arith.constant 0 : index
    %c2_41 = arith.constant 2 : index
    %34 = vector.load %arg7[%c0_40, %c2_41] : memref<8x648xf32, #tpu.memory_space<vmem>>, vector<8x610xf32>
    %c16_42 = arith.constant 16 : index
    %c0_43 = arith.constant 0 : index
    %35 = vector.load %arg6[%c16_42, %c0_43] : memref<72x610xf32, #tpu.memory_space<vmem>>, vector<8x610xf32>
    tpu.vector_store %arg6[%c16_42, %c0_43], %34 {strides = array<i32>} : memref<72x610xf32, #tpu.memory_space<vmem>>, vector<8x610xf32>,
    %c0_44 = arith.constant 0 : index
    %c18_45 = arith.constant 18 : index
    %36 = vector.load %arg7[%c0_44, %c18_45] : memref<8x648xf32, #tpu.memory_space<vmem>>, vector<8x610xf32>
    %c24_46 = arith.constant 24 : index
    %c0_47 = arith.constant 0 : index
    %37 = vector.load %arg6[%c24_46, %c0_47] : memref<72x610xf32, #tpu.memory_space<vmem>>, vector<8x610xf32>
    tpu.vector_store %arg6[%c24_46, %c0_47], %36 {strides = array<i32>} : memref<72x610xf32, #tpu.memory_space<vmem>>, vector<8x610xf32>,
    %c0_48 = arith.constant 0 : index
    %c19_49 = arith.constant 19 : index
    %38 = vector.load %arg7[%c0_48, %c19_49] : memref<8x648xf32, #tpu.memory_space<vmem>>, vector<8x610xf32>
    %c32_50 = arith.constant 32 : index
    %c0_51 = arith.constant 0 : index
    %39 = vector.load %arg6[%c32_50, %c0_51] : memref<72x610xf32, #tpu.memory_space<vmem>>, vector<8x610xf32>
    tpu.vector_store %arg6[%c32_50, %c0_51], %38 {strides = array<i32>} : memref<72x610xf32, #tpu.memory_space<vmem>>, vector<8x610xf32>,
    %c0_52 = arith.constant 0 : index
    %c20_53 = arith.constant 20 : index
    %40 = vector.load %arg7[%c0_52, %c20_53] : memref<8x648xf32, #tpu.memory_space<vmem>>, vector<8x610xf32>
    %c40_54 = arith.constant 40 : index
    %c0_55 = arith.constant 0 : index
    %41 = vector.load %arg6[%c40_54, %c0_55] : memref<72x610xf32, #tpu.memory_space<vmem>>, vector<8x610xf32>
    tpu.vector_store %arg6[%c40_54, %c0_55], %40 {strides = array<i32>} : memref<72x610xf32, #tpu.memory_space<vmem>>, vector<8x610xf32>,
    %c0_56 = arith.constant 0 : index
    %c36_57 = arith.constant 36 : index
    %42 = vector.load %arg7[%c0_56, %c36_57] : memref<8x648xf32, #tpu.memory_space<vmem>>, vector<8x610xf32>
    %c48_58 = arith.constant 48 : index
    %c0_59 = arith.constant 0 : index
    %43 = vector.load %arg6[%c48_58, %c0_59] : memref<72x610xf32, #tpu.memory_space<vmem>>, vector<8x610xf32>
    tpu.vector_store %arg6[%c48_58, %c0_59], %42 {strides = array<i32>} : memref<72x610xf32, #tpu.memory_space<vmem>>, vector<8x610xf32>,
    %c0_60 = arith.constant 0 : index
    %c37_61 = arith.constant 37 : index
    %44 = vector.load %arg7[%c0_60, %c37_61] : memref<8x648xf32, #tpu.memory_space<vmem>>, vector<8x610xf32>
    %c56_62 = arith.constant 56 : index
    %c0_63 = arith.constant 0 : index
    %45 = vector.load %arg6[%c56_62, %c0_63] : memref<72x610xf32, #tpu.memory_space<vmem>>, vector<8x610xf32>
    tpu.vector_store %arg6[%c56_62, %c0_63], %44 {strides = array<i32>} : memref<72x610xf32, #tpu.memory_space<vmem>>, vector<8x610xf32>,
    %c0_64 = arith.constant 0 : index
    %c38_65 = arith.constant 38 : index
    %46 = vector.load %arg7[%c0_64, %c38_65] : memref<8x648xf32, #tpu.memory_space<vmem>>, vector<8x610xf32>
    %c64_66 = arith.constant 64 : index
    %c0_67 = arith.constant 0 : index
    %47 = vector.load %arg6[%c64_66, %c0_67] : memref<72x610xf32, #tpu.memory_space<vmem>>, vector<8x610xf32>
    tpu.vector_store %arg6[%c64_66, %c0_67], %46 {strides = array<i32>} : memref<72x610xf32, #tpu.memory_space<vmem>>, vector<8x610xf32>,
    %c0_68 = arith.constant 0 : index
    %c0_69 = arith.constant 0 : index
    %48 = vector.load %arg3[%c0_68, %c0_69] : memref<8x72xf32, #tpu.memory_space<vmem>>, vector<8x72xf32>
    %c0_70 = arith.constant 0 : index
    %c0_71 = arith.constant 0 : index
    %49 = vector.load %arg6[%c0_70, %c0_71] : memref<72x610xf32, #tpu.memory_space<vmem>>, vector<72x610xf32>
    %cst_72 = arith.constant dense<0.000000e+00> : vector<8x610xf32>
    %50 = tpu.matmul %48, %49, %cst_72 {dimension_numbers = #tpu.dot_dimension_numbers<[1], [0], [0], [1], [0, 0, 1, 1], [], []>} : vector<8x72xf32>, vector<72x610xf32>, vector<8x610xf32> -> vector<8x610xf32>
    %cst_73 = arith.constant 1.000000e-01 : f32
    %51 = vector.broadcast %cst_73 : f32 to vector<8x610xf32>
    %52 = arith.mulf %50, %51 : vector<8x610xf32>
    %c0_74 = arith.constant 0 : index
    %c19_75 = arith.constant 19 : index
    %53 = vector.load %arg1[%c0_74, %c19_75] : memref<8x648xf32, #tpu.memory_space<vmem>>, vector<8x610xf32>
    %54 = arith.addf %52, %53 : vector<8x610xf32>
    %c0_76 = arith.constant 0 : index
    %c0_77 = arith.constant 0 : index
    %55 = vector.load %arg4[%c0_76, %c0_77] : memref<1x610xf32, #tpu.memory_space<vmem>>, vector<1x610xf32>
    %56 = vector.broadcast %55 : vector<1x610xf32> to vector<8x610xf32>
    %57 = arith.mulf %54, %56 : vector<8x610xf32>
    %cst_78 = arith.constant 0.000000e+00 : f32
    %58 = vector.broadcast %cst_78 : f32 to vector<8x19xf32>
    %c0_79 = arith.constant 0 : index
    %c0_80 = arith.constant 0 : index
    %59 = vector.load %arg5[%c0_79, %c0_80] : memref<8x648xf32, #tpu.memory_space<vmem>>, vector<8x19xf32>
    tpu.vector_store %arg5[%c0_79, %c0_80], %58 {strides = array<i32>} : memref<8x648xf32, #tpu.memory_space<vmem>>, vector<8x19xf32>,
    %c0_81 = arith.constant 0 : index
    %c19_82 = arith.constant 19 : index
    %60 = vector.load %arg5[%c0_81, %c19_82] : memref<8x648xf32, #tpu.memory_space<vmem>>, vector<8x610xf32>
    tpu.vector_store %arg5[%c0_81, %c19_82], %57 {strides = array<i32>} : memref<8x648xf32, #tpu.memory_space<vmem>>, vector<8x610xf32>,
    %c0_83 = arith.constant 0 : index
    %c629_84 = arith.constant 629 : index
    %61 = vector.load %arg5[%c0_83, %c629_84] : memref<8x648xf32, #tpu.memory_space<vmem>>, vector<8x19xf32>
    tpu.vector_store %arg5[%c0_83, %c629_84], %58 {strides = array<i32>} : memref<8x648xf32, #tpu.memory_space<vmem>>, vector<8x19xf32>,
    return
  }
  func.func @transform_0(%arg0: i32) -> (i32, i32) {
    %c0_i32 = arith.constant 0 : i32
    %c0_i32_0 = arith.constant 0 : i32
    %c0_i32_1 = arith.constant 0 : i32
    return %c0_i32, %c0_i32_0 : i32, i32
  }
  func.func @transform_1(%arg0: i32) -> (i32, i32) {
    %c0_i32 = arith.constant 0 : i32
    %c0_i32_0 = arith.constant 0 : i32
    %c0_i32_1 = arith.constant 0 : i32
    return %c0_i32, %c0_i32_0 : i32, i32
  }
  func.func @transform_2(%arg0: i32) -> (i32, i32) {
    %c0_i32 = arith.constant 0 : i32
    %c0_i32_0 = arith.constant 0 : i32
    %c0_i32_1 = arith.constant 0 : i32
    return %c0_i32, %c0_i32_0 : i32, i32
  }
  func.func @transform_3(%arg0: i32) -> (i32, i32) {
    %c0_i32 = arith.constant 0 : i32
    %c0_i32_0 = arith.constant 0 : i32
    %c0_i32_1 = arith.constant 0 : i32
    return %c0_i32, %c0_i32_0 : i32, i32
  }
  func.func @transform_4(%arg0: i32) -> (i32, i32) {
    %c0_i32 = arith.constant 0 : i32
    %c0_i32_0 = arith.constant 0 : i32
    %c0_i32_1 = arith.constant 0 : i32
    return %c0_i32, %c0_i32_0 : i32, i32
  }
}

module attributes {stable_mosaic.version = 11 : i64} {
  func.func @_conv_residual_kernel(%arg0: i32, %arg1: memref<8x648xf32, #tpu.memory_space<vmem>>, %arg2: memref<8x72xf32, #tpu.memory_space<vmem>>, %arg3: memref<8x648xf32, #tpu.memory_space<vmem>>, %arg4: memref<1x610xf32, #tpu.memory_space<vmem>>, %arg5: memref<8x648xf32, #tpu.memory_space<vmem>>, %arg6: memref<72x610xf32, #tpu.memory_space<vmem>>) attributes {dimension_semantics = [#tpu.dimension_semantics<arbitrary>], iteration_bounds = array<i64: 1>, scalar_prefetch = 0 : i64, scratch_operands = 1 : i64, tpu.core_type = #tpu.core_type<tc>, window_params = [{pipeline_mode = #tpu.pipeline_mode<synchronous>, transform_indices = @transform_0, window_bounds = array<i64: 8, 648>}, {pipeline_mode = #tpu.pipeline_mode<synchronous>, transform_indices = @transform_1, window_bounds = array<i64: 8, 72>}, {pipeline_mode = #tpu.pipeline_mode<synchronous>, transform_indices = @transform_2, window_bounds = array<i64: 8, 648>}, {pipeline_mode = #tpu.pipeline_mode<synchronous>, transform_indices = @transform_3, window_bounds = array<i64: 1, 610>}, {pipeline_mode = #tpu.pipeline_mode<synchronous>, transform_indices = @transform_4, window_bounds = array<i64: 8, 648>}]} {
    %c0 = arith.constant 0 : index
    %c0_0 = arith.constant 0 : index
    %0 = vector.load %arg1[%c0, %c0_0] : memref<8x648xf32, #tpu.memory_space<vmem>>, vector<8x610xf32>
    %c0_1 = arith.constant 0 : index
    %c0_2 = arith.constant 0 : index
    %1 = vector.load %arg6[%c0_1, %c0_2] : memref<72x610xf32, #tpu.memory_space<vmem>>, vector<8x610xf32>
    tpu.vector_store %arg6[%c0_1, %c0_2], %0 {strides = array<i32>} : memref<72x610xf32, #tpu.memory_space<vmem>>, vector<8x610xf32>,
    %c0_3 = arith.constant 0 : index
    %c1 = arith.constant 1 : index
    %2 = vector.load %arg1[%c0_3, %c1] : memref<8x648xf32, #tpu.memory_space<vmem>>, vector<8x610xf32>
    %c8 = arith.constant 8 : index
    %c0_4 = arith.constant 0 : index
    %3 = vector.load %arg6[%c8, %c0_4] : memref<72x610xf32, #tpu.memory_space<vmem>>, vector<8x610xf32>
    tpu.vector_store %arg6[%c8, %c0_4], %2 {strides = array<i32>} : memref<72x610xf32, #tpu.memory_space<vmem>>, vector<8x610xf32>,
    %c0_5 = arith.constant 0 : index
    %c2 = arith.constant 2 : index
    %4 = vector.load %arg1[%c0_5, %c2] : memref<8x648xf32, #tpu.memory_space<vmem>>, vector<8x610xf32>
    %c16 = arith.constant 16 : index
    %c0_6 = arith.constant 0 : index
    %5 = vector.load %arg6[%c16, %c0_6] : memref<72x610xf32, #tpu.memory_space<vmem>>, vector<8x610xf32>
    tpu.vector_store %arg6[%c16, %c0_6], %4 {strides = array<i32>} : memref<72x610xf32, #tpu.memory_space<vmem>>, vector<8x610xf32>,
    %c0_7 = arith.constant 0 : index
    %c18 = arith.constant 18 : index
    %6 = vector.load %arg1[%c0_7, %c18] : memref<8x648xf32, #tpu.memory_space<vmem>>, vector<8x610xf32>
    %c24 = arith.constant 24 : index
    %c0_8 = arith.constant 0 : index
    %7 = vector.load %arg6[%c24, %c0_8] : memref<72x610xf32, #tpu.memory_space<vmem>>, vector<8x610xf32>
    tpu.vector_store %arg6[%c24, %c0_8], %6 {strides = array<i32>} : memref<72x610xf32, #tpu.memory_space<vmem>>, vector<8x610xf32>,
    %c0_9 = arith.constant 0 : index
    %c19 = arith.constant 19 : index
    %8 = vector.load %arg1[%c0_9, %c19] : memref<8x648xf32, #tpu.memory_space<vmem>>, vector<8x610xf32>
    %c32 = arith.constant 32 : index
    %c0_10 = arith.constant 0 : index
    %9 = vector.load %arg6[%c32, %c0_10] : memref<72x610xf32, #tpu.memory_space<vmem>>, vector<8x610xf32>
    tpu.vector_store %arg6[%c32, %c0_10], %8 {strides = array<i32>} : memref<72x610xf32, #tpu.memory_space<vmem>>, vector<8x610xf32>,
    %c0_11 = arith.constant 0 : index
    %c20 = arith.constant 20 : index
    %10 = vector.load %arg1[%c0_11, %c20] : memref<8x648xf32, #tpu.memory_space<vmem>>, vector<8x610xf32>
    %c40 = arith.constant 40 : index
    %c0_12 = arith.constant 0 : index
    %11 = vector.load %arg6[%c40, %c0_12] : memref<72x610xf32, #tpu.memory_space<vmem>>, vector<8x610xf32>
    tpu.vector_store %arg6[%c40, %c0_12], %10 {strides = array<i32>} : memref<72x610xf32, #tpu.memory_space<vmem>>, vector<8x610xf32>,
    %c0_13 = arith.constant 0 : index
    %c36 = arith.constant 36 : index
    %12 = vector.load %arg1[%c0_13, %c36] : memref<8x648xf32, #tpu.memory_space<vmem>>, vector<8x610xf32>
    %c48 = arith.constant 48 : index
    %c0_14 = arith.constant 0 : index
    %13 = vector.load %arg6[%c48, %c0_14] : memref<72x610xf32, #tpu.memory_space<vmem>>, vector<8x610xf32>
    tpu.vector_store %arg6[%c48, %c0_14], %12 {strides = array<i32>} : memref<72x610xf32, #tpu.memory_space<vmem>>, vector<8x610xf32>,
    %c0_15 = arith.constant 0 : index
    %c37 = arith.constant 37 : index
    %14 = vector.load %arg1[%c0_15, %c37] : memref<8x648xf32, #tpu.memory_space<vmem>>, vector<8x610xf32>
    %c56 = arith.constant 56 : index
    %c0_16 = arith.constant 0 : index
    %15 = vector.load %arg6[%c56, %c0_16] : memref<72x610xf32, #tpu.memory_space<vmem>>, vector<8x610xf32>
    tpu.vector_store %arg6[%c56, %c0_16], %14 {strides = array<i32>} : memref<72x610xf32, #tpu.memory_space<vmem>>, vector<8x610xf32>,
    %c0_17 = arith.constant 0 : index
    %c38 = arith.constant 38 : index
    %16 = vector.load %arg1[%c0_17, %c38] : memref<8x648xf32, #tpu.memory_space<vmem>>, vector<8x610xf32>
    %c64 = arith.constant 64 : index
    %c0_18 = arith.constant 0 : index
    %17 = vector.load %arg6[%c64, %c0_18] : memref<72x610xf32, #tpu.memory_space<vmem>>, vector<8x610xf32>
    tpu.vector_store %arg6[%c64, %c0_18], %16 {strides = array<i32>} : memref<72x610xf32, #tpu.memory_space<vmem>>, vector<8x610xf32>,
    %c0_19 = arith.constant 0 : index
    %c0_20 = arith.constant 0 : index
    %18 = vector.load %arg2[%c0_19, %c0_20] : memref<8x72xf32, #tpu.memory_space<vmem>>, vector<8x72xf32>
    %c0_21 = arith.constant 0 : index
    %c0_22 = arith.constant 0 : index
    %19 = vector.load %arg6[%c0_21, %c0_22] : memref<72x610xf32, #tpu.memory_space<vmem>>, vector<72x610xf32>
    %cst = arith.constant dense<0.000000e+00> : vector<8x610xf32>
    %20 = tpu.matmul %18, %19, %cst {dimension_numbers = #tpu.dot_dimension_numbers<[1], [0], [0], [1], [0, 0, 1, 1], [], []>} : vector<8x72xf32>, vector<72x610xf32>, vector<8x610xf32> -> vector<8x610xf32>
    %c0_23 = arith.constant 0 : index
    %c19_24 = arith.constant 19 : index
    %21 = vector.load %arg3[%c0_23, %c19_24] : memref<8x648xf32, #tpu.memory_space<vmem>>, vector<8x610xf32>
    %22 = arith.addf %20, %21 : vector<8x610xf32>
    %c0_25 = arith.constant 0 : index
    %c0_26 = arith.constant 0 : index
    %23 = vector.load %arg4[%c0_25, %c0_26] : memref<1x610xf32, #tpu.memory_space<vmem>>, vector<1x610xf32>
    %24 = vector.broadcast %23 : vector<1x610xf32> to vector<8x610xf32>
    %25 = arith.mulf %22, %24 : vector<8x610xf32>
    %cst_27 = arith.constant 0.000000e+00 : f32
    %26 = vector.broadcast %cst_27 : f32 to vector<8x19xf32>
    %c0_28 = arith.constant 0 : index
    %c0_29 = arith.constant 0 : index
    %27 = vector.load %arg5[%c0_28, %c0_29] : memref<8x648xf32, #tpu.memory_space<vmem>>, vector<8x19xf32>
    tpu.vector_store %arg5[%c0_28, %c0_29], %26 {strides = array<i32>} : memref<8x648xf32, #tpu.memory_space<vmem>>, vector<8x19xf32>,
    %c0_30 = arith.constant 0 : index
    %c19_31 = arith.constant 19 : index
    %28 = vector.load %arg5[%c0_30, %c19_31] : memref<8x648xf32, #tpu.memory_space<vmem>>, vector<8x610xf32>
    tpu.vector_store %arg5[%c0_30, %c19_31], %25 {strides = array<i32>} : memref<8x648xf32, #tpu.memory_space<vmem>>, vector<8x610xf32>,
    %c0_32 = arith.constant 0 : index
    %c629 = arith.constant 629 : index
    %29 = vector.load %arg5[%c0_32, %c629] : memref<8x648xf32, #tpu.memory_space<vmem>>, vector<8x19xf32>
    tpu.vector_store %arg5[%c0_32, %c629], %26 {strides = array<i32>} : memref<8x648xf32, #tpu.memory_space<vmem>>, vector<8x19xf32>,
    return
  }
  func.func @transform_0(%arg0: i32) -> (i32, i32) {
    %c0_i32 = arith.constant 0 : i32
    %c0_i32_0 = arith.constant 0 : i32
    %c0_i32_1 = arith.constant 0 : i32
    return %c0_i32, %c0_i32_0 : i32, i32
  }
  func.func @transform_1(%arg0: i32) -> (i32, i32) {
    %c0_i32 = arith.constant 0 : i32
    %c0_i32_0 = arith.constant 0 : i32
    %c0_i32_1 = arith.constant 0 : i32
    return %c0_i32, %c0_i32_0 : i32, i32
  }
  func.func @transform_2(%arg0: i32) -> (i32, i32) {
    %c0_i32 = arith.constant 0 : i32
    %c0_i32_0 = arith.constant 0 : i32
    %c0_i32_1 = arith.constant 0 : i32
    return %c0_i32, %c0_i32_0 : i32, i32
  }
  func.func @transform_3(%arg0: i32) -> (i32, i32) {
    %c0_i32 = arith.constant 0 : i32
    %c0_i32_0 = arith.constant 0 : i32
    %c0_i32_1 = arith.constant 0 : i32
    return %c0_i32, %c0_i32_0 : i32, i32
  }
  func.func @transform_4(%arg0: i32) -> (i32, i32) {
    %c0_i32 = arith.constant 0 : i32
    %c0_i32_0 = arith.constant 0 : i32
    %c0_i32_1 = arith.constant 0 : i32
    return %c0_i32, %c0_i32_0 : i32, i32
  }
}

module attributes {stable_mosaic.version = 11 : i64} {
  func.func @_conv_kernel(%arg0: i32, %arg1: memref<8x648xf32, #tpu.memory_space<vmem>>, %arg2: memref<32x72xf32, #tpu.memory_space<vmem>>, %arg3: memref<1x610xf32, #tpu.memory_space<vmem>>, %arg4: memref<32x1xf32, #tpu.memory_space<vmem>>, %arg5: memref<32x648xf32, #tpu.memory_space<vmem>>, %arg6: memref<72x610xf32, #tpu.memory_space<vmem>>) attributes {dimension_semantics = [#tpu.dimension_semantics<arbitrary>], iteration_bounds = array<i64: 1>, scalar_prefetch = 0 : i64, scratch_operands = 1 : i64, tpu.core_type = #tpu.core_type<tc>, window_params = [{pipeline_mode = #tpu.pipeline_mode<synchronous>, transform_indices = @transform_0, window_bounds = array<i64: 8, 648>}, {pipeline_mode = #tpu.pipeline_mode<synchronous>, transform_indices = @transform_1, window_bounds = array<i64: 32, 72>}, {pipeline_mode = #tpu.pipeline_mode<synchronous>, transform_indices = @transform_2, window_bounds = array<i64: 1, 610>}, {pipeline_mode = #tpu.pipeline_mode<synchronous>, transform_indices = @transform_3, window_bounds = array<i64: 32, 1>}, {pipeline_mode = #tpu.pipeline_mode<synchronous>, transform_indices = @transform_4, window_bounds = array<i64: 32, 648>}]} {
    %c0 = arith.constant 0 : index
    %c0_0 = arith.constant 0 : index
    %0 = vector.load %arg1[%c0, %c0_0] : memref<8x648xf32, #tpu.memory_space<vmem>>, vector<8x610xf32>
    %c0_1 = arith.constant 0 : index
    %c0_2 = arith.constant 0 : index
    %1 = vector.load %arg6[%c0_1, %c0_2] : memref<72x610xf32, #tpu.memory_space<vmem>>, vector<8x610xf32>
    tpu.vector_store %arg6[%c0_1, %c0_2], %0 {strides = array<i32>} : memref<72x610xf32, #tpu.memory_space<vmem>>, vector<8x610xf32>,
    %c0_3 = arith.constant 0 : index
    %c1 = arith.constant 1 : index
    %2 = vector.load %arg1[%c0_3, %c1] : memref<8x648xf32, #tpu.memory_space<vmem>>, vector<8x610xf32>
    %c8 = arith.constant 8 : index
    %c0_4 = arith.constant 0 : index
    %3 = vector.load %arg6[%c8, %c0_4] : memref<72x610xf32, #tpu.memory_space<vmem>>, vector<8x610xf32>
    tpu.vector_store %arg6[%c8, %c0_4], %2 {strides = array<i32>} : memref<72x610xf32, #tpu.memory_space<vmem>>, vector<8x610xf32>,
    %c0_5 = arith.constant 0 : index
    %c2 = arith.constant 2 : index
    %4 = vector.load %arg1[%c0_5, %c2] : memref<8x648xf32, #tpu.memory_space<vmem>>, vector<8x610xf32>
    %c16 = arith.constant 16 : index
    %c0_6 = arith.constant 0 : index
    %5 = vector.load %arg6[%c16, %c0_6] : memref<72x610xf32, #tpu.memory_space<vmem>>, vector<8x610xf32>
    tpu.vector_store %arg6[%c16, %c0_6], %4 {strides = array<i32>} : memref<72x610xf32, #tpu.memory_space<vmem>>, vector<8x610xf32>,
    %c0_7 = arith.constant 0 : index
    %c18 = arith.constant 18 : index
    %6 = vector.load %arg1[%c0_7, %c18] : memref<8x648xf32, #tpu.memory_space<vmem>>, vector<8x610xf32>
    %c24 = arith.constant 24 : index
    %c0_8 = arith.constant 0 : index
    %7 = vector.load %arg6[%c24, %c0_8] : memref<72x610xf32, #tpu.memory_space<vmem>>, vector<8x610xf32>
    tpu.vector_store %arg6[%c24, %c0_8], %6 {strides = array<i32>} : memref<72x610xf32, #tpu.memory_space<vmem>>, vector<8x610xf32>,
    %c0_9 = arith.constant 0 : index
    %c19 = arith.constant 19 : index
    %8 = vector.load %arg1[%c0_9, %c19] : memref<8x648xf32, #tpu.memory_space<vmem>>, vector<8x610xf32>
    %c32 = arith.constant 32 : index
    %c0_10 = arith.constant 0 : index
    %9 = vector.load %arg6[%c32, %c0_10] : memref<72x610xf32, #tpu.memory_space<vmem>>, vector<8x610xf32>
    tpu.vector_store %arg6[%c32, %c0_10], %8 {strides = array<i32>} : memref<72x610xf32, #tpu.memory_space<vmem>>, vector<8x610xf32>,
    %c0_11 = arith.constant 0 : index
    %c20 = arith.constant 20 : index
    %10 = vector.load %arg1[%c0_11, %c20] : memref<8x648xf32, #tpu.memory_space<vmem>>, vector<8x610xf32>
    %c40 = arith.constant 40 : index
    %c0_12 = arith.constant 0 : index
    %11 = vector.load %arg6[%c40, %c0_12] : memref<72x610xf32, #tpu.memory_space<vmem>>, vector<8x610xf32>
    tpu.vector_store %arg6[%c40, %c0_12], %10 {strides = array<i32>} : memref<72x610xf32, #tpu.memory_space<vmem>>, vector<8x610xf32>,
    %c0_13 = arith.constant 0 : index
    %c36 = arith.constant 36 : index
    %12 = vector.load %arg1[%c0_13, %c36] : memref<8x648xf32, #tpu.memory_space<vmem>>, vector<8x610xf32>
    %c48 = arith.constant 48 : index
    %c0_14 = arith.constant 0 : index
    %13 = vector.load %arg6[%c48, %c0_14] : memref<72x610xf32, #tpu.memory_space<vmem>>, vector<8x610xf32>
    tpu.vector_store %arg6[%c48, %c0_14], %12 {strides = array<i32>} : memref<72x610xf32, #tpu.memory_space<vmem>>, vector<8x610xf32>,
    %c0_15 = arith.constant 0 : index
    %c37 = arith.constant 37 : index
    %14 = vector.load %arg1[%c0_15, %c37] : memref<8x648xf32, #tpu.memory_space<vmem>>, vector<8x610xf32>
    %c56 = arith.constant 56 : index
    %c0_16 = arith.constant 0 : index
    %15 = vector.load %arg6[%c56, %c0_16] : memref<72x610xf32, #tpu.memory_space<vmem>>, vector<8x610xf32>
    tpu.vector_store %arg6[%c56, %c0_16], %14 {strides = array<i32>} : memref<72x610xf32, #tpu.memory_space<vmem>>, vector<8x610xf32>,
    %c0_17 = arith.constant 0 : index
    %c38 = arith.constant 38 : index
    %16 = vector.load %arg1[%c0_17, %c38] : memref<8x648xf32, #tpu.memory_space<vmem>>, vector<8x610xf32>
    %c64 = arith.constant 64 : index
    %c0_18 = arith.constant 0 : index
    %17 = vector.load %arg6[%c64, %c0_18] : memref<72x610xf32, #tpu.memory_space<vmem>>, vector<8x610xf32>
    tpu.vector_store %arg6[%c64, %c0_18], %16 {strides = array<i32>} : memref<72x610xf32, #tpu.memory_space<vmem>>, vector<8x610xf32>,
    %c0_19 = arith.constant 0 : index
    %c0_20 = arith.constant 0 : index
    %18 = vector.load %arg2[%c0_19, %c0_20] : memref<32x72xf32, #tpu.memory_space<vmem>>, vector<32x72xf32>
    %c0_21 = arith.constant 0 : index
    %c0_22 = arith.constant 0 : index
    %19 = vector.load %arg6[%c0_21, %c0_22] : memref<72x610xf32, #tpu.memory_space<vmem>>, vector<72x610xf32>
    %cst = arith.constant dense<0.000000e+00> : vector<32x610xf32>
    %20 = tpu.matmul %18, %19, %cst {dimension_numbers = #tpu.dot_dimension_numbers<[1], [0], [0], [1], [0, 0, 1, 1], [], []>} : vector<32x72xf32>, vector<72x610xf32>, vector<32x610xf32> -> vector<32x610xf32>
    %c0_23 = arith.constant 0 : index
    %c0_24 = arith.constant 0 : index
    %21 = vector.load %arg4[%c0_23, %c0_24] : memref<32x1xf32, #tpu.memory_space<vmem>>, vector<32x1xf32>
    %22 = vector.broadcast %21 : vector<32x1xf32> to vector<32x610xf32>
    %23 = arith.addf %20, %22 : vector<32x610xf32>
    %c0_25 = arith.constant 0 : index
    %c0_26 = arith.constant 0 : index
    %24 = vector.load %arg3[%c0_25, %c0_26] : memref<1x610xf32, #tpu.memory_space<vmem>>, vector<1x610xf32>
    %25 = vector.broadcast %24 : vector<1x610xf32> to vector<32x610xf32>
    %26 = arith.mulf %23, %25 : vector<32x610xf32>
    %cst_27 = arith.constant 0.000000e+00 : f32
    %27 = vector.broadcast %cst_27 : f32 to vector<32x19xf32>
    %c0_28 = arith.constant 0 : index
    %c0_29 = arith.constant 0 : index
    %28 = vector.load %arg5[%c0_28, %c0_29] : memref<32x648xf32, #tpu.memory_space<vmem>>, vector<32x19xf32>
    tpu.vector_store %arg5[%c0_28, %c0_29], %27 {strides = array<i32>} : memref<32x648xf32, #tpu.memory_space<vmem>>, vector<32x19xf32>,
    %c0_30 = arith.constant 0 : index
    %c19_31 = arith.constant 19 : index
    %29 = vector.load %arg5[%c0_30, %c19_31] : memref<32x648xf32, #tpu.memory_space<vmem>>, vector<32x610xf32>
    tpu.vector_store %arg5[%c0_30, %c19_31], %26 {strides = array<i32>} : memref<32x648xf32, #tpu.memory_space<vmem>>, vector<32x610xf32>,
    %c0_32 = arith.constant 0 : index
    %c629 = arith.constant 629 : index
    %30 = vector.load %arg5[%c0_32, %c629] : memref<32x648xf32, #tpu.memory_space<vmem>>, vector<32x19xf32>
    tpu.vector_store %arg5[%c0_32, %c629], %27 {strides = array<i32>} : memref<32x648xf32, #tpu.memory_space<vmem>>, vector<32x19xf32>,
    return
  }
  func.func @transform_0(%arg0: i32) -> (i32, i32) {
    %c0_i32 = arith.constant 0 : i32
    %c0_i32_0 = arith.constant 0 : i32
    %c0_i32_1 = arith.constant 0 : i32
    return %c0_i32, %c0_i32_0 : i32, i32
  }
  func.func @transform_1(%arg0: i32) -> (i32, i32) {
    %c0_i32 = arith.constant 0 : i32
    %c0_i32_0 = arith.constant 0 : i32
    %c0_i32_1 = arith.constant 0 : i32
    return %c0_i32, %c0_i32_0 : i32, i32
  }
  func.func @transform_2(%arg0: i32) -> (i32, i32) {
    %c0_i32 = arith.constant 0 : i32
    %c0_i32_0 = arith.constant 0 : i32
    %c0_i32_1 = arith.constant 0 : i32
    return %c0_i32, %c0_i32_0 : i32, i32
  }
  func.func @transform_3(%arg0: i32) -> (i32, i32) {
    %c0_i32 = arith.constant 0 : i32
    %c0_i32_0 = arith.constant 0 : i32
    %c0_i32_1 = arith.constant 0 : i32
    return %c0_i32, %c0_i32_0 : i32, i32
  }
  func.func @transform_4(%arg0: i32) -> (i32, i32) {
    %c0_i32 = arith.constant 0 : i32
    %c0_i32_0 = arith.constant 0 : i32
    %c0_i32_1 = arith.constant 0 : i32
    return %c0_i32, %c0_i32_0 : i32, i32
  }
}

module attributes {stable_mosaic.version = 11 : i64} {
  func.func @_conv_kernel(%arg0: i32, %arg1: memref<8x2312xf32, #tpu.memory_space<vmem>>, %arg2: memref<3x72xf32, #tpu.memory_space<vmem>>, %arg3: memref<1x2242xf32, #tpu.memory_space<vmem>>, %arg4: memref<3x1xf32, #tpu.memory_space<vmem>>, %arg5: memref<3x2312xf32, #tpu.memory_space<vmem>>, %arg6: memref<72x2242xf32, #tpu.memory_space<vmem>>) attributes {dimension_semantics = [#tpu.dimension_semantics<arbitrary>], iteration_bounds = array<i64: 1>, scalar_prefetch = 0 : i64, scratch_operands = 1 : i64, tpu.core_type = #tpu.core_type<tc>, window_params = [{pipeline_mode = #tpu.pipeline_mode<synchronous>, transform_indices = @transform_0, window_bounds = array<i64: 8, 2312>}, {pipeline_mode = #tpu.pipeline_mode<synchronous>, transform_indices = @transform_1, window_bounds = array<i64: 3, 72>}, {pipeline_mode = #tpu.pipeline_mode<synchronous>, transform_indices = @transform_2, window_bounds = array<i64: 1, 2242>}, {pipeline_mode = #tpu.pipeline_mode<synchronous>, transform_indices = @transform_3, window_bounds = array<i64: 3, 1>}, {pipeline_mode = #tpu.pipeline_mode<synchronous>, transform_indices = @transform_4, window_bounds = array<i64: 3, 2312>}]} {
    %c0 = arith.constant 0 : index
    %c0_0 = arith.constant 0 : index
    %0 = vector.load %arg1[%c0, %c0_0] : memref<8x2312xf32, #tpu.memory_space<vmem>>, vector<8x2242xf32>
    %c0_1 = arith.constant 0 : index
    %c0_2 = arith.constant 0 : index
    %1 = vector.load %arg6[%c0_1, %c0_2] : memref<72x2242xf32, #tpu.memory_space<vmem>>, vector<8x2242xf32>
    tpu.vector_store %arg6[%c0_1, %c0_2], %0 {strides = array<i32>} : memref<72x2242xf32, #tpu.memory_space<vmem>>, vector<8x2242xf32>,
    %c0_3 = arith.constant 0 : index
    %c1 = arith.constant 1 : index
    %2 = vector.load %arg1[%c0_3, %c1] : memref<8x2312xf32, #tpu.memory_space<vmem>>, vector<8x2242xf32>
    %c8 = arith.constant 8 : index
    %c0_4 = arith.constant 0 : index
    %3 = vector.load %arg6[%c8, %c0_4] : memref<72x2242xf32, #tpu.memory_space<vmem>>, vector<8x2242xf32>
    tpu.vector_store %arg6[%c8, %c0_4], %2 {strides = array<i32>} : memref<72x2242xf32, #tpu.memory_space<vmem>>, vector<8x2242xf32>,
    %c0_5 = arith.constant 0 : index
    %c2 = arith.constant 2 : index
    %4 = vector.load %arg1[%c0_5, %c2] : memref<8x2312xf32, #tpu.memory_space<vmem>>, vector<8x2242xf32>
    %c16 = arith.constant 16 : index
    %c0_6 = arith.constant 0 : index
    %5 = vector.load %arg6[%c16, %c0_6] : memref<72x2242xf32, #tpu.memory_space<vmem>>, vector<8x2242xf32>
    tpu.vector_store %arg6[%c16, %c0_6], %4 {strides = array<i32>} : memref<72x2242xf32, #tpu.memory_space<vmem>>, vector<8x2242xf32>,
    %c0_7 = arith.constant 0 : index
    %c34 = arith.constant 34 : index
    %6 = vector.load %arg1[%c0_7, %c34] : memref<8x2312xf32, #tpu.memory_space<vmem>>, vector<8x2242xf32>
    %c24 = arith.constant 24 : index
    %c0_8 = arith.constant 0 : index
    %7 = vector.load %arg6[%c24, %c0_8] : memref<72x2242xf32, #tpu.memory_space<vmem>>, vector<8x2242xf32>
    tpu.vector_store %arg6[%c24, %c0_8], %6 {strides = array<i32>} : memref<72x2242xf32, #tpu.memory_space<vmem>>, vector<8x2242xf32>,
    %c0_9 = arith.constant 0 : index
    %c35 = arith.constant 35 : index
    %8 = vector.load %arg1[%c0_9, %c35] : memref<8x2312xf32, #tpu.memory_space<vmem>>, vector<8x2242xf32>
    %c32 = arith.constant 32 : index
    %c0_10 = arith.constant 0 : index
    %9 = vector.load %arg6[%c32, %c0_10] : memref<72x2242xf32, #tpu.memory_space<vmem>>, vector<8x2242xf32>
    tpu.vector_store %arg6[%c32, %c0_10], %8 {strides = array<i32>} : memref<72x2242xf32, #tpu.memory_space<vmem>>, vector<8x2242xf32>,
    %c0_11 = arith.constant 0 : index
    %c36 = arith.constant 36 : index
    %10 = vector.load %arg1[%c0_11, %c36] : memref<8x2312xf32, #tpu.memory_space<vmem>>, vector<8x2242xf32>
    %c40 = arith.constant 40 : index
    %c0_12 = arith.constant 0 : index
    %11 = vector.load %arg6[%c40, %c0_12] : memref<72x2242xf32, #tpu.memory_space<vmem>>, vector<8x2242xf32>
    tpu.vector_store %arg6[%c40, %c0_12], %10 {strides = array<i32>} : memref<72x2242xf32, #tpu.memory_space<vmem>>, vector<8x2242xf32>,
    %c0_13 = arith.constant 0 : index
    %c68 = arith.constant 68 : index
    %12 = vector.load %arg1[%c0_13, %c68] : memref<8x2312xf32, #tpu.memory_space<vmem>>, vector<8x2242xf32>
    %c48 = arith.constant 48 : index
    %c0_14 = arith.constant 0 : index
    %13 = vector.load %arg6[%c48, %c0_14] : memref<72x2242xf32, #tpu.memory_space<vmem>>, vector<8x2242xf32>
    tpu.vector_store %arg6[%c48, %c0_14], %12 {strides = array<i32>} : memref<72x2242xf32, #tpu.memory_space<vmem>>, vector<8x2242xf32>,
    %c0_15 = arith.constant 0 : index
    %c69 = arith.constant 69 : index
    %14 = vector.load %arg1[%c0_15, %c69] : memref<8x2312xf32, #tpu.memory_space<vmem>>, vector<8x2242xf32>
    %c56 = arith.constant 56 : index
    %c0_16 = arith.constant 0 : index
    %15 = vector.load %arg6[%c56, %c0_16] : memref<72x2242xf32, #tpu.memory_space<vmem>>, vector<8x2242xf32>
    tpu.vector_store %arg6[%c56, %c0_16], %14 {strides = array<i32>} : memref<72x2242xf32, #tpu.memory_space<vmem>>, vector<8x2242xf32>,
    %c0_17 = arith.constant 0 : index
    %c70 = arith.constant 70 : index
    %16 = vector.load %arg1[%c0_17, %c70] : memref<8x2312xf32, #tpu.memory_space<vmem>>, vector<8x2242xf32>
    %c64 = arith.constant 64 : index
    %c0_18 = arith.constant 0 : index
    %17 = vector.load %arg6[%c64, %c0_18] : memref<72x2242xf32, #tpu.memory_space<vmem>>, vector<8x2242xf32>
    tpu.vector_store %arg6[%c64, %c0_18], %16 {strides = array<i32>} : memref<72x2242xf32, #tpu.memory_space<vmem>>, vector<8x2242xf32>,
    %c0_19 = arith.constant 0 : index
    %c0_20 = arith.constant 0 : index
    %18 = vector.load %arg2[%c0_19, %c0_20] : memref<3x72xf32, #tpu.memory_space<vmem>>, vector<3x72xf32>
    %c0_21 = arith.constant 0 : index
    %c0_22 = arith.constant 0 : index
    %19 = vector.load %arg6[%c0_21, %c0_22] : memref<72x2242xf32, #tpu.memory_space<vmem>>, vector<72x2242xf32>
    %cst = arith.constant dense<0.000000e+00> : vector<3x2242xf32>
    %20 = tpu.matmul %18, %19, %cst {dimension_numbers = #tpu.dot_dimension_numbers<[1], [0], [0], [1], [0, 0, 1, 1], [], []>} : vector<3x72xf32>, vector<72x2242xf32>, vector<3x2242xf32> -> vector<3x2242xf32>
    %c0_23 = arith.constant 0 : index
    %c0_24 = arith.constant 0 : index
    %21 = vector.load %arg4[%c0_23, %c0_24] : memref<3x1xf32, #tpu.memory_space<vmem>>, vector<3x1xf32>
    %22 = vector.broadcast %21 : vector<3x1xf32> to vector<3x2242xf32>
    %23 = arith.addf %20, %22 : vector<3x2242xf32>
    %c0_25 = arith.constant 0 : index
    %c0_26 = arith.constant 0 : index
    %24 = vector.load %arg3[%c0_25, %c0_26] : memref<1x2242xf32, #tpu.memory_space<vmem>>, vector<1x2242xf32>
    %25 = vector.broadcast %24 : vector<1x2242xf32> to vector<3x2242xf32>
    %26 = arith.mulf %23, %25 : vector<3x2242xf32>
    %cst_27 = arith.constant 0.000000e+00 : f32
    %27 = vector.broadcast %cst_27 : f32 to vector<3x35xf32>
    %c0_28 = arith.constant 0 : index
    %c0_29 = arith.constant 0 : index
    %28 = vector.load %arg5[%c0_28, %c0_29] : memref<3x2312xf32, #tpu.memory_space<vmem>>, vector<3x35xf32>
    tpu.vector_store %arg5[%c0_28, %c0_29], %27 {strides = array<i32>} : memref<3x2312xf32, #tpu.memory_space<vmem>>, vector<3x35xf32>,
    %c0_30 = arith.constant 0 : index
    %c35_31 = arith.constant 35 : index
    %29 = vector.load %arg5[%c0_30, %c35_31] : memref<3x2312xf32, #tpu.memory_space<vmem>>, vector<3x2242xf32>
    tpu.vector_store %arg5[%c0_30, %c35_31], %26 {strides = array<i32>} : memref<3x2312xf32, #tpu.memory_space<vmem>>, vector<3x2242xf32>,
    %c0_32 = arith.constant 0 : index
    %c2277 = arith.constant 2277 : index
    %30 = vector.load %arg5[%c0_32, %c2277] : memref<3x2312xf32, #tpu.memory_space<vmem>>, vector<3x35xf32>
    tpu.vector_store %arg5[%c0_32, %c2277], %27 {strides = array<i32>} : memref<3x2312xf32, #tpu.memory_space<vmem>>, vector<3x35xf32>,
    return
  }
  func.func @transform_0(%arg0: i32) -> (i32, i32) {
    %c0_i32 = arith.constant 0 : i32
    %c0_i32_0 = arith.constant 0 : i32
    %c0_i32_1 = arith.constant 0 : i32
    return %c0_i32, %c0_i32_0 : i32, i32
  }
  func.func @transform_1(%arg0: i32) -> (i32, i32) {
    %c0_i32 = arith.constant 0 : i32
    %c0_i32_0 = arith.constant 0 : i32
    %c0_i32_1 = arith.constant 0 : i32
    return %c0_i32, %c0_i32_0 : i32, i32
  }
  func.func @transform_2(%arg0: i32) -> (i32, i32) {
    %c0_i32 = arith.constant 0 : i32
    %c0_i32_0 = arith.constant 0 : i32
    %c0_i32_1 = arith.constant 0 : i32
    return %c0_i32, %c0_i32_0 : i32, i32
  }
  func.func @transform_3(%arg0: i32) -> (i32, i32) {
    %c0_i32 = arith.constant 0 : i32
    %c0_i32_0 = arith.constant 0 : i32
    %c0_i32_1 = arith.constant 0 : i32
    return %c0_i32, %c0_i32_0 : i32, i32
  }
  func.func @transform_4(%arg0: i32) -> (i32, i32) {
    %c0_i32 = arith.constant 0 : i32
    %c0_i32_0 = arith.constant 0 : i32
    %c0_i32_1 = arith.constant 0 : i32
    return %c0_i32, %c0_i32_0 : i32, i32
  }
}

</mosaic_0001>

<llo_original>
// kernel: edsr_forward.9
$region0: #{edsr_forward.9}
  #allocation0 [shape = 'u32[]', space=smem, size = 0x4, offset = 0x4, fixed_abs, tag = 'smem constant byte address 0x4 - core index']
  #allocation1 [shape = 'u32[144,128]{1,0:T(1,128)}', space=vmem, size = 0x12000, scoped, tag = 'internal scratch']
  #allocation2 [shape = 'f32[72,610]{1,0:T(8,128)}', space=vmem, size = 0x2d000, scoped, tag = 'scratch operand']
  %s0 = inlined_call_operand.vmem [shape: f32[8,648], index: 0, kind: input, shape index: {}]
  %s1 = inlined_call_operand.vmem [shape: f32[8,72], index: 1, kind: input, shape index: {}]
  %s2 = inlined_call_operand.vmem [shape: f32[8,648], index: 2, kind: input, shape index: {}]
  %s3 = inlined_call_operand.vmem [shape: f32[1,610], index: 3, kind: input, shape index: {}]
  %s4 = inlined_call_operand.vmem [shape: f32[8,648], index: 4, kind: output, shape index: {}]
  %s5 = sld [smem:[#allocation0]]
  $region26: #{edsr_forward.9} parent=0
    _
  %s7 = ssub.s32 1, %s5
  %s8 = scalar_select 0, %s7, %s5
  // Predicated region
  $region2: #{edsr_forward.9} parent=0 // pred_check
    _
  $region3: #{edsr_forward.9} parent=0 // pred_check_branch
    %10 = sbr.rel (0) target = $region5
  $region4: #{edsr_forward.9} parent=0 // pred_region
    _
  $region5: #{edsr_forward.9} parent=0 // pred_fallthru
    _
  // Predicated region
  $region6: #{edsr_forward.9} parent=0 // pred_check
    _
  $region7: #{edsr_forward.9} parent=0 // pred_check_branch
    %12 = sbr.rel (0) target = $region9
  $region8: #{edsr_forward.9} parent=0 // pred_region
    _
  $region9: #{edsr_forward.9} parent=0 // pred_fallthru
    _
  // Predicated region
  $region10: #{edsr_forward.9} parent=0 // pred_check
    _
  $region11: #{edsr_forward.9} parent=0 // pred_check_branch
    %14 = sbr.rel (0) target = $region13
  $region12: #{edsr_forward.9} parent=0 // pred_region
    _
  $region13: #{edsr_forward.9} parent=0 // pred_fallthru
    _
  // Predicated region
  $region14: #{edsr_forward.9} parent=0 // pred_check
    _
  $region15: #{edsr_forward.9} parent=0 // pred_check_branch
    %16 = sbr.rel (0) target = $region17
  $region16: #{edsr_forward.9} parent=0 // pred_region
    _
  $region17: #{edsr_forward.9} parent=0 // pred_fallthru
    _
  %v17 = vld [vmem:[%s0] sm:$0xff]
  %v18 = vld [vmem:[%s0 + $0x8] sm:$0xff]
  %v19 = vld [vmem:[%s0 + $0x10] sm:$0xff]
  %v20 = vld [vmem:[%s0 + $0x18] sm:$0xff]
  %v21 = vld [vmem:[%s0 + $0x20] sm:$0xff]
  %22 = vst [vmem:[#allocation2] sm:$0xff] %v17
  %23 = vst [vmem:[#allocation2 + $0x8] sm:$0xff] %v18
  %24 = vst [vmem:[#allocation2 + $0x10] sm:$0xff] %v19
  %25 = vst [vmem:[#allocation2 + $0x18] sm:$0xff] %v20
  %vm26 = vcmask 801792
  %27 = vst.msk [vmem:[#allocation2 + $0x20] sm:$0xff] %vm26, %v21
  %v28 = vld [vmem:[%s0] sm:$0xff]
  %v29 = vld [vmem:[%s0 + $0x8] sm:$0xff]
  %v30 = vld [vmem:[%s0 + $0x10] sm:$0xff]
  %v31 = vld [vmem:[%s0 + $0x18] sm:$0xff]
  %v32 = vld [vmem:[%s0 + $0x20] sm:$0xff]
  %38 = vrot.lane.b32.xlu0 %v28, 127
  %v39 = vpop.permute.xlu0 %38
  %40 = vrot.lane.b32.xlu0 %v29, 127
  %v41 = vpop.permute.xlu0 %40
  %42 = vrot.lane.b32.xlu0 %v30, 127
  %v43 = vpop.permute.xlu0 %42
  %44 = vrot.lane.b32.xlu0 %v31, 127
  %v45 = vpop.permute.xlu0 %44
  %46 = vrot.lane.b32.xlu0 %v32, 127
  %v47 = vpop.permute.xlu0 %46
  %vm48 = vcmask 1039360
  %v49 = vsel %vm48, %v39, %v41
  %v50 = vsel %vm48, %v41, %v43
  %v51 = vsel %vm48, %v43, %v45
  %v52 = vsel %vm48, %v45, %v47
  %58 = vst [vmem:[#allocation2 + $0x28] sm:$0xff] %v49
  %59 = vst [vmem:[#allocation2 + $0x30] sm:$0xff] %v50
  %60 = vst [vmem:[#allocation2 + $0x38] sm:$0xff] %v51
  %61 = vst [vmem:[#allocation2 + $0x40] sm:$0xff] %v52
  %62 = vst.msk [vmem:[#allocation2 + $0x48] sm:$0xff] %vm26, %v47
  %v63 = vld [vmem:[%s0] sm:$0xff]
  %v64 = vld [vmem:[%s0 + $0x8] sm:$0xff]
  %v65 = vld [vmem:[%s0 + $0x10] sm:$0xff]
  %v66 = vld [vmem:[%s0 + $0x18] sm:$0xff]
  %v67 = vld [vmem:[%s0 + $0x20] sm:$0xff]
  %73 = vrot.lane.b32.xlu0 %v63, 126
  %v74 = vpop.permute.xlu0 %73
  %75 = vrot.lane.b32.xlu0 %v64, 126
  %v76 = vpop.permute.xlu0 %75
  %77 = vrot.lane.b32.xlu0 %v65, 126
  %v78 = vpop.permute.xlu0 %77
  %79 = vrot.lane.b32.xlu0 %v66, 126
  %v80 = vpop.permute.xlu0 %79
  %81 = vrot.lane.b32.xlu0 %v67, 126
  %v82 = vpop.permute.xlu0 %81
  %vm83 = vcmask 1031168
  %v84 = vsel %vm83, %v74, %v76
  %v85 = vsel %vm83, %v76, %v78
  %v86 = vsel %vm83, %v78, %v80
  %v87 = vsel %vm83, %v80, %v82
  %93 = vst [vmem:[#allocation2 + $0x50] sm:$0xff] %v84
  %94 = vst [vmem:[#allocation2 + $0x58] sm:$0xff] %v85
  %95 = vst [vmem:[#allocation2 + $0x60] sm:$0xff] %v86
  %96 = vst [vmem:[#allocation2 + $0x68] sm:$0xff] %v87
  %97 = vst.msk [vmem:[#allocation2 + $0x70] sm:$0xff] %vm26, %v82
  %v98 = vld [vmem:[%s0] sm:$0xff]
  %v99 = vld [vmem:[%s0 + $0x8] sm:$0xff]
  %v100 = vld [vmem:[%s0 + $0x10] sm:$0xff]
  %v101 = vld [vmem:[%s0 + $0x18] sm:$0xff]
  %v102 = vld [vmem:[%s0 + $0x20] sm:$0xff]
  %108 = vrot.lane.b32.xlu0 %v98, 110
  %v109 = vpop.permute.xlu0 %108
  %110 = vrot.lane.b32.xlu0 %v99, 110
  %v111 = vpop.permute.xlu0 %110
  %112 = vrot.lane.b32.xlu0 %v100, 110
  %v113 = vpop.permute.xlu0 %112
  %114 = vrot.lane.b32.xlu0 %v101, 110
  %v115 = vpop.permute.xlu0 %114
  %116 = vrot.lane.b32.xlu0 %v102, 110
  %v117 = vpop.permute.xlu0 %116
  %vm118 = vcmask 900096
  %v119 = vsel %vm118, %v109, %v111
  %v120 = vsel %vm118, %v111, %v113
  %v121 = vsel %vm118, %v113, %v115
  %v122 = vsel %vm118, %v115, %v117
  %128 = vst [vmem:[#allocation2 + $0x78] sm:$0xff] %v119
  %129 = vst [vmem:[#allocation2 + $0x80] sm:$0xff] %v120
  %130 = vst [vmem:[#allocation2 + $0x88] sm:$0xff] %v121
  %131 = vst [vmem:[#allocation2 + $0x90] sm:$0xff] %v122
  %132 = vst.msk [vmem:[#allocation2 + $0x98] sm:$0xff] %vm26, %v117
  %v133 = vld [vmem:[%s0] sm:$0xff]
  %v134 = vld [vmem:[%s0 + $0x8] sm:$0xff]
  %v135 = vld [vmem:[%s0 + $0x10] sm:$0xff]
  %v136 = vld [vmem:[%s0 + $0x18] sm:$0xff]
  %v137 = vld [vmem:[%s0 + $0x20] sm:$0xff]
  %143 = vrot.lane.b32.xlu0 %v133, 109
  %v144 = vpop.permute.xlu0 %143
  %145 = vrot.lane.b32.xlu0 %v134, 109
  %v146 = vpop.permute.xlu0 %145
  %147 = vrot.lane.b32.xlu0 %v135, 109
  %v148 = vpop.permute.xlu0 %147
  %149 = vrot.lane.b32.xlu0 %v136, 109
  %v150 = vpop.permute.xlu0 %149
  %151 = vrot.lane.b32.xlu0 %v137, 109
  %v152 = vpop.permute.xlu0 %151
  %vm153 = vcmask 891904
  %v154 = vsel %vm153, %v144, %v146
  %v155 = vsel %vm153, %v146, %v148
  %v156 = vsel %vm153, %v148, %v150
  %v157 = vsel %vm153, %v150, %v152
  %163 = vst [vmem:[#allocation2 + $0xa0] sm:$0xff] %v154
  %164 = vst [vmem:[#allocation2 + $0xa8] sm:$0xff] %v155
  %165 = vst [vmem:[#allocation2 + $0xb0] sm:$0xff] %v156
  %166 = vst [vmem:[#allocation2 + $0xb8] sm:$0xff] %v157
  %167 = vst.msk [vmem:[#allocation2 + $0xc0] sm:$0xff] %vm26, %v152
  %v168 = vld [vmem:[%s0] sm:$0xff]
  %v169 = vld [vmem:[%s0 + $0x8] sm:$0xff]
  %v170 = vld [vmem:[%s0 + $0x10] sm:$0xff]
  %v171 = vld [vmem:[%s0 + $0x18] sm:$0xff]
  %v172 = vld [vmem:[%s0 + $0x20] sm:$0xff]
  %178 = vrot.lane.b32.xlu0 %v168, 108
  %v179 = vpop.permute.xlu0 %178
  %180 = vrot.lane.b32.xlu0 %v169, 108
  %v181 = vpop.permute.xlu0 %180
  %182 = vrot.lane.b32.xlu0 %v170, 108
  %v183 = vpop.permute.xlu0 %182
  %184 = vrot.lane.b32.xlu0 %v171, 108
  %v185 = vpop.permute.xlu0 %184
  %186 = vrot.lane.b32.xlu0 %v172, 108
  %v187 = vpop.permute.xlu0 %186
  %vm188 = vcmask 883712
  %v189 = vsel %vm188, %v179, %v181
  %v190 = vsel %vm188, %v181, %v183
  %v191 = vsel %vm188, %v183, %v185
  %v192 = vsel %vm188, %v185, %v187
  %198 = vst [vmem:[#allocation2 + $0xc8] sm:$0xff] %v189
  %199 = vst [vmem:[#allocation2 + $0xd0] sm:$0xff] %v190
  %200 = vst [vmem:[#allocation2 + $0xd8] sm:$0xff] %v191
  %201 = vst [vmem:[#allocation2 + $0xe0] sm:$0xff] %v192
  %202 = vst.msk [vmem:[#allocation2 + $0xe8] sm:$0xff] %vm26, %v187
  %v203 = vld [vmem:[%s0] sm:$0xff]
  %v204 = vld [vmem:[%s0 + $0x8] sm:$0xff]
  %v205 = vld [vmem:[%s0 + $0x10] sm:$0xff]
  %v206 = vld [vmem:[%s0 + $0x18] sm:$0xff]
  %v207 = vld [vmem:[%s0 + $0x20] sm:$0xff]
  %v208 = vld [vmem:[%s0 + $0x28] sm:$0xff]
  %215 = vrot.lane.b32.xlu0 %v203, 92
  %v216 = vpop.permute.xlu0 %215
  %217 = vrot.lane.b32.xlu0 %v204, 92
  %v218 = vpop.permute.xlu0 %217
  %219 = vrot.lane.b32.xlu0 %v205, 92
  %v220 = vpop.permute.xlu0 %219
  %221 = vrot.lane.b32.xlu0 %v206, 92
  %v222 = vpop.permute.xlu0 %221
  %223 = vrot.lane.b32.xlu0 %v207, 92
  %v224 = vpop.permute.xlu0 %223
  %225 = vrot.lane.b32.xlu0 %v208, 92
  %v226 = vpop.permute.xlu0 %225
  %vm227 = vcmask 752640
  %v228 = vsel %vm227, %v216, %v218
  %v229 = vsel %vm227, %v218, %v220
  %v230 = vsel %vm227, %v220, %v222
  %v231 = vsel %vm227, %v222, %v224
  %v232 = vsel %vm227, %v224, %v226
  %238 = vst [vmem:[#allocation2 + $0xf0] sm:$0xff] %v228
  %239 = vst [vmem:[#allocation2 + $0xf8] sm:$0xff] %v229
  %240 = vst [vmem:[#allocation2 + $0x100] sm:$0xff] %v230
  %241 = vst [vmem:[#allocation2 + $0x108] sm:$0xff] %v231
  %242 = vst.msk [vmem:[#allocation2 + $0x110] sm:$0xff] %vm26, %v232
  %v243 = vld [vmem:[%s0] sm:$0xff]
  %v244 = vld [vmem:[%s0 + $0x8] sm:$0xff]
  %v245 = vld [vmem:[%s0 + $0x10] sm:$0xff]
  %v246 = vld [vmem:[%s0 + $0x18] sm:$0xff]
  %v247 = vld [vmem:[%s0 + $0x20] sm:$0xff]
  %v248 = vld [vmem:[%s0 + $0x28] sm:$0xff]
  %255 = vrot.lane.b32.xlu0 %v243, 91
  %v256 = vpop.permute.xlu0 %255
  %257 = vrot.lane.b32.xlu0 %v244, 91
  %v258 = vpop.permute.xlu0 %257
  %259 = vrot.lane.b32.xlu0 %v245, 91
  %v260 = vpop.permute.xlu0 %259
  %261 = vrot.lane.b32.xlu0 %v246, 91
  %v262 = vpop.permute.xlu0 %261
  %263 = vrot.lane.b32.xlu0 %v247, 91
  %v264 = vpop.permute.xlu0 %263
  %265 = vrot.lane.b32.xlu0 %v248, 91
  %v266 = vpop.permute.xlu0 %265
  %vm267 = vcmask 744448
  %v268 = vsel %vm267, %v256, %v258
  %v269 = vsel %vm267, %v258, %v260
  %v270 = vsel %vm267, %v260, %v262
  %v271 = vsel %vm267, %v262, %v264
  %v272 = vsel %vm267, %v264, %v266
  %278 = vst [vmem:[#allocation2 + $0x118] sm:$0xff] %v268
  %279 = vst [vmem:[#allocation2 + $0x120] sm:$0xff] %v269
  %280 = vst [vmem:[#allocation2 + $0x128] sm:$0xff] %v270
  %281 = vst [vmem:[#allocation2 + $0x130] sm:$0xff] %v271
  %282 = vst.msk [vmem:[#allocation2 + $0x138] sm:$0xff] %vm26, %v272
  %v283 = vld [vmem:[%s0] sm:$0xff]
  %v284 = vld [vmem:[%s0 + $0x8] sm:$0xff]
  %v285 = vld [vmem:[%s0 + $0x10] sm:$0xff]
  %v286 = vld [vmem:[%s0 + $0x18] sm:$0xff]
  %v287 = vld [vmem:[%s0 + $0x20] sm:$0xff]
  %v288 = vld [vmem:[%s0 + $0x28] sm:$0xff]
  %295 = vrot.lane.b32.xlu0 %v283, 90
  %v296 = vpop.permute.xlu0 %295
  %297 = vrot.lane.b32.xlu0 %v284, 90
  %v298 = vpop.permute.xlu0 %297
  %299 = vrot.lane.b32.xlu0 %v285, 90
  %v300 = vpop.permute.xlu0 %299
  %301 = vrot.lane.b32.xlu0 %v286, 90
  %v302 = vpop.permute.xlu0 %301
  %303 = vrot.lane.b32.xlu0 %v287, 90
  %v304 = vpop.permute.xlu0 %303
  %305 = vrot.lane.b32.xlu0 %v288, 90
  %v306 = vpop.permute.xlu0 %305
  %vm307 = vcmask 736256
  %v308 = vsel %vm307, %v296, %v298
  %v309 = vsel %vm307, %v298, %v300
  %v310 = vsel %vm307, %v300, %v302
  %v311 = vsel %vm307, %v302, %v304
  %v312 = vsel %vm307, %v304, %v306
  %318 = vst [vmem:[#allocation2 + $0x140] sm:$0xff] %v308
  %319 = vst [vmem:[#allocation2 + $0x148] sm:$0xff] %v309
  %320 = vst [vmem:[#allocation2 + $0x150] sm:$0xff] %v310
  %321 = vst [vmem:[#allocation2 + $0x158] sm:$0xff] %v311
  %322 = vst.msk [vmem:[#allocation2 + $0x160] sm:$0xff] %vm26, %v312
  %v323 = vld [vmem:[%s1] sm:$0xff]
  %v324 = vld [vmem:[#allocation2] sm:$0xff]
  %v325 = vld [vmem:[#allocation2 + $0x8] sm:$0xff]
  %v326 = vld [vmem:[#allocation2 + $0x10] sm:$0xff]
  %v327 = vld [vmem:[#allocation2 + $0x18] sm:$0xff]
  %v328 = vld [vmem:[#allocation2 + $0x20] sm:$0xff]
  %v329 = vld [vmem:[#allocation2 + $0x28] sm:$0xff]
  %v330 = vld [vmem:[#allocation2 + $0x30] sm:$0xff]
  %v331 = vld [vmem:[#allocation2 + $0x38] sm:$0xff]
  %v332 = vld [vmem:[#allocation2 + $0x40] sm:$0xff]
  %v333 = vld [vmem:[#allocation2 + $0x48] sm:$0xff]
  %v334 = vld [vmem:[#allocation2 + $0x50] sm:$0xff]
  %v335 = vld [vmem:[#allocation2 + $0x58] sm:$0xff]
  %v336 = vld [vmem:[#allocation2 + $0x60] sm:$0xff]
  %v337 = vld [vmem:[#allocation2 + $0x68] sm:$0xff]
  %v338 = vld [vmem:[#allocation2 + $0x70] sm:$0xff]
  %v339 = vld [vmem:[#allocation2 + $0x78] sm:$0xff]
  %v340 = vld [vmem:[#allocation2 + $0x80] sm:$0xff]
  %v341 = vld [vmem:[#allocation2 + $0x88] sm:$0xff]
  %v342 = vld [vmem:[#allocation2 + $0x90] sm:$0xff]
  %v343 = vld [vmem:[#allocation2 + $0x98] sm:$0xff]
  %v344 = vld [vmem:[#allocation2 + $0xa0] sm:$0xff]
  %v345 = vld [vmem:[#allocation2 + $0xa8] sm:$0xff]
  %v346 = vld [vmem:[#allocation2 + $0xb0] sm:$0xff]
  %v347 = vld [vmem:[#allocation2 + $0xb8] sm:$0xff]
  %v348 = vld [vmem:[#allocation2 + $0xc0] sm:$0xff]
  %v349 = vld [vmem:[#allocation2 + $0xc8] sm:$0xff]
  %v350 = vld [vmem:[#allocation2 + $0xd0] sm:$0xff]
  %v351 = vld [vmem:[#allocation2 + $0xd8] sm:$0xff]
  %v352 = vld [vmem:[#allocation2 + $0xe0] sm:$0xff]
  %v353 = vld [vmem:[#allocation2 + $0xe8] sm:$0xff]
  %v354 = vld [vmem:[#allocation2 + $0xf0] sm:$0xff]
  %v355 = vld [vmem:[#allocation2 + $0xf8] sm:$0xff]
  %v356 = vld [vmem:[#allocation2 + $0x100] sm:$0xff]
  %v357 = vld [vmem:[#allocation2 + $0x108] sm:$0xff]
  %v358 = vld [vmem:[#allocation2 + $0x110] sm:$0xff]
  %v359 = vld [vmem:[#allocation2 + $0x118] sm:$0xff]
  %v360 = vld [vmem:[#allocation2 + $0x120] sm:$0xff]
  %v361 = vld [vmem:[#allocation2 + $0x128] sm:$0xff]
  %v362 = vld [vmem:[#allocation2 + $0x130] sm:$0xff]
  %v363 = vld [vmem:[#allocation2 + $0x138] sm:$0xff]
  %v364 = vld [vmem:[#allocation2 + $0x140] sm:$0xff]
  %v365 = vld [vmem:[#allocation2 + $0x148] sm:$0xff]
  %v366 = vld [vmem:[#allocation2 + $0x150] sm:$0xff]
  %v367 = vld [vmem:[#allocation2 + $0x158] sm:$0xff]
  %v368 = vld [vmem:[#allocation2 + $0x160] sm:$0xff]
  %v369 = vld [vmem:[%s2] sm:$0xff]
  %v370 = vld [vmem:[%s2 + $0x8] sm:$0xff]
  %v371 = vld [vmem:[%s2 + $0x10] sm:$0xff]
  %v372 = vld [vmem:[%s2 + $0x18] sm:$0xff]
  %v373 = vld [vmem:[%s2 + $0x20] sm:$0xff]
  %379 = vrot.lane.b32.xlu0 %v369, 109
  %v380 = vpop.permute.xlu0 %379
  %381 = vrot.lane.b32.xlu0 %v370, 109
  %v382 = vpop.permute.xlu0 %381
  %383 = vrot.lane.b32.xlu0 %v371, 109
  %v384 = vpop.permute.xlu0 %383
  %385 = vrot.lane.b32.xlu0 %v372, 109
  %v386 = vpop.permute.xlu0 %385
  %387 = vrot.lane.b32.xlu0 %v373, 109
  %v388 = vpop.permute.xlu0 %387
  %v389 = vsel %vm153, %v380, %v382
  %v390 = vsel %vm153, %v382, %v384
  %v391 = vsel %vm153, %v384, %v386
  %v392 = vsel %vm153, %v386, %v388
  %vm398 = vcmask 588800
  %v400 = vsel %vm398, %v323, 0
  %402 = vmatprep.subr.mxu0 0.0
  %403 = vmatpush1.msra.mxu0 0.0
  %404 = vmatprep.subr.mxu0 0.0
  %405 = vmatpush1.msra.mxu0 0.0
  %406 = vmatprep.subr.mxu0 0.0
  %407 = vmatpush1.msra.mxu0 0.0
  %408 = vmatprep.subr.mxu0 0.0
  %409 = vmatpush1.msra.mxu0 0.0
  %410 = vmatprep.subr.mxu0 0.0
  %411 = vmatpush1.msra.mxu0 0.0
  %412 = vmatprep.subr.mxu0 0.0
  %413 = vmatpush1.msra.mxu0 0.0
  %414 = vmatprep.subr.mxu0 0.0
  %415 = vmatpush1.msra.mxu0 0.0
  %416 = vmatprep.subr.mxu0 %v365
  %417 = vmatpush1.msra.mxu0 %v364
  %418 = vmatprep.subr.mxu0 %v360
  %419 = vmatpush1.msra.mxu0 %v359
  %420 = vmatprep.subr.mxu0 %v355
  %421 = vmatpush1.msra.mxu0 %v354
  %422 = vmatprep.subr.mxu0 %v350
  %423 = vmatpush1.msra.mxu0 %v349
  %424 = vmatprep.subr.mxu0 %v345
  %425 = vmatpush1.msra.mxu0 %v344
  %426 = vmatprep.subr.mxu0 %v340
  %427 = vmatpush1.msra.mxu0 %v339
  %428 = vmatprep.subr.mxu0 %v335
  %429 = vmatpush1.msra.mxu0 %v334
  %430 = vmatprep.subr.mxu0 %v330
  %431 = vmatpush1.msra.mxu0 %v329
  %432 = vmatprep.subr.mxu0 %v325
  %433 = vmatpush1.msra.mxu0 %v324
  %434 = vmatprep.subr.mxu0 0.0
  %435 = vmatpush2.msra.mxu0 0.0
  %436 = vmatprep.subr.mxu0 0.0
  %437 = vmatpush2.msra.mxu0 0.0
  %438 = vmatprep.subr.mxu0 0.0
  %439 = vmatpush2.msra.mxu0 0.0
  %440 = vmatprep.subr.mxu0 0.0
  %441 = vmatpush2.msra.mxu0 0.0
  %442 = vmatprep.subr.mxu0 0.0
  %443 = vmatpush2.msra.mxu0 0.0
  %444 = vmatprep.subr.mxu0 0.0
  %445 = vmatpush2.msra.mxu0 0.0
  %446 = vmatprep.subr.mxu0 0.0
  %447 = vmatpush2.msra.mxu0 0.0
  %448 = vmatprep.subr.mxu0 0.0
  %449 = vmatpush2.msra.mxu0 0.0
  %450 = vmatprep.subr.mxu0 0.0
  %451 = vmatpush2.msra.mxu0 0.0
  %452 = vmatprep.subr.mxu0 0.0
  %453 = vmatpush2.msra.mxu0 0.0
  %454 = vmatprep.subr.mxu0 0.0
  %455 = vmatpush2.msra.mxu0 0.0
  %456 = vmatprep.subr.mxu0 0.0
  %457 = vmatpush2.msra.mxu0 0.0
  %458 = vmatprep.subr.mxu0 0.0
  %459 = vmatpush2.msra.mxu0 0.0
  %460 = vmatprep.subr.mxu0 0.0
  %461 = vmatpush2.msra.mxu0 0.0
  %462 = vmatprep.subr.mxu0 0.0
  %463 = vmatpush2.msra.mxu0 0.0
  %464 = vmatprep.subr.mxu0 0.0
  %465 = vmatpush2.msra.mxu0 0.0
  %466 = vmatprep.mubr.f32.mxu0 0.0
  %467 = vmatmul.mubr.f32.gmra.mxu0 %v400
  %v468 = vpop.f32.mrf.mxu0
  %v469 = vadd.f32 %v389, %v468
  %v470 = vpop.f32.mrf.mxu0
  %v471 = vadd.f32 %v390, %v470
  %472 = vdwg.mxu0
  %473 = vmatprep.subr.mxu0 0.0
  %474 = vmatpush1.msra.mxu0 0.0
  %475 = vmatprep.subr.mxu0 0.0
  %476 = vmatpush1.msra.mxu0 0.0
  %477 = vmatprep.subr.mxu0 0.0
  %478 = vmatpush1.msra.mxu0 0.0
  %479 = vmatprep.subr.mxu0 0.0
  %480 = vmatpush1.msra.mxu0 0.0
  %481 = vmatprep.subr.mxu0 0.0
  %482 = vmatpush1.msra.mxu0 0.0
  %483 = vmatprep.subr.mxu0 0.0
  %484 = vmatpush1.msra.mxu0 0.0
  %485 = vmatprep.subr.mxu0 0.0
  %486 = vmatpush1.msra.mxu0 0.0
  %487 = vmatprep.subr.mxu0 %v367
  %488 = vmatpush1.msra.mxu0 %v366
  %489 = vmatprep.subr.mxu0 %v362
  %490 = vmatpush1.msra.mxu0 %v361
  %491 = vmatprep.subr.mxu0 %v357
  %492 = vmatpush1.msra.mxu0 %v356
  %493 = vmatprep.subr.mxu0 %v352
  %494 = vmatpush1.msra.mxu0 %v351
  %495 = vmatprep.subr.mxu0 %v347
  %496 = vmatpush1.msra.mxu0 %v346
  %497 = vmatprep.subr.mxu0 %v342
  %498 = vmatpush1.msra.mxu0 %v341
  %499 = vmatprep.subr.mxu0 %v337
  %500 = vmatpush1.msra.mxu0 %v336
  %501 = vmatprep.subr.mxu0 %v332
  %502 = vmatpush1.msra.mxu0 %v331
  %503 = vmatprep.subr.mxu0 %v327
  %504 = vmatpush1.msra.mxu0 %v326
  %505 = vmatprep.subr.mxu0 0.0
  %506 = vmatpush2.msra.mxu0 0.0
  %507 = vmatprep.subr.mxu0 0.0
  %508 = vmatpush2.msra.mxu0 0.0
  %509 = vmatprep.subr.mxu0 0.0
  %510 = vmatpush2.msra.mxu0 0.0
  %511 = vmatprep.subr.mxu0 0.0
  %512 = vmatpush2.msra.mxu0 0.0
  %513 = vmatprep.subr.mxu0 0.0
  %514 = vmatpush2.msra.mxu0 0.0
  %515 = vmatprep.subr.mxu0 0.0
  %516 = vmatpush2.msra.mxu0 0.0
  %517 = vmatprep.subr.mxu0 0.0
  %518 = vmatpush2.msra.mxu0 0.0
  %519 = vmatprep.subr.mxu0 0.0
  %520 = vmatpush2.msra.mxu0 0.0
  %521 = vmatprep.subr.mxu0 0.0
  %522 = vmatpush2.msra.mxu0 0.0
  %523 = vmatprep.subr.mxu0 0.0
  %524 = vmatpush2.msra.mxu0 0.0
  %525 = vmatprep.subr.mxu0 0.0
  %526 = vmatpush2.msra.mxu0 0.0
  %527 = vmatprep.subr.mxu0 0.0
  %528 = vmatpush2.msra.mxu0 0.0
  %529 = vmatprep.subr.mxu0 0.0
  %530 = vmatpush2.msra.mxu0 0.0
  %531 = vmatprep.subr.mxu0 0.0
  %532 = vmatpush2.msra.mxu0 0.0
  %533 = vmatprep.subr.mxu0 0.0
  %534 = vmatpush2.msra.mxu0 0.0
  %535 = vmatprep.subr.mxu0 0.0
  %536 = vmatpush2.msra.mxu0 0.0
  %537 = vmatprep.mubr.f32.mxu0 0.0
  %538 = vmatmul.mubr.f32.gmra.mxu0 %v400
  %v539 = vpop.f32.mrf.mxu0
  %v540 = vadd.f32 %v391, %v539
  %v541 = vpop.f32.mrf.mxu0
  %v542 = vadd.f32 %v392, %v541
  %543 = vdwg.mxu0
  %544 = vmatprep.subr.mxu0 0.0
  %545 = vmatpush1.msra.mxu0 0.0
  %546 = vmatprep.subr.mxu0 0.0
  %547 = vmatpush1.msra.mxu0 0.0
  %548 = vmatprep.subr.mxu0 0.0
  %549 = vmatpush1.msra.mxu0 0.0
  %550 = vmatprep.subr.mxu0 0.0
  %551 = vmatpush1.msra.mxu0 0.0
  %552 = vmatprep.subr.mxu0 0.0
  %553 = vmatpush1.msra.mxu0 0.0
  %554 = vmatprep.subr.mxu0 0.0
  %555 = vmatpush1.msra.mxu0 0.0
  %556 = vmatprep.subr.mxu0 0.0
  %557 = vmatpush1.msra.mxu0 0.0
  %558 = vmatprep.subr.mxu0 0.0
  %559 = vmatpush1.msra.mxu0 %v368
  %560 = vmatprep.subr.mxu0 0.0
  %561 = vmatpush1.msra.mxu0 %v363
  %562 = vmatprep.subr.mxu0 0.0
  %563 = vmatpush1.msra.mxu0 %v358
  %564 = vmatprep.subr.mxu0 0.0
  %565 = vmatpush1.msra.mxu0 %v353
  %566 = vmatprep.subr.mxu0 0.0
  %567 = vmatpush1.msra.mxu0 %v348
  %568 = vmatprep.subr.mxu0 0.0
  %569 = vmatpush1.msra.mxu0 %v343
  %570 = vmatprep.subr.mxu0 0.0
  %571 = vmatpush1.msra.mxu0 %v338
  %572 = vmatprep.subr.mxu0 0.0
  %573 = vmatpush1.msra.mxu0 %v333
  %574 = vmatprep.subr.mxu0 0.0
  %575 = vmatpush1.msra.mxu0 %v328
  %576 = vmatprep.subr.mxu0 0.0
  %577 = vmatpush2.msra.mxu0 0.0
  %578 = vmatprep.subr.mxu0 0.0
  %579 = vmatpush2.msra.mxu0 0.0
  %580 = vmatprep.subr.mxu0 0.0
  %581 = vmatpush2.msra.mxu0 0.0
  %582 = vmatprep.subr.mxu0 0.0
  %583 = vmatpush2.msra.mxu0 0.0
  %584 = vmatprep.subr.mxu0 0.0
  %585 = vmatpush2.msra.mxu0 0.0
  %586 = vmatprep.subr.mxu0 0.0
  %587 = vmatpush2.msra.mxu0 0.0
  %588 = vmatprep.subr.mxu0 0.0
  %589 = vmatpush2.msra.mxu0 0.0
  %590 = vmatprep.subr.mxu0 0.0
  %591 = vmatpush2.msra.mxu0 0.0
  %592 = vmatprep.subr.mxu0 0.0
  %593 = vmatpush2.msra.mxu0 0.0
  %594 = vmatprep.subr.mxu0 0.0
  %595 = vmatpush2.msra.mxu0 0.0
  %596 = vmatprep.subr.mxu0 0.0
  %597 = vmatpush2.msra.mxu0 0.0
  %598 = vmatprep.subr.mxu0 0.0
  %599 = vmatpush2.msra.mxu0 0.0
  %600 = vmatprep.subr.mxu0 0.0
  %601 = vmatpush2.msra.mxu0 0.0
  %602 = vmatprep.subr.mxu0 0.0
  %603 = vmatpush2.msra.mxu0 0.0
  %604 = vmatprep.subr.mxu0 0.0
  %605 = vmatpush2.msra.mxu0 0.0
  %606 = vmatprep.subr.mxu0 0.0
  %607 = vmatpush2.msra.mxu0 0.0
  %608 = vmatprep.mubr.f32.mxu0 0.0
  %609 = vmatmul.mubr.f32.gmra.mxu0 %v400
  %v610 = vpop.f32.mrf.mxu0
  %v611 = vadd.f32 %v388, %v610
  %v612 = vpop.f32.mrf.mxu0
  %613 = vdwg.mxu0
  %v614 = vld [vmem:[%s3] sm:$0x1f]
  %v616 = vlaneseq
  %v617 = vshrl.u32 %v616, 7
  %v618 = vsub.s32 0, %v617
  %v619 = vrot.slane %v614, %v618
  %v620 = vlaneseq
  %v621 = vshrl.u32 %v620, 7
  %v622 = vsub.s32 1, %v621
  %v623 = vrot.slane %v614, %v622
  %v624 = vlaneseq
  %v625 = vshrl.u32 %v624, 7
  %v626 = vsub.s32 2, %v625
  %v627 = vrot.slane %v614, %v626
  %v628 = vlaneseq
  %v629 = vshrl.u32 %v628, 7
  %v630 = vsub.s32 3, %v629
  %v631 = vrot.slane %v614, %v630
  %v632 = vlaneseq
  %v633 = vshrl.u32 %v632, 7
  %v634 = vsub.s32 4, %v633
  %v635 = vrot.slane %v614, %v634
  %v641 = vmul.f32 %v469, %v619
  %v642 = vmul.f32 %v471, %v623
  %v643 = vmul.f32 %v540, %v627
  %v644 = vmul.f32 %v542, %v631
  %v645 = vmul.f32 %v611, %v635
  %vm646 = vcmask 154624
  %647 = vst.msk [vmem:[%s4] sm:$0xff] %vm646, 0.0
  %653 = vrot.lane.b32.xlu0 %v641, 19
  %v654 = vpop.permute.xlu0 %653
  %655 = vrot.lane.b32.xlu0 %v642, 19
  %v656 = vpop.permute.xlu0 %655
  %657 = vrot.lane.b32.xlu0 %v643, 19
  %v658 = vpop.permute.xlu0 %657
  %659 = vrot.lane.b32.xlu0 %v644, 19
  %v660 = vpop.permute.xlu0 %659
  %661 = vrot.lane.b32.xlu0 %v645, 19
  %v662 = vpop.permute.xlu0 %661
  %v663 = vsel %vm646, %v654, %v656
  %v664 = vsel %vm646, %v656, %v658
  %v665 = vsel %vm646, %v658, %v660
  %v666 = vsel %vm646, %v660, %v662
  %vm672 = vcmask 1047704
  %673 = vst.msk [vmem:[%s4] sm:$0xff] %vm672, %v654
  %674 = vst [vmem:[%s4 + $0x8] sm:$0xff] %v663
  %675 = vst [vmem:[%s4 + $0x10] sm:$0xff] %v664
  %676 = vst [vmem:[%s4 + $0x18] sm:$0xff] %v665
  %vm677 = vcmask 957440
  %678 = vst.msk [vmem:[%s4 + $0x20] sm:$0xff] %vm677, %v666
  %vm679 = vcmask 1048488
  %680 = vst.msk [vmem:[%s4 + $0x20] sm:$0xff] %vm679, 0.0
  %vm681 = vcmask 64512
  %682 = vst.msk [vmem:[%s4 + $0x28] sm:$0xff] %vm681, 0.0
  // Predicated region
  $region18: #{edsr_forward.9} parent=0 // pred_check
    _
  $region19: #{edsr_forward.9} parent=0 // pred_check_branch
    %684 = sbr.rel (0) target = $region21
  $region20: #{edsr_forward.9} parent=0 // pred_region
    _
  $region21: #{edsr_forward.9} parent=0 // pred_fallthru
    _
  // Predicated region
  $region22: #{edsr_forward.9} parent=0 // pred_check
    _
  $region23: #{edsr_forward.9} parent=0 // pred_check_branch
    %686 = sbr.rel (0) target = $region25
  $region24: #{edsr_forward.9} parent=0 // pred_region
    _
  $region25: #{edsr_forward.9} parent=0 // pred_fallthru
    _

// kernel: edsr_forward.6
$region0: #{edsr_forward.6}
  #allocation0 [shape = 'u32[]', space=smem, size = 0x4, offset = 0x4, fixed_abs, tag = 'smem constant byte address 0x4 - core index']
  #allocation1 [shape = 'u32[144,128]{1,0:T(1,128)}', space=vmem, size = 0x12000, scoped, tag = 'internal scratch']
  #allocation2 [shape = 'f32[72,610]{1,0:T(8,128)}', space=vmem, size = 0x2d000, scoped, tag = 'scratch operand']
  %s0 = inlined_call_operand.vmem [shape: f32[3,648], index: 0, kind: input, shape index: {}]
  %s1 = inlined_call_operand.vmem [shape: f32[8,72], index: 1, kind: input, shape index: {}]
  %s2 = inlined_call_operand.vmem [shape: f32[1,610], index: 2, kind: input, shape index: {}]
  %s3 = inlined_call_operand.vmem [shape: f32[8,1], index: 3, kind: input, shape index: {}]
  %s4 = inlined_call_operand.vmem [shape: f32[8,648], index: 4, kind: output, shape index: {}]
  %s5 = sld [smem:[#allocation0]]
  $region26: #{edsr_forward.6} parent=0
    _
  %s7 = ssub.s32 1, %s5
  %s8 = scalar_select 0, %s7, %s5
  // Predicated region
  $region2: #{edsr_forward.6} parent=0 // pred_check
    _
  $region3: #{edsr_forward.6} parent=0 // pred_check_branch
    %10 = sbr.rel (0) target = $region5
  $region4: #{edsr_forward.6} parent=0 // pred_region
    _
  $region5: #{edsr_forward.6} parent=0 // pred_fallthru
    _
  // Predicated region
  $region6: #{edsr_forward.6} parent=0 // pred_check
    _
  $region7: #{edsr_forward.6} parent=0 // pred_check_branch
    %12 = sbr.rel (0) target = $region9
  $region8: #{edsr_forward.6} parent=0 // pred_region
    _
  $region9: #{edsr_forward.6} parent=0 // pred_fallthru
    _
  // Predicated region
  $region10: #{edsr_forward.6} parent=0 // pred_check
    _
  $region11: #{edsr_forward.6} parent=0 // pred_check_branch
    %14 = sbr.rel (0) target = $region13
  $region12: #{edsr_forward.6} parent=0 // pred_region
    _
  $region13: #{edsr_forward.6} parent=0 // pred_fallthru
    _
  // Predicated region
  $region14: #{edsr_forward.6} parent=0 // pred_check
    _
  $region15: #{edsr_forward.6} parent=0 // pred_check_branch
    %16 = sbr.rel (0) target = $region17
  $region16: #{edsr_forward.6} parent=0 // pred_region
    _
  $region17: #{edsr_forward.6} parent=0 // pred_fallthru
    _
  %17 = vst [vmem:[#allocation2] sm:$0xff] 0.0
  %18 = vst [vmem:[#allocation2 + $0x8] sm:$0xff] 0.0
  %19 = vst [vmem:[#allocation2 + $0x10] sm:$0xff] 0.0
  %20 = vst [vmem:[#allocation2 + $0x18] sm:$0xff] 0.0
  %vm21 = vcmask 801792
  %22 = vst.msk [vmem:[#allocation2 + $0x20] sm:$0xff] %vm21, 0.0
  %23 = vst [vmem:[#allocation2 + $0x28] sm:$0xff] 0.0
  %24 = vst [vmem:[#allocation2 + $0x30] sm:$0xff] 0.0
  %25 = vst [vmem:[#allocation2 + $0x38] sm:$0xff] 0.0
  %26 = vst [vmem:[#allocation2 + $0x40] sm:$0xff] 0.0
  %27 = vst.msk [vmem:[#allocation2 + $0x48] sm:$0xff] %vm21, 0.0
  %28 = vst [vmem:[#allocation2 + $0x50] sm:$0xff] 0.0
  %29 = vst [vmem:[#allocation2 + $0x58] sm:$0xff] 0.0
  %30 = vst [vmem:[#allocation2 + $0x60] sm:$0xff] 0.0
  %31 = vst [vmem:[#allocation2 + $0x68] sm:$0xff] 0.0
  %32 = vst.msk [vmem:[#allocation2 + $0x70] sm:$0xff] %vm21, 0.0
  %33 = vst [vmem:[#allocation2 + $0x78] sm:$0xff] 0.0
  %34 = vst [vmem:[#allocation2 + $0x80] sm:$0xff] 0.0
  %35 = vst [vmem:[#allocation2 + $0x88] sm:$0xff] 0.0
  %36 = vst [vmem:[#allocation2 + $0x90] sm:$0xff] 0.0
  %37 = vst.msk [vmem:[#allocation2 + $0x98] sm:$0xff] %vm21, 0.0
  %38 = vst [vmem:[#allocation2 + $0xa0] sm:$0xff] 0.0
  %39 = vst [vmem:[#allocation2 + $0xa8] sm:$0xff] 0.0
  %40 = vst [vmem:[#allocation2 + $0xb0] sm:$0xff] 0.0
  %41 = vst [vmem:[#allocation2 + $0xb8] sm:$0xff] 0.0
  %42 = vst.msk [vmem:[#allocation2 + $0xc0] sm:$0xff] %vm21, 0.0
  %43 = vst [vmem:[#allocation2 + $0xc8] sm:$0xff] 0.0
  %44 = vst [vmem:[#allocation2 + $0xd0] sm:$0xff] 0.0
  %45 = vst [vmem:[#allocation2 + $0xd8] sm:$0xff] 0.0
  %46 = vst [vmem:[#allocation2 + $0xe0] sm:$0xff] 0.0
  %47 = vst.msk [vmem:[#allocation2 + $0xe8] sm:$0xff] %vm21, 0.0
  %48 = vst [vmem:[#allocation2 + $0xf0] sm:$0xff] 0.0
  %49 = vst [vmem:[#allocation2 + $0xf8] sm:$0xff] 0.0
  %50 = vst [vmem:[#allocation2 + $0x100] sm:$0xff] 0.0
  %51 = vst [vmem:[#allocation2 + $0x108] sm:$0xff] 0.0
  %52 = vst.msk [vmem:[#allocation2 + $0x110] sm:$0xff] %vm21, 0.0
  %53 = vst [vmem:[#allocation2 + $0x118] sm:$0xff] 0.0
  %54 = vst [vmem:[#allocation2 + $0x120] sm:$0xff] 0.0
  %55 = vst [vmem:[#allocation2 + $0x128] sm:$0xff] 0.0
  %56 = vst [vmem:[#allocation2 + $0x130] sm:$0xff] 0.0
  %57 = vst.msk [vmem:[#allocation2 + $0x138] sm:$0xff] %vm21, 0.0
  %58 = vst [vmem:[#allocation2 + $0x140] sm:$0xff] 0.0
  %59 = vst [vmem:[#allocation2 + $0x148] sm:$0xff] 0.0
  %60 = vst [vmem:[#allocation2 + $0x150] sm:$0xff] 0.0
  %61 = vst [vmem:[#allocation2 + $0x158] sm:$0xff] 0.0
  %62 = vst.msk [vmem:[#allocation2 + $0x160] sm:$0xff] %vm21, 0.0
  %v63 = vld [vmem:[%s0] sm:$0x77]
  %v64 = vld [vmem:[%s0 + $0x8] sm:$0x77]
  %v65 = vld [vmem:[%s0 + $0x10] sm:$0x7]
  %v68 = vcombine.high %v63, %v63
  %v69 = vcombine.high %v64, %v64
  %72 = vst [vmem:[#allocation2] sm:$0x7] %v63
  %73 = vst [vmem:[#allocation2 + $0x8] sm:$0x7] %v68
  %74 = vst [vmem:[#allocation2 + $0x10] sm:$0x7] %v64
  %75 = vst [vmem:[#allocation2 + $0x18] sm:$0x7] %v69
  %vm76 = vcmask 796672
  %77 = vst.msk [vmem:[#allocation2 + $0x20] sm:$0x7] %vm76, %v65
  %v78 = vld [vmem:[%s0] sm:$0x77]
  %v79 = vld [vmem:[%s0 + $0x8] sm:$0x77]
  %v80 = vld [vmem:[%s0 + $0x10] sm:$0x7]
  %v84 = vcombine.high %v78, %v78
  %v85 = vcombine.high %v79, %v79
  %86 = vrot.lane.b32.xlu0 %v78, 127
  %v87 = vpop.permute.xlu0 %86
  %88 = vrot.lane.b32.xlu0 %v84, 127
  %v89 = vpop.permute.xlu0 %88
  %90 = vrot.lane.b32.xlu0 %v79, 127
  %v91 = vpop.permute.xlu0 %90
  %92 = vrot.lane.b32.xlu0 %v85, 127
  %v93 = vpop.permute.xlu0 %92
  %94 = vrot.lane.b32.xlu0 %v80, 127
  %v95 = vpop.permute.xlu0 %94
  %vm96 = vcmask 1039360
  %v97 = vsel %vm96, %v87, %v89
  %v98 = vsel %vm96, %v89, %v91
  %v99 = vsel %vm96, %v91, %v93
  %v100 = vsel %vm96, %v93, %v95
  %106 = vst [vmem:[#allocation2 + $0x28] sm:$0x7] %v97
  %107 = vst [vmem:[#allocation2 + $0x30] sm:$0x7] %v98
  %108 = vst [vmem:[#allocation2 + $0x38] sm:$0x7] %v99
  %109 = vst [vmem:[#allocation2 + $0x40] sm:$0x7] %v100
  %110 = vst.msk [vmem:[#allocation2 + $0x48] sm:$0x7] %vm76, %v95
  %v111 = vld [vmem:[%s0] sm:$0x77]
  %v112 = vld [vmem:[%s0 + $0x8] sm:$0x77]
  %v113 = vld [vmem:[%s0 + $0x10] sm:$0x7]
  %v117 = vcombine.high %v111, %v111
  %v118 = vcombine.high %v112, %v112
  %119 = vrot.lane.b32.xlu0 %v111, 126
  %v120 = vpop.permute.xlu0 %119
  %121 = vrot.lane.b32.xlu0 %v117, 126
  %v122 = vpop.permute.xlu0 %121
  %123 = vrot.lane.b32.xlu0 %v112, 126
  %v124 = vpop.permute.xlu0 %123
  %125 = vrot.lane.b32.xlu0 %v118, 126
  %v126 = vpop.permute.xlu0 %125
  %127 = vrot.lane.b32.xlu0 %v113, 126
  %v128 = vpop.permute.xlu0 %127
  %vm129 = vcmask 1031168
  %v130 = vsel %vm129, %v120, %v122
  %v131 = vsel %vm129, %v122, %v124
  %v132 = vsel %vm129, %v124, %v126
  %v133 = vsel %vm129, %v126, %v128
  %139 = vst [vmem:[#allocation2 + $0x50] sm:$0x7] %v130
  %140 = vst [vmem:[#allocation2 + $0x58] sm:$0x7] %v131
  %141 = vst [vmem:[#allocation2 + $0x60] sm:$0x7] %v132
  %142 = vst [vmem:[#allocation2 + $0x68] sm:$0x7] %v133
  %143 = vst.msk [vmem:[#allocation2 + $0x70] sm:$0x7] %vm76, %v128
  %v144 = vld [vmem:[%s0] sm:$0x77]
  %v145 = vld [vmem:[%s0 + $0x8] sm:$0x77]
  %v146 = vld [vmem:[%s0 + $0x10] sm:$0x7]
  %v150 = vcombine.high %v144, %v144
  %v151 = vcombine.high %v145, %v145
  %152 = vrot.lane.b32.xlu0 %v144, 110
  %v153 = vpop.permute.xlu0 %152
  %154 = vrot.lane.b32.xlu0 %v150, 110
  %v155 = vpop.permute.xlu0 %154
  %156 = vrot.lane.b32.xlu0 %v145, 110
  %v157 = vpop.permute.xlu0 %156
  %158 = vrot.lane.b32.xlu0 %v151, 110
  %v159 = vpop.permute.xlu0 %158
  %160 = vrot.lane.b32.xlu0 %v146, 110
  %v161 = vpop.permute.xlu0 %160
  %vm162 = vcmask 900096
  %v163 = vsel %vm162, %v153, %v155
  %v164 = vsel %vm162, %v155, %v157
  %v165 = vsel %vm162, %v157, %v159
  %v166 = vsel %vm162, %v159, %v161
  %172 = vst [vmem:[#allocation2 + $0x78] sm:$0x7] %v163
  %173 = vst [vmem:[#allocation2 + $0x80] sm:$0x7] %v164
  %174 = vst [vmem:[#allocation2 + $0x88] sm:$0x7] %v165
  %175 = vst [vmem:[#allocation2 + $0x90] sm:$0x7] %v166
  %176 = vst.msk [vmem:[#allocation2 + $0x98] sm:$0x7] %vm76, %v161
  %v177 = vld [vmem:[%s0] sm:$0x77]
  %v178 = vld [vmem:[%s0 + $0x8] sm:$0x77]
  %v179 = vld [vmem:[%s0 + $0x10] sm:$0x7]
  %v183 = vcombine.high %v177, %v177
  %v184 = vcombine.high %v178, %v178
  %185 = vrot.lane.b32.xlu0 %v177, 109
  %v186 = vpop.permute.xlu0 %185
  %187 = vrot.lane.b32.xlu0 %v183, 109
  %v188 = vpop.permute.xlu0 %187
  %189 = vrot.lane.b32.xlu0 %v178, 109
  %v190 = vpop.permute.xlu0 %189
  %191 = vrot.lane.b32.xlu0 %v184, 109
  %v192 = vpop.permute.xlu0 %191
  %193 = vrot.lane.b32.xlu0 %v179, 109
  %v194 = vpop.permute.xlu0 %193
  %vm195 = vcmask 891904
  %v196 = vsel %vm195, %v186, %v188
  %v197 = vsel %vm195, %v188, %v190
  %v198 = vsel %vm195, %v190, %v192
  %v199 = vsel %vm195, %v192, %v194
  %205 = vst [vmem:[#allocation2 + $0xa0] sm:$0x7] %v196
  %206 = vst [vmem:[#allocation2 + $0xa8] sm:$0x7] %v197
  %207 = vst [vmem:[#allocation2 + $0xb0] sm:$0x7] %v198
  %208 = vst [vmem:[#allocation2 + $0xb8] sm:$0x7] %v199
  %209 = vst.msk [vmem:[#allocation2 + $0xc0] sm:$0x7] %vm76, %v194
  %v210 = vld [vmem:[%s0] sm:$0x77]
  %v211 = vld [vmem:[%s0 + $0x8] sm:$0x77]
  %v212 = vld [vmem:[%s0 + $0x10] sm:$0x7]
  %v216 = vcombine.high %v210, %v210
  %v217 = vcombine.high %v211, %v211
  %218 = vrot.lane.b32.xlu0 %v210, 108
  %v219 = vpop.permute.xlu0 %218
  %220 = vrot.lane.b32.xlu0 %v216, 108
  %v221 = vpop.permute.xlu0 %220
  %222 = vrot.lane.b32.xlu0 %v211, 108
  %v223 = vpop.permute.xlu0 %222
  %224 = vrot.lane.b32.xlu0 %v217, 108
  %v225 = vpop.permute.xlu0 %224
  %226 = vrot.lane.b32.xlu0 %v212, 108
  %v227 = vpop.permute.xlu0 %226
  %vm228 = vcmask 883712
  %v229 = vsel %vm228, %v219, %v221
  %v230 = vsel %vm228, %v221, %v223
  %v231 = vsel %vm228, %v223, %v225
  %v232 = vsel %vm228, %v225, %v227
  %238 = vst [vmem:[#allocation2 + $0xc8] sm:$0x7] %v229
  %239 = vst [vmem:[#allocation2 + $0xd0] sm:$0x7] %v230
  %240 = vst [vmem:[#allocation2 + $0xd8] sm:$0x7] %v231
  %241 = vst [vmem:[#allocation2 + $0xe0] sm:$0x7] %v232
  %242 = vst.msk [vmem:[#allocation2 + $0xe8] sm:$0x7] %vm76, %v227
  %v243 = vld [vmem:[%s0] sm:$0x77]
  %v244 = vld [vmem:[%s0 + $0x8] sm:$0x77]
  %v245 = vld [vmem:[%s0 + $0x10] sm:$0x77]
  %v249 = vcombine.high %v243, %v243
  %v250 = vcombine.high %v244, %v244
  %v251 = vcombine.high %v245, %v245
  %252 = vrot.lane.b32.xlu0 %v243, 92
  %v253 = vpop.permute.xlu0 %252
  %254 = vrot.lane.b32.xlu0 %v249, 92
  %v255 = vpop.permute.xlu0 %254
  %256 = vrot.lane.b32.xlu0 %v244, 92
  %v257 = vpop.permute.xlu0 %256
  %258 = vrot.lane.b32.xlu0 %v250, 92
  %v259 = vpop.permute.xlu0 %258
  %260 = vrot.lane.b32.xlu0 %v245, 92
  %v261 = vpop.permute.xlu0 %260
  %262 = vrot.lane.b32.xlu0 %v251, 92
  %v263 = vpop.permute.xlu0 %262
  %vm264 = vcmask 752640
  %v265 = vsel %vm264, %v253, %v255
  %v266 = vsel %vm264, %v255, %v257
  %v267 = vsel %vm264, %v257, %v259
  %v268 = vsel %vm264, %v259, %v261
  %v269 = vsel %vm264, %v261, %v263
  %275 = vst [vmem:[#allocation2 + $0xf0] sm:$0x7] %v265
  %276 = vst [vmem:[#allocation2 + $0xf8] sm:$0x7] %v266
  %277 = vst [vmem:[#allocation2 + $0x100] sm:$0x7] %v267
  %278 = vst [vmem:[#allocation2 + $0x108] sm:$0x7] %v268
  %279 = vst.msk [vmem:[#allocation2 + $0x110] sm:$0x7] %vm76, %v269
  %v280 = vld [vmem:[%s0] sm:$0x77]
  %v281 = vld [vmem:[%s0 + $0x8] sm:$0x77]
  %v282 = vld [vmem:[%s0 + $0x10] sm:$0x77]
  %v286 = vcombine.high %v280, %v280
  %v287 = vcombine.high %v281, %v281
  %v288 = vcombine.high %v282, %v282
  %289 = vrot.lane.b32.xlu0 %v280, 91
  %v290 = vpop.permute.xlu0 %289
  %291 = vrot.lane.b32.xlu0 %v286, 91
  %v292 = vpop.permute.xlu0 %291
  %293 = vrot.lane.b32.xlu0 %v281, 91
  %v294 = vpop.permute.xlu0 %293
  %295 = vrot.lane.b32.xlu0 %v287, 91
  %v296 = vpop.permute.xlu0 %295
  %297 = vrot.lane.b32.xlu0 %v282, 91
  %v298 = vpop.permute.xlu0 %297
  %299 = vrot.lane.b32.xlu0 %v288, 91
  %v300 = vpop.permute.xlu0 %299
  %vm301 = vcmask 744448
  %v302 = vsel %vm301, %v290, %v292
  %v303 = vsel %vm301, %v292, %v294
  %v304 = vsel %vm301, %v294, %v296
  %v305 = vsel %vm301, %v296, %v298
  %v306 = vsel %vm301, %v298, %v300
  %312 = vst [vmem:[#allocation2 + $0x118] sm:$0x7] %v302
  %313 = vst [vmem:[#allocation2 + $0x120] sm:$0x7] %v303
  %314 = vst [vmem:[#allocation2 + $0x128] sm:$0x7] %v304
  %315 = vst [vmem:[#allocation2 + $0x130] sm:$0x7] %v305
  %316 = vst.msk [vmem:[#allocation2 + $0x138] sm:$0x7] %vm76, %v306
  %v317 = vld [vmem:[%s0] sm:$0x77]
  %v318 = vld [vmem:[%s0 + $0x8] sm:$0x77]
  %v319 = vld [vmem:[%s0 + $0x10] sm:$0x77]
  %v323 = vcombine.high %v317, %v317
  %v324 = vcombine.high %v318, %v318
  %v325 = vcombine.high %v319, %v319
  %326 = vrot.lane.b32.xlu0 %v317, 90
  %v327 = vpop.permute.xlu0 %326
  %328 = vrot.lane.b32.xlu0 %v323, 90
  %v329 = vpop.permute.xlu0 %328
  %330 = vrot.lane.b32.xlu0 %v318, 90
  %v331 = vpop.permute.xlu0 %330
  %332 = vrot.lane.b32.xlu0 %v324, 90
  %v333 = vpop.permute.xlu0 %332
  %334 = vrot.lane.b32.xlu0 %v319, 90
  %v335 = vpop.permute.xlu0 %334
  %336 = vrot.lane.b32.xlu0 %v325, 90
  %v337 = vpop.permute.xlu0 %336
  %vm338 = vcmask 736256
  %v339 = vsel %vm338, %v327, %v329
  %v340 = vsel %vm338, %v329, %v331
  %v341 = vsel %vm338, %v331, %v333
  %v342 = vsel %vm338, %v333, %v335
  %v343 = vsel %vm338, %v335, %v337
  %349 = vst [vmem:[#allocation2 + $0x140] sm:$0x7] %v339
  %350 = vst [vmem:[#allocation2 + $0x148] sm:$0x7] %v340
  %351 = vst [vmem:[#allocation2 + $0x150] sm:$0x7] %v341
  %352 = vst [vmem:[#allocation2 + $0x158] sm:$0x7] %v342
  %353 = vst.msk [vmem:[#allocation2 + $0x160] sm:$0x7] %vm76, %v343
  %v354 = vld [vmem:[%s1] sm:$0xff]
  %v355 = vld [vmem:[#allocation2] sm:$0xff]
  %v356 = vld [vmem:[#allocation2 + $0x8] sm:$0xff]
  %v357 = vld [vmem:[#allocation2 + $0x10] sm:$0xff]
  %v358 = vld [vmem:[#allocation2 + $0x18] sm:$0xff]
  %v359 = vld [vmem:[#allocation2 + $0x20] sm:$0xff]
  %v360 = vld [vmem:[#allocation2 + $0x28] sm:$0xff]
  %v361 = vld [vmem:[#allocation2 + $0x30] sm:$0xff]
  %v362 = vld [vmem:[#allocation2 + $0x38] sm:$0xff]
  %v363 = vld [vmem:[#allocation2 + $0x40] sm:$0xff]
  %v364 = vld [vmem:[#allocation2 + $0x48] sm:$0xff]
  %v365 = vld [vmem:[#allocation2 + $0x50] sm:$0xff]
  %v366 = vld [vmem:[#allocation2 + $0x58] sm:$0xff]
  %v367 = vld [vmem:[#allocation2 + $0x60] sm:$0xff]
  %v368 = vld [vmem:[#allocation2 + $0x68] sm:$0xff]
  %v369 = vld [vmem:[#allocation2 + $0x70] sm:$0xff]
  %v370 = vld [vmem:[#allocation2 + $0x78] sm:$0xff]
  %v371 = vld [vmem:[#allocation2 + $0x80] sm:$0xff]
  %v372 = vld [vmem:[#allocation2 + $0x88] sm:$0xff]
  %v373 = vld [vmem:[#allocation2 + $0x90] sm:$0xff]
  %v374 = vld [vmem:[#allocation2 + $0x98] sm:$0xff]
  %v375 = vld [vmem:[#allocation2 + $0xa0] sm:$0xff]
  %v376 = vld [vmem:[#allocation2 + $0xa8] sm:$0xff]
  %v377 = vld [vmem:[#allocation2 + $0xb0] sm:$0xff]
  %v378 = vld [vmem:[#allocation2 + $0xb8] sm:$0xff]
  %v379 = vld [vmem:[#allocation2 + $0xc0] sm:$0xff]
  %v380 = vld [vmem:[#allocation2 + $0xc8] sm:$0xff]
  %v381 = vld [vmem:[#allocation2 + $0xd0] sm:$0xff]
  %v382 = vld [vmem:[#allocation2 + $0xd8] sm:$0xff]
  %v383 = vld [vmem:[#allocation2 + $0xe0] sm:$0xff]
  %v384 = vld [vmem:[#allocation2 + $0xe8] sm:$0xff]
  %v385 = vld [vmem:[#allocation2 + $0xf0] sm:$0xff]
  %v386 = vld [vmem:[#allocation2 + $0xf8] sm:$0xff]
  %v387 = vld [vmem:[#allocation2 + $0x100] sm:$0xff]
  %v388 = vld [vmem:[#allocation2 + $0x108] sm:$0xff]
  %v389 = vld [vmem:[#allocation2 + $0x110] sm:$0xff]
  %v390 = vld [vmem:[#allocation2 + $0x118] sm:$0xff]
  %v391 = vld [vmem:[#allocation2 + $0x120] sm:$0xff]
  %v392 = vld [vmem:[#allocation2 + $0x128] sm:$0xff]
  %v393 = vld [vmem:[#allocation2 + $0x130] sm:$0xff]
  %v394 = vld [vmem:[#allocation2 + $0x138] sm:$0xff]
  %v395 = vld [vmem:[#allocation2 + $0x140] sm:$0xff]
  %v396 = vld [vmem:[#allocation2 + $0x148] sm:$0xff]
  %v397 = vld [vmem:[#allocation2 + $0x150] sm:$0xff]
  %v398 = vld [vmem:[#allocation2 + $0x158] sm:$0xff]
  %v399 = vld [vmem:[#allocation2 + $0x160] sm:$0xff]
  %v400 = vld [vmem:[%s3] sm:$0xff]
  %402 = vset.pattern.permute.xlu0 0
  %403 = vperm.xlu0 %402, %v400
  %v404 = vpop.permute.xlu0 %403
  %vm406 = vcmask 588800
  %v408 = vsel %vm406, %v354, 0
  %410 = vmatprep.subr.mxu0 0.0
  %411 = vmatpush1.msra.mxu0 0.0
  %412 = vmatprep.subr.mxu0 0.0
  %413 = vmatpush1.msra.mxu0 0.0
  %414 = vmatprep.subr.mxu0 0.0
  %415 = vmatpush1.msra.mxu0 0.0
  %416 = vmatprep.subr.mxu0 0.0
  %417 = vmatpush1.msra.mxu0 0.0
  %418 = vmatprep.subr.mxu0 0.0
  %419 = vmatpush1.msra.mxu0 0.0
  %420 = vmatprep.subr.mxu0 0.0
  %421 = vmatpush1.msra.mxu0 0.0
  %422 = vmatprep.subr.mxu0 0.0
  %423 = vmatpush1.msra.mxu0 0.0
  %424 = vmatprep.subr.mxu0 %v396
  %425 = vmatpush1.msra.mxu0 %v395
  %426 = vmatprep.subr.mxu0 %v391
  %427 = vmatpush1.msra.mxu0 %v390
  %428 = vmatprep.subr.mxu0 %v386
  %429 = vmatpush1.msra.mxu0 %v385
  %430 = vmatprep.subr.mxu0 %v381
  %431 = vmatpush1.msra.mxu0 %v380
  %432 = vmatprep.subr.mxu0 %v376
  %433 = vmatpush1.msra.mxu0 %v375
  %434 = vmatprep.subr.mxu0 %v371
  %435 = vmatpush1.msra.mxu0 %v370
  %436 = vmatprep.subr.mxu0 %v366
  %437 = vmatpush1.msra.mxu0 %v365
  %438 = vmatprep.subr.mxu0 %v361
  %439 = vmatpush1.msra.mxu0 %v360
  %440 = vmatprep.subr.mxu0 %v356
  %441 = vmatpush1.msra.mxu0 %v355
  %442 = vmatprep.subr.mxu0 0.0
  %443 = vmatpush2.msra.mxu0 0.0
  %444 = vmatprep.subr.mxu0 0.0
  %445 = vmatpush2.msra.mxu0 0.0
  %446 = vmatprep.subr.mxu0 0.0
  %447 = vmatpush2.msra.mxu0 0.0
  %448 = vmatprep.subr.mxu0 0.0
  %449 = vmatpush2.msra.mxu0 0.0
  %450 = vmatprep.subr.mxu0 0.0
  %451 = vmatpush2.msra.mxu0 0.0
  %452 = vmatprep.subr.mxu0 0.0
  %453 = vmatpush2.msra.mxu0 0.0
  %454 = vmatprep.subr.mxu0 0.0
  %455 = vmatpush2.msra.mxu0 0.0
  %456 = vmatprep.subr.mxu0 0.0
  %457 = vmatpush2.msra.mxu0 0.0
  %458 = vmatprep.subr.mxu0 0.0
  %459 = vmatpush2.msra.mxu0 0.0
  %460 = vmatprep.subr.mxu0 0.0
  %461 = vmatpush2.msra.mxu0 0.0
  %462 = vmatprep.subr.mxu0 0.0
  %463 = vmatpush2.msra.mxu0 0.0
  %464 = vmatprep.subr.mxu0 0.0
  %465 = vmatpush2.msra.mxu0 0.0
  %466 = vmatprep.subr.mxu0 0.0
  %467 = vmatpush2.msra.mxu0 0.0
  %468 = vmatprep.subr.mxu0 0.0
  %469 = vmatpush2.msra.mxu0 0.0
  %470 = vmatprep.subr.mxu0 0.0
  %471 = vmatpush2.msra.mxu0 0.0
  %472 = vmatprep.subr.mxu0 0.0
  %473 = vmatpush2.msra.mxu0 0.0
  %474 = vmatprep.mubr.f32.mxu0 0.0
  %475 = vmatmul.mubr.f32.gmra.mxu0 %v408
  %v476 = vpop.f32.mrf.mxu0
  %v477 = vadd.f32 %v404, %v476
  %v478 = vpop.f32.mrf.mxu0
  %v479 = vadd.f32 %v404, %v478
  %480 = vdwg.mxu0
  %481 = vmatprep.subr.mxu0 0.0
  %482 = vmatpush1.msra.mxu0 0.0
  %483 = vmatprep.subr.mxu0 0.0
  %484 = vmatpush1.msra.mxu0 0.0
  %485 = vmatprep.subr.mxu0 0.0
  %486 = vmatpush1.msra.mxu0 0.0
  %487 = vmatprep.subr.mxu0 0.0
  %488 = vmatpush1.msra.mxu0 0.0
  %489 = vmatprep.subr.mxu0 0.0
  %490 = vmatpush1.msra.mxu0 0.0
  %491 = vmatprep.subr.mxu0 0.0
  %492 = vmatpush1.msra.mxu0 0.0
  %493 = vmatprep.subr.mxu0 0.0
  %494 = vmatpush1.msra.mxu0 0.0
  %495 = vmatprep.subr.mxu0 %v398
  %496 = vmatpush1.msra.mxu0 %v397
  %497 = vmatprep.subr.mxu0 %v393
  %498 = vmatpush1.msra.mxu0 %v392
  %499 = vmatprep.subr.mxu0 %v388
  %500 = vmatpush1.msra.mxu0 %v387
  %501 = vmatprep.subr.mxu0 %v383
  %502 = vmatpush1.msra.mxu0 %v382
  %503 = vmatprep.subr.mxu0 %v378
  %504 = vmatpush1.msra.mxu0 %v377
  %505 = vmatprep.subr.mxu0 %v373
  %506 = vmatpush1.msra.mxu0 %v372
  %507 = vmatprep.subr.mxu0 %v368
  %508 = vmatpush1.msra.mxu0 %v367
  %509 = vmatprep.subr.mxu0 %v363
  %510 = vmatpush1.msra.mxu0 %v362
  %511 = vmatprep.subr.mxu0 %v358
  %512 = vmatpush1.msra.mxu0 %v357
  %513 = vmatprep.subr.mxu0 0.0
  %514 = vmatpush2.msra.mxu0 0.0
  %515 = vmatprep.subr.mxu0 0.0
  %516 = vmatpush2.msra.mxu0 0.0
  %517 = vmatprep.subr.mxu0 0.0
  %518 = vmatpush2.msra.mxu0 0.0
  %519 = vmatprep.subr.mxu0 0.0
  %520 = vmatpush2.msra.mxu0 0.0
  %521 = vmatprep.subr.mxu0 0.0
  %522 = vmatpush2.msra.mxu0 0.0
  %523 = vmatprep.subr.mxu0 0.0
  %524 = vmatpush2.msra.mxu0 0.0
  %525 = vmatprep.subr.mxu0 0.0
  %526 = vmatpush2.msra.mxu0 0.0
  %527 = vmatprep.subr.mxu0 0.0
  %528 = vmatpush2.msra.mxu0 0.0
  %529 = vmatprep.subr.mxu0 0.0
  %530 = vmatpush2.msra.mxu0 0.0
  %531 = vmatprep.subr.mxu0 0.0
  %532 = vmatpush2.msra.mxu0 0.0
  %533 = vmatprep.subr.mxu0 0.0
  %534 = vmatpush2.msra.mxu0 0.0
  %535 = vmatprep.subr.mxu0 0.0
  %536 = vmatpush2.msra.mxu0 0.0
  %537 = vmatprep.subr.mxu0 0.0
  %538 = vmatpush2.msra.mxu0 0.0
  %539 = vmatprep.subr.mxu0 0.0
  %540 = vmatpush2.msra.mxu0 0.0
  %541 = vmatprep.subr.mxu0 0.0
  %542 = vmatpush2.msra.mxu0 0.0
  %543 = vmatprep.subr.mxu0 0.0
  %544 = vmatpush2.msra.mxu0 0.0
  %545 = vmatprep.mubr.f32.mxu0 0.0
  %546 = vmatmul.mubr.f32.gmra.mxu0 %v408
  %v547 = vpop.f32.mrf.mxu0
  %v548 = vadd.f32 %v404, %v547
  %v549 = vpop.f32.mrf.mxu0
  %v550 = vadd.f32 %v404, %v549
  %551 = vdwg.mxu0
  %552 = vmatprep.subr.mxu0 0.0
  %553 = vmatpush1.msra.mxu0 0.0
  %554 = vmatprep.subr.mxu0 0.0
  %555 = vmatpush1.msra.mxu0 0.0
  %556 = vmatprep.subr.mxu0 0.0
  %557 = vmatpush1.msra.mxu0 0.0
  %558 = vmatprep.subr.mxu0 0.0
  %559 = vmatpush1.msra.mxu0 0.0
  %560 = vmatprep.subr.mxu0 0.0
  %561 = vmatpush1.msra.mxu0 0.0
  %562 = vmatprep.subr.mxu0 0.0
  %563 = vmatpush1.msra.mxu0 0.0
  %564 = vmatprep.subr.mxu0 0.0
  %565 = vmatpush1.msra.mxu0 0.0
  %566 = vmatprep.subr.mxu0 0.0
  %567 = vmatpush1.msra.mxu0 %v399
  %568 = vmatprep.subr.mxu0 0.0
  %569 = vmatpush1.msra.mxu0 %v394
  %570 = vmatprep.subr.mxu0 0.0
  %571 = vmatpush1.msra.mxu0 %v389
  %572 = vmatprep.subr.mxu0 0.0
  %573 = vmatpush1.msra.mxu0 %v384
  %574 = vmatprep.subr.mxu0 0.0
  %575 = vmatpush1.msra.mxu0 %v379
  %576 = vmatprep.subr.mxu0 0.0
  %577 = vmatpush1.msra.mxu0 %v374
  %578 = vmatprep.subr.mxu0 0.0
  %579 = vmatpush1.msra.mxu0 %v369
  %580 = vmatprep.subr.mxu0 0.0
  %581 = vmatpush1.msra.mxu0 %v364
  %582 = vmatprep.subr.mxu0 0.0
  %583 = vmatpush1.msra.mxu0 %v359
  %584 = vmatprep.subr.mxu0 0.0
  %585 = vmatpush2.msra.mxu0 0.0
  %586 = vmatprep.subr.mxu0 0.0
  %587 = vmatpush2.msra.mxu0 0.0
  %588 = vmatprep.subr.mxu0 0.0
  %589 = vmatpush2.msra.mxu0 0.0
  %590 = vmatprep.subr.mxu0 0.0
  %591 = vmatpush2.msra.mxu0 0.0
  %592 = vmatprep.subr.mxu0 0.0
  %593 = vmatpush2.msra.mxu0 0.0
  %594 = vmatprep.subr.mxu0 0.0
  %595 = vmatpush2.msra.mxu0 0.0
  %596 = vmatprep.subr.mxu0 0.0
  %597 = vmatpush2.msra.mxu0 0.0
  %598 = vmatprep.subr.mxu0 0.0
  %599 = vmatpush2.msra.mxu0 0.0
  %600 = vmatprep.subr.mxu0 0.0
  %601 = vmatpush2.msra.mxu0 0.0
  %602 = vmatprep.subr.mxu0 0.0
  %603 = vmatpush2.msra.mxu0 0.0
  %604 = vmatprep.subr.mxu0 0.0
  %605 = vmatpush2.msra.mxu0 0.0
  %606 = vmatprep.subr.mxu0 0.0
  %607 = vmatpush2.msra.mxu0 0.0
  %608 = vmatprep.subr.mxu0 0.0
  %609 = vmatpush2.msra.mxu0 0.0
  %610 = vmatprep.subr.mxu0 0.0
  %611 = vmatpush2.msra.mxu0 0.0
  %612 = vmatprep.subr.mxu0 0.0
  %613 = vmatpush2.msra.mxu0 0.0
  %614 = vmatprep.subr.mxu0 0.0
  %615 = vmatpush2.msra.mxu0 0.0
  %616 = vmatprep.mubr.f32.mxu0 0.0
  %617 = vmatmul.mubr.f32.gmra.mxu0 %v408
  %v618 = vpop.f32.mrf.mxu0
  %v619 = vadd.f32 %v404, %v618
  %v620 = vpop.f32.mrf.mxu0
  %621 = vdwg.mxu0
  %v622 = vld [vmem:[%s2] sm:$0x1f]
  %v624 = vlaneseq
  %v625 = vshrl.u32 %v624, 7
  %v626 = vsub.s32 0, %v625
  %v627 = vrot.slane %v622, %v626
  %v628 = vlaneseq
  %v629 = vshrl.u32 %v628, 7
  %v630 = vsub.s32 1, %v629
  %v631 = vrot.slane %v622, %v630
  %v632 = vlaneseq
  %v633 = vshrl.u32 %v632, 7
  %v634 = vsub.s32 2, %v633
  %v635 = vrot.slane %v622, %v634
  %v636 = vlaneseq
  %v637 = vshrl.u32 %v636, 7
  %v638 = vsub.s32 3, %v637
  %v639 = vrot.slane %v622, %v638
  %v640 = vlaneseq
  %v641 = vshrl.u32 %v640, 7
  %v642 = vsub.s32 4, %v641
  %v643 = vrot.slane %v622, %v642
  %v649 = vmul.f32 %v477, %v627
  %v650 = vmul.f32 %v479, %v631
  %v651 = vmul.f32 %v548, %v635
  %v652 = vmul.f32 %v550, %v639
  %v653 = vmul.f32 %v619, %v643
  %vm654 = vcmask 154624
  %655 = vst.msk [vmem:[%s4] sm:$0xff] %vm654, 0.0
  %661 = vrot.lane.b32.xlu0 %v649, 19
  %v662 = vpop.permute.xlu0 %661
  %663 = vrot.lane.b32.xlu0 %v650, 19
  %v664 = vpop.permute.xlu0 %663
  %665 = vrot.lane.b32.xlu0 %v651, 19
  %v666 = vpop.permute.xlu0 %665
  %667 = vrot.lane.b32.xlu0 %v652, 19
  %v668 = vpop.permute.xlu0 %667
  %669 = vrot.lane.b32.xlu0 %v653, 19
  %v670 = vpop.permute.xlu0 %669
  %v671 = vsel %vm654, %v662, %v664
  %v672 = vsel %vm654, %v664, %v666
  %v673 = vsel %vm654, %v666, %v668
  %v674 = vsel %vm654, %v668, %v670
  %vm680 = vcmask 1047704
  %681 = vst.msk [vmem:[%s4] sm:$0xff] %vm680, %v662
  %682 = vst [vmem:[%s4 + $0x8] sm:$0xff] %v671
  %683 = vst [vmem:[%s4 + $0x10] sm:$0xff] %v672
  %684 = vst [vmem:[%s4 + $0x18] sm:$0xff] %v673
  %vm685 = vcmask 957440
  %686 = vst.msk [vmem:[%s4 + $0x20] sm:$0xff] %vm685, %v674
  %vm687 = vcmask 1048488
  %688 = vst.msk [vmem:[%s4 + $0x20] sm:$0xff] %vm687, 0.0
  %vm689 = vcmask 64512
  %690 = vst.msk [vmem:[%s4 + $0x28] sm:$0xff] %vm689, 0.0
  // Predicated region
  $region18: #{edsr_forward.6} parent=0 // pred_check
    _
  $region19: #{edsr_forward.6} parent=0 // pred_check_branch
    %692 = sbr.rel (0) target = $region21
  $region20: #{edsr_forward.6} parent=0 // pred_region
    _
  $region21: #{edsr_forward.6} parent=0 // pred_fallthru
    _
  // Predicated region
  $region22: #{edsr_forward.6} parent=0 // pred_check
    _
  $region23: #{edsr_forward.6} parent=0 // pred_check_branch
    %694 = sbr.rel (0) target = $region25
  $region24: #{edsr_forward.6} parent=0 // pred_region
    _
  $region25: #{edsr_forward.6} parent=0 // pred_fallthru
    _

// kernel: edsr_forward.10
$region0: #{edsr_forward.10}
  #allocation0 [shape = 'u32[]', space=smem, size = 0x4, offset = 0x4, fixed_abs, tag = 'smem constant byte address 0x4 - core index']
  #allocation1 [shape = 'u32[144,128]{1,0:T(1,128)}', space=vmem, size = 0x12000, scoped, tag = 'internal scratch']
  #allocation2 [shape = 'f32[72,610]{1,0:T(8,128)}', space=vmem, size = 0x2d000, scoped, tag = 'scratch operand']
  %s0 = inlined_call_operand.vmem [shape: f32[8,648], index: 0, kind: input, shape index: {}]
  %s1 = inlined_call_operand.vmem [shape: f32[32,72], index: 1, kind: input, shape index: {}]
  %s2 = inlined_call_operand.vmem [shape: f32[1,610], index: 2, kind: input, shape index: {}]
  %s3 = inlined_call_operand.vmem [shape: f32[32,1], index: 3, kind: input, shape index: {}]
  %s4 = inlined_call_operand.vmem [shape: f32[32,648], index: 4, kind: output, shape index: {}]
  %s5 = sld [smem:[#allocation0]]
  $region26: #{edsr_forward.10} parent=0
    _
  %s7 = ssub.s32 1, %s5
  %s8 = scalar_select 0, %s7, %s5
  // Predicated region
  $region2: #{edsr_forward.10} parent=0 // pred_check
    _
  $region3: #{edsr_forward.10} parent=0 // pred_check_branch
    %10 = sbr.rel (0) target = $region5
  $region4: #{edsr_forward.10} parent=0 // pred_region
    _
  $region5: #{edsr_forward.10} parent=0 // pred_fallthru
    _
  // Predicated region
  $region6: #{edsr_forward.10} parent=0 // pred_check
    _
  $region7: #{edsr_forward.10} parent=0 // pred_check_branch
    %12 = sbr.rel (0) target = $region9
  $region8: #{edsr_forward.10} parent=0 // pred_region
    _
  $region9: #{edsr_forward.10} parent=0 // pred_fallthru
    _
  // Predicated region
  $region10: #{edsr_forward.10} parent=0 // pred_check
    _
  $region11: #{edsr_forward.10} parent=0 // pred_check_branch
    %14 = sbr.rel (0) target = $region13
  $region12: #{edsr_forward.10} parent=0 // pred_region
    _
  $region13: #{edsr_forward.10} parent=0 // pred_fallthru
    _
  // Predicated region
  $region14: #{edsr_forward.10} parent=0 // pred_check
    _
  $region15: #{edsr_forward.10} parent=0 // pred_check_branch
    %16 = sbr.rel (0) target = $region17
  $region16: #{edsr_forward.10} parent=0 // pred_region
    _
  $region17: #{edsr_forward.10} parent=0 // pred_fallthru
    _
  %v17 = vld [vmem:[%s0] sm:$0xff]
  %v18 = vld [vmem:[%s0 + $0x8] sm:$0xff]
  %v19 = vld [vmem:[%s0 + $0x10] sm:$0xff]
  %v20 = vld [vmem:[%s0 + $0x18] sm:$0xff]
  %v21 = vld [vmem:[%s0 + $0x20] sm:$0xff]
  %22 = vst [vmem:[#allocation2] sm:$0xff] %v17
  %23 = vst [vmem:[#allocation2 + $0x8] sm:$0xff] %v18
  %24 = vst [vmem:[#allocation2 + $0x10] sm:$0xff] %v19
  %25 = vst [vmem:[#allocation2 + $0x18] sm:$0xff] %v20
  %vm26 = vcmask 801792
  %27 = vst.msk [vmem:[#allocation2 + $0x20] sm:$0xff] %vm26, %v21
  %v28 = vld [vmem:[%s0] sm:$0xff]
  %v29 = vld [vmem:[%s0 + $0x8] sm:$0xff]
  %v30 = vld [vmem:[%s0 + $0x10] sm:$0xff]
  %v31 = vld [vmem:[%s0 + $0x18] sm:$0xff]
  %v32 = vld [vmem:[%s0 + $0x20] sm:$0xff]
  %38 = vrot.lane.b32.xlu0 %v28, 127
  %v39 = vpop.permute.xlu0 %38
  %40 = vrot.lane.b32.xlu0 %v29, 127
  %v41 = vpop.permute.xlu0 %40
  %42 = vrot.lane.b32.xlu0 %v30, 127
  %v43 = vpop.permute.xlu0 %42
  %44 = vrot.lane.b32.xlu0 %v31, 127
  %v45 = vpop.permute.xlu0 %44
  %46 = vrot.lane.b32.xlu0 %v32, 127
  %v47 = vpop.permute.xlu0 %46
  %vm48 = vcmask 1039360
  %v49 = vsel %vm48, %v39, %v41
  %v50 = vsel %vm48, %v41, %v43
  %v51 = vsel %vm48, %v43, %v45
  %v52 = vsel %vm48, %v45, %v47
  %58 = vst [vmem:[#allocation2 + $0x28] sm:$0xff] %v49
  %59 = vst [vmem:[#allocation2 + $0x30] sm:$0xff] %v50
  %60 = vst [vmem:[#allocation2 + $0x38] sm:$0xff] %v51
  %61 = vst [vmem:[#allocation2 + $0x40] sm:$0xff] %v52
  %62 = vst.msk [vmem:[#allocation2 + $0x48] sm:$0xff] %vm26, %v47
  %v63 = vld [vmem:[%s0] sm:$0xff]
  %v64 = vld [vmem:[%s0 + $0x8] sm:$0xff]
  %v65 = vld [vmem:[%s0 + $0x10] sm:$0xff]
  %v66 = vld [vmem:[%s0 + $0x18] sm:$0xff]
  %v67 = vld [vmem:[%s0 + $0x20] sm:$0xff]
  %73 = vrot.lane.b32.xlu0 %v63, 126
  %v74 = vpop.permute.xlu0 %73
  %75 = vrot.lane.b32.xlu0 %v64, 126
  %v76 = vpop.permute.xlu0 %75
  %77 = vrot.lane.b32.xlu0 %v65, 126
  %v78 = vpop.permute.xlu0 %77
  %79 = vrot.lane.b32.xlu0 %v66, 126
  %v80 = vpop.permute.xlu0 %79
  %81 = vrot.lane.b32.xlu0 %v67, 126
  %v82 = vpop.permute.xlu0 %81
  %vm83 = vcmask 1031168
  %v84 = vsel %vm83, %v74, %v76
  %v85 = vsel %vm83, %v76, %v78
  %v86 = vsel %vm83, %v78, %v80
  %v87 = vsel %vm83, %v80, %v82
  %93 = vst [vmem:[#allocation2 + $0x50] sm:$0xff] %v84
  %94 = vst [vmem:[#allocation2 + $0x58] sm:$0xff] %v85
  %95 = vst [vmem:[#allocation2 + $0x60] sm:$0xff] %v86
  %96 = vst [vmem:[#allocation2 + $0x68] sm:$0xff] %v87
  %97 = vst.msk [vmem:[#allocation2 + $0x70] sm:$0xff] %vm26, %v82
  %v98 = vld [vmem:[%s0] sm:$0xff]
  %v99 = vld [vmem:[%s0 + $0x8] sm:$0xff]
  %v100 = vld [vmem:[%s0 + $0x10] sm:$0xff]
  %v101 = vld [vmem:[%s0 + $0x18] sm:$0xff]
  %v102 = vld [vmem:[%s0 + $0x20] sm:$0xff]
  %108 = vrot.lane.b32.xlu0 %v98, 110
  %v109 = vpop.permute.xlu0 %108
  %110 = vrot.lane.b32.xlu0 %v99, 110
  %v111 = vpop.permute.xlu0 %110
  %112 = vrot.lane.b32.xlu0 %v100, 110
  %v113 = vpop.permute.xlu0 %112
  %114 = vrot.lane.b32.xlu0 %v101, 110
  %v115 = vpop.permute.xlu0 %114
  %116 = vrot.lane.b32.xlu0 %v102, 110
  %v117 = vpop.permute.xlu0 %116
  %vm118 = vcmask 900096
  %v119 = vsel %vm118, %v109, %v111
  %v120 = vsel %vm118, %v111, %v113
  %v121 = vsel %vm118, %v113, %v115
  %v122 = vsel %vm118, %v115, %v117
  %128 = vst [vmem:[#allocation2 + $0x78] sm:$0xff] %v119
  %129 = vst [vmem:[#allocation2 + $0x80] sm:$0xff] %v120
  %130 = vst [vmem:[#allocation2 + $0x88] sm:$0xff] %v121
  %131 = vst [vmem:[#allocation2 + $0x90] sm:$0xff] %v122
  %132 = vst.msk [vmem:[#allocation2 + $0x98] sm:$0xff] %vm26, %v117
  %v133 = vld [vmem:[%s0] sm:$0xff]
  %v134 = vld [vmem:[%s0 + $0x8] sm:$0xff]
  %v135 = vld [vmem:[%s0 + $0x10] sm:$0xff]
  %v136 = vld [vmem:[%s0 + $0x18] sm:$0xff]
  %v137 = vld [vmem:[%s0 + $0x20] sm:$0xff]
  %143 = vrot.lane.b32.xlu0 %v133, 109
  %v144 = vpop.permute.xlu0 %143
  %145 = vrot.lane.b32.xlu0 %v134, 109
  %v146 = vpop.permute.xlu0 %145
  %147 = vrot.lane.b32.xlu0 %v135, 109
  %v148 = vpop.permute.xlu0 %147
  %149 = vrot.lane.b32.xlu0 %v136, 109
  %v150 = vpop.permute.xlu0 %149
  %151 = vrot.lane.b32.xlu0 %v137, 109
  %v152 = vpop.permute.xlu0 %151
  %vm153 = vcmask 891904
  %v154 = vsel %vm153, %v144, %v146
  %v155 = vsel %vm153, %v146, %v148
  %v156 = vsel %vm153, %v148, %v150
  %v157 = vsel %vm153, %v150, %v152
  %163 = vst [vmem:[#allocation2 + $0xa0] sm:$0xff] %v154
  %164 = vst [vmem:[#allocation2 + $0xa8] sm:$0xff] %v155
  %165 = vst [vmem:[#allocation2 + $0xb0] sm:$0xff] %v156
  %166 = vst [vmem:[#allocation2 + $0xb8] sm:$0xff] %v157
  %167 = vst.msk [vmem:[#allocation2 + $0xc0] sm:$0xff] %vm26, %v152
  %v168 = vld [vmem:[%s0] sm:$0xff]
  %v169 = vld [vmem:[%s0 + $0x8] sm:$0xff]
  %v170 = vld [vmem:[%s0 + $0x10] sm:$0xff]
  %v171 = vld [vmem:[%s0 + $0x18] sm:$0xff]
  %v172 = vld [vmem:[%s0 + $0x20] sm:$0xff]
  %178 = vrot.lane.b32.xlu0 %v168, 108
  %v179 = vpop.permute.xlu0 %178
  %180 = vrot.lane.b32.xlu0 %v169, 108
  %v181 = vpop.permute.xlu0 %180
  %182 = vrot.lane.b32.xlu0 %v170, 108
  %v183 = vpop.permute.xlu0 %182
  %184 = vrot.lane.b32.xlu0 %v171, 108
  %v185 = vpop.permute.xlu0 %184
  %186 = vrot.lane.b32.xlu0 %v172, 108
  %v187 = vpop.permute.xlu0 %186
  %vm188 = vcmask 883712
  %v189 = vsel %vm188, %v179, %v181
  %v190 = vsel %vm188, %v181, %v183
  %v191 = vsel %vm188, %v183, %v185
  %v192 = vsel %vm188, %v185, %v187
  %198 = vst [vmem:[#allocation2 + $0xc8] sm:$0xff] %v189
  %199 = vst [vmem:[#allocation2 + $0xd0] sm:$0xff] %v190
  %200 = vst [vmem:[#allocation2 + $0xd8] sm:$0xff] %v191
  %201 = vst [vmem:[#allocation2 + $0xe0] sm:$0xff] %v192
  %202 = vst.msk [vmem:[#allocation2 + $0xe8] sm:$0xff] %vm26, %v187
  %v203 = vld [vmem:[%s0] sm:$0xff]
  %v204 = vld [vmem:[%s0 + $0x8] sm:$0xff]
  %v205 = vld [vmem:[%s0 + $0x10] sm:$0xff]
  %v206 = vld [vmem:[%s0 + $0x18] sm:$0xff]
  %v207 = vld [vmem:[%s0 + $0x20] sm:$0xff]
  %v208 = vld [vmem:[%s0 + $0x28] sm:$0xff]
  %215 = vrot.lane.b32.xlu0 %v203, 92
  %v216 = vpop.permute.xlu0 %215
  %217 = vrot.lane.b32.xlu0 %v204, 92
  %v218 = vpop.permute.xlu0 %217
  %219 = vrot.lane.b32.xlu0 %v205, 92
  %v220 = vpop.permute.xlu0 %219
  %221 = vrot.lane.b32.xlu0 %v206, 92
  %v222 = vpop.permute.xlu0 %221
  %223 = vrot.lane.b32.xlu0 %v207, 92
  %v224 = vpop.permute.xlu0 %223
  %225 = vrot.lane.b32.xlu0 %v208, 92
  %v226 = vpop.permute.xlu0 %225
  %vm227 = vcmask 752640
  %v228 = vsel %vm227, %v216, %v218
  %v229 = vsel %vm227, %v218, %v220
  %v230 = vsel %vm227, %v220, %v222
  %v231 = vsel %vm227, %v222, %v224
  %v232 = vsel %vm227, %v224, %v226
  %238 = vst [vmem:[#allocation2 + $0xf0] sm:$0xff] %v228
  %239 = vst [vmem:[#allocation2 + $0xf8] sm:$0xff] %v229
  %240 = vst [vmem:[#allocation2 + $0x100] sm:$0xff] %v230
  %241 = vst [vmem:[#allocation2 + $0x108] sm:$0xff] %v231
  %242 = vst.msk [vmem:[#allocation2 + $0x110] sm:$0xff] %vm26, %v232
  %v243 = vld [vmem:[%s0] sm:$0xff]
  %v244 = vld [vmem:[%s0 + $0x8] sm:$0xff]
  %v245 = vld [vmem:[%s0 + $0x10] sm:$0xff]
  %v246 = vld [vmem:[%s0 + $0x18] sm:$0xff]
  %v247 = vld [vmem:[%s0 + $0x20] sm:$0xff]
  %v248 = vld [vmem:[%s0 + $0x28] sm:$0xff]
  %255 = vrot.lane.b32.xlu0 %v243, 91
  %v256 = vpop.permute.xlu0 %255
  %257 = vrot.lane.b32.xlu0 %v244, 91
  %v258 = vpop.permute.xlu0 %257
  %259 = vrot.lane.b32.xlu0 %v245, 91
  %v260 = vpop.permute.xlu0 %259
  %261 = vrot.lane.b32.xlu0 %v246, 91
  %v262 = vpop.permute.xlu0 %261
  %263 = vrot.lane.b32.xlu0 %v247, 91
  %v264 = vpop.permute.xlu0 %263
  %265 = vrot.lane.b32.xlu0 %v248, 91
  %v266 = vpop.permute.xlu0 %265
  %vm267 = vcmask 744448
  %v268 = vsel %vm267, %v256, %v258
  %v269 = vsel %vm267, %v258, %v260
  %v270 = vsel %vm267, %v260, %v262
  %v271 = vsel %vm267, %v262, %v264
  %v272 = vsel %vm267, %v264, %v266
  %278 = vst [vmem:[#allocation2 + $0x118] sm:$0xff] %v268
  %279 = vst [vmem:[#allocation2 + $0x120] sm:$0xff] %v269
  %280 = vst [vmem:[#allocation2 + $0x128] sm:$0xff] %v270
  %281 = vst [vmem:[#allocation2 + $0x130] sm:$0xff] %v271
  %282 = vst.msk [vmem:[#allocation2 + $0x138] sm:$0xff] %vm26, %v272
  %v283 = vld [vmem:[%s0] sm:$0xff]
  %v284 = vld [vmem:[%s0 + $0x8] sm:$0xff]
  %v285 = vld [vmem:[%s0 + $0x10] sm:$0xff]
  %v286 = vld [vmem:[%s0 + $0x18] sm:$0xff]
  %v287 = vld [vmem:[%s0 + $0x20] sm:$0xff]
  %v288 = vld [vmem:[%s0 + $0x28] sm:$0xff]
  %295 = vrot.lane.b32.xlu0 %v283, 90
  %v296 = vpop.permute.xlu0 %295
  %297 = vrot.lane.b32.xlu0 %v284, 90
  %v298 = vpop.permute.xlu0 %297
  %299 = vrot.lane.b32.xlu0 %v285, 90
  %v300 = vpop.permute.xlu0 %299
  %301 = vrot.lane.b32.xlu0 %v286, 90
  %v302 = vpop.permute.xlu0 %301
  %303 = vrot.lane.b32.xlu0 %v287, 90
  %v304 = vpop.permute.xlu0 %303
  %305 = vrot.lane.b32.xlu0 %v288, 90
  %v306 = vpop.permute.xlu0 %305
  %vm307 = vcmask 736256
  %v308 = vsel %vm307, %v296, %v298
  %v309 = vsel %vm307, %v298, %v300
  %v310 = vsel %vm307, %v300, %v302
  %v311 = vsel %vm307, %v302, %v304
  %v312 = vsel %vm307, %v304, %v306
  %318 = vst [vmem:[#allocation2 + $0x140] sm:$0xff] %v308
  %319 = vst [vmem:[#allocation2 + $0x148] sm:$0xff] %v309
  %320 = vst [vmem:[#allocation2 + $0x150] sm:$0xff] %v310
  %321 = vst [vmem:[#allocation2 + $0x158] sm:$0xff] %v311
  %322 = vst.msk [vmem:[#allocation2 + $0x160] sm:$0xff] %vm26, %v312
  %v323 = vld [vmem:[%s1] sm:$0xff]
  %v324 = vld [vmem:[%s1 + $0x8] sm:$0xff]
  %v325 = vld [vmem:[%s1 + $0x10] sm:$0xff]
  %v326 = vld [vmem:[%s1 + $0x18] sm:$0xff]
  %v327 = vld [vmem:[#allocation2] sm:$0xff]
  %v328 = vld [vmem:[#allocation2 + $0x8] sm:$0xff]
  %v329 = vld [vmem:[#allocation2 + $0x10] sm:$0xff]
  %v330 = vld [vmem:[#allocation2 + $0x18] sm:$0xff]
  %v331 = vld [vmem:[#allocation2 + $0x20] sm:$0xff]
  %v332 = vld [vmem:[#allocation2 + $0x28] sm:$0xff]
  %v333 = vld [vmem:[#allocation2 + $0x30] sm:$0xff]
  %v334 = vld [vmem:[#allocation2 + $0x38] sm:$0xff]
  %v335 = vld [vmem:[#allocation2 + $0x40] sm:$0xff]
  %v336 = vld [vmem:[#allocation2 + $0x48] sm:$0xff]
  %v337 = vld [vmem:[#allocation2 + $0x50] sm:$0xff]
  %v338 = vld [vmem:[#allocation2 + $0x58] sm:$0xff]
  %v339 = vld [vmem:[#allocation2 + $0x60] sm:$0xff]
  %v340 = vld [vmem:[#allocation2 + $0x68] sm:$0xff]
  %v341 = vld [vmem:[#allocation2 + $0x70] sm:$0xff]
  %v342 = vld [vmem:[#allocation2 + $0x78] sm:$0xff]
  %v343 = vld [vmem:[#allocation2 + $0x80] sm:$0xff]
  %v344 = vld [vmem:[#allocation2 + $0x88] sm:$0xff]
  %v345 = vld [vmem:[#allocation2 + $0x90] sm:$0xff]
  %v346 = vld [vmem:[#allocation2 + $0x98] sm:$0xff]
  %v347 = vld [vmem:[#allocation2 + $0xa0] sm:$0xff]
  %v348 = vld [vmem:[#allocation2 + $0xa8] sm:$0xff]
  %v349 = vld [vmem:[#allocation2 + $0xb0] sm:$0xff]
  %v350 = vld [vmem:[#allocation2 + $0xb8] sm:$0xff]
  %v351 = vld [vmem:[#allocation2 + $0xc0] sm:$0xff]
  %v352 = vld [vmem:[#allocation2 + $0xc8] sm:$0xff]
  %v353 = vld [vmem:[#allocation2 + $0xd0] sm:$0xff]
  %v354 = vld [vmem:[#allocation2 + $0xd8] sm:$0xff]
  %v355 = vld [vmem:[#allocation2 + $0xe0] sm:$0xff]
  %v356 = vld [vmem:[#allocation2 + $0xe8] sm:$0xff]
  %v357 = vld [vmem:[#allocation2 + $0xf0] sm:$0xff]
  %v358 = vld [vmem:[#allocation2 + $0xf8] sm:$0xff]
  %v359 = vld [vmem:[#allocation2 + $0x100] sm:$0xff]
  %v360 = vld [vmem:[#allocation2 + $0x108] sm:$0xff]
  %v361 = vld [vmem:[#allocation2 + $0x110] sm:$0xff]
  %v362 = vld [vmem:[#allocation2 + $0x118] sm:$0xff]
  %v363 = vld [vmem:[#allocation2 + $0x120] sm:$0xff]
  %v364 = vld [vmem:[#allocation2 + $0x128] sm:$0xff]
  %v365 = vld [vmem:[#allocation2 + $0x130] sm:$0xff]
  %v366 = vld [vmem:[#allocation2 + $0x138] sm:$0xff]
  %v367 = vld [vmem:[#allocation2 + $0x140] sm:$0xff]
  %v368 = vld [vmem:[#allocation2 + $0x148] sm:$0xff]
  %v369 = vld [vmem:[#allocation2 + $0x150] sm:$0xff]
  %v370 = vld [vmem:[#allocation2 + $0x158] sm:$0xff]
  %v371 = vld [vmem:[#allocation2 + $0x160] sm:$0xff]
  %v372 = vld [vmem:[%s3] sm:$0xff]
  %v373 = vld [vmem:[%s3 + $0x8] sm:$0xff]
  %v374 = vld [vmem:[%s3 + $0x10] sm:$0xff]
  %v375 = vld [vmem:[%s3 + $0x18] sm:$0xff]
  %377 = vset.pattern.permute.xlu0 0
  %378 = vperm.xlu0 %377, %v372
  %v379 = vpop.permute.xlu0 %378
  %382 = vset.pattern.permute.xlu0 0
  %383 = vperm.xlu0 %382, %v373
  %v384 = vpop.permute.xlu0 %383
  %387 = vset.pattern.permute.xlu0 0
  %388 = vperm.xlu0 %387, %v374
  %v389 = vpop.permute.xlu0 %388
  %392 = vset.pattern.permute.xlu0 0
  %393 = vperm.xlu0 %392, %v375
  %v394 = vpop.permute.xlu0 %393
  %vm396 = vcmask 588800
  %v398 = vsel %vm396, %v323, 0
  %v401 = vsel %vm396, %v324, 0
  %v404 = vsel %vm396, %v325, 0
  %v407 = vsel %vm396, %v326, 0
  %409 = vmatprep.subr.mxu0 0.0
  %410 = vmatpush1.msra.mxu0 0.0
  %411 = vmatprep.subr.mxu0 0.0
  %412 = vmatpush1.msra.mxu0 0.0
  %413 = vmatprep.subr.mxu0 0.0
  %414 = vmatpush1.msra.mxu0 0.0
  %415 = vmatprep.subr.mxu0 0.0
  %416 = vmatpush1.msra.mxu0 0.0
  %417 = vmatprep.subr.mxu0 0.0
  %418 = vmatpush1.msra.mxu0 0.0
  %419 = vmatprep.subr.mxu0 0.0
  %420 = vmatpush1.msra.mxu0 0.0
  %421 = vmatprep.subr.mxu0 0.0
  %422 = vmatpush1.msra.mxu0 0.0
  %423 = vmatprep.subr.mxu0 %v368
  %424 = vmatpush1.msra.mxu0 %v367
  %425 = vmatprep.subr.mxu0 %v363
  %426 = vmatpush1.msra.mxu0 %v362
  %427 = vmatprep.subr.mxu0 %v358
  %428 = vmatpush1.msra.mxu0 %v357
  %429 = vmatprep.subr.mxu0 %v353
  %430 = vmatpush1.msra.mxu0 %v352
  %431 = vmatprep.subr.mxu0 %v348
  %432 = vmatpush1.msra.mxu0 %v347
  %433 = vmatprep.subr.mxu0 %v343
  %434 = vmatpush1.msra.mxu0 %v342
  %435 = vmatprep.subr.mxu0 %v338
  %436 = vmatpush1.msra.mxu0 %v337
  %437 = vmatprep.subr.mxu0 %v333
  %438 = vmatpush1.msra.mxu0 %v332
  %439 = vmatprep.subr.mxu0 %v328
  %440 = vmatpush1.msra.mxu0 %v327
  %441 = vmatprep.subr.mxu0 0.0
  %442 = vmatpush2.msra.mxu0 0.0
  %443 = vmatprep.subr.mxu0 0.0
  %444 = vmatpush2.msra.mxu0 0.0
  %445 = vmatprep.subr.mxu0 0.0
  %446 = vmatpush2.msra.mxu0 0.0
  %447 = vmatprep.subr.mxu0 0.0
  %448 = vmatpush2.msra.mxu0 0.0
  %449 = vmatprep.subr.mxu0 0.0
  %450 = vmatpush2.msra.mxu0 0.0
  %451 = vmatprep.subr.mxu0 0.0
  %452 = vmatpush2.msra.mxu0 0.0
  %453 = vmatprep.subr.mxu0 0.0
  %454 = vmatpush2.msra.mxu0 0.0
  %455 = vmatprep.subr.mxu0 0.0
  %456 = vmatpush2.msra.mxu0 0.0
  %457 = vmatprep.subr.mxu0 0.0
  %458 = vmatpush2.msra.mxu0 0.0
  %459 = vmatprep.subr.mxu0 0.0
  %460 = vmatpush2.msra.mxu0 0.0
  %461 = vmatprep.subr.mxu0 0.0
  %462 = vmatpush2.msra.mxu0 0.0
  %463 = vmatprep.subr.mxu0 0.0
  %464 = vmatpush2.msra.mxu0 0.0
  %465 = vmatprep.subr.mxu0 0.0
  %466 = vmatpush2.msra.mxu0 0.0
  %467 = vmatprep.subr.mxu0 0.0
  %468 = vmatpush2.msra.mxu0 0.0
  %469 = vmatprep.subr.mxu0 0.0
  %470 = vmatpush2.msra.mxu0 0.0
  %471 = vmatprep.subr.mxu0 0.0
  %472 = vmatpush2.msra.mxu0 0.0
  %473 = vmatprep.mubr.f32.mxu0 0.0
  %474 = vmatmul.mubr.f32.gmra.mxu0 %v398
  %v475 = vpop.f32.mrf.mxu0
  %v476 = vadd.f32 %v379, %v475
  %v477 = vpop.f32.mrf.mxu0
  %v478 = vadd.f32 %v379, %v477
  %479 = vmatprep.mubr.f32.mxu0 0.0
  %480 = vmatmul.mubr.f32.gmra.mxu0 %v401
  %v481 = vpop.f32.mrf.mxu0
  %v482 = vadd.f32 %v384, %v481
  %v483 = vpop.f32.mrf.mxu0
  %v484 = vadd.f32 %v384, %v483
  %485 = vmatprep.mubr.f32.mxu0 0.0
  %486 = vmatmul.mubr.f32.gmra.mxu0 %v404
  %v487 = vpop.f32.mrf.mxu0
  %v488 = vadd.f32 %v389, %v487
  %v489 = vpop.f32.mrf.mxu0
  %v490 = vadd.f32 %v389, %v489
  %491 = vmatprep.mubr.f32.mxu0 0.0
  %492 = vmatmul.mubr.f32.gmra.mxu0 %v407
  %v493 = vpop.f32.mrf.mxu0
  %v494 = vadd.f32 %v394, %v493
  %v495 = vpop.f32.mrf.mxu0
  %v496 = vadd.f32 %v394, %v495
  %497 = vdwg.mxu0
  %498 = vmatprep.subr.mxu0 0.0
  %499 = vmatpush1.msra.mxu0 0.0
  %500 = vmatprep.subr.mxu0 0.0
  %501 = vmatpush1.msra.mxu0 0.0
  %502 = vmatprep.subr.mxu0 0.0
  %503 = vmatpush1.msra.mxu0 0.0
  %504 = vmatprep.subr.mxu0 0.0
  %505 = vmatpush1.msra.mxu0 0.0
  %506 = vmatprep.subr.mxu0 0.0
  %507 = vmatpush1.msra.mxu0 0.0
  %508 = vmatprep.subr.mxu0 0.0
  %509 = vmatpush1.msra.mxu0 0.0
  %510 = vmatprep.subr.mxu0 0.0
  %511 = vmatpush1.msra.mxu0 0.0
  %512 = vmatprep.subr.mxu0 %v370
  %513 = vmatpush1.msra.mxu0 %v369
  %514 = vmatprep.subr.mxu0 %v365
  %515 = vmatpush1.msra.mxu0 %v364
  %516 = vmatprep.subr.mxu0 %v360
  %517 = vmatpush1.msra.mxu0 %v359
  %518 = vmatprep.subr.mxu0 %v355
  %519 = vmatpush1.msra.mxu0 %v354
  %520 = vmatprep.subr.mxu0 %v350
  %521 = vmatpush1.msra.mxu0 %v349
  %522 = vmatprep.subr.mxu0 %v345
  %523 = vmatpush1.msra.mxu0 %v344
  %524 = vmatprep.subr.mxu0 %v340
  %525 = vmatpush1.msra.mxu0 %v339
  %526 = vmatprep.subr.mxu0 %v335
  %527 = vmatpush1.msra.mxu0 %v334
  %528 = vmatprep.subr.mxu0 %v330
  %529 = vmatpush1.msra.mxu0 %v329
  %530 = vmatprep.subr.mxu0 0.0
  %531 = vmatpush2.msra.mxu0 0.0
  %532 = vmatprep.subr.mxu0 0.0
  %533 = vmatpush2.msra.mxu0 0.0
  %534 = vmatprep.subr.mxu0 0.0
  %535 = vmatpush2.msra.mxu0 0.0
  %536 = vmatprep.subr.mxu0 0.0
  %537 = vmatpush2.msra.mxu0 0.0
  %538 = vmatprep.subr.mxu0 0.0
  %539 = vmatpush2.msra.mxu0 0.0
  %540 = vmatprep.subr.mxu0 0.0
  %541 = vmatpush2.msra.mxu0 0.0
  %542 = vmatprep.subr.mxu0 0.0
  %543 = vmatpush2.msra.mxu0 0.0
  %544 = vmatprep.subr.mxu0 0.0
  %545 = vmatpush2.msra.mxu0 0.0
  %546 = vmatprep.subr.mxu0 0.0
  %547 = vmatpush2.msra.mxu0 0.0
  %548 = vmatprep.subr.mxu0 0.0
  %549 = vmatpush2.msra.mxu0 0.0
  %550 = vmatprep.subr.mxu0 0.0
  %551 = vmatpush2.msra.mxu0 0.0
  %552 = vmatprep.subr.mxu0 0.0
  %553 = vmatpush2.msra.mxu0 0.0
  %554 = vmatprep.subr.mxu0 0.0
  %555 = vmatpush2.msra.mxu0 0.0
  %556 = vmatprep.subr.mxu0 0.0
  %557 = vmatpush2.msra.mxu0 0.0
  %558 = vmatprep.subr.mxu0 0.0
  %559 = vmatpush2.msra.mxu0 0.0
  %560 = vmatprep.subr.mxu0 0.0
  %561 = vmatpush2.msra.mxu0 0.0
  %562 = vmatprep.mubr.f32.mxu0 0.0
  %563 = vmatmul.mubr.f32.gmra.mxu0 %v398
  %v564 = vpop.f32.mrf.mxu0
  %v565 = vadd.f32 %v379, %v564
  %v566 = vpop.f32.mrf.mxu0
  %v567 = vadd.f32 %v379, %v566
  %568 = vmatprep.mubr.f32.mxu0 0.0
  %569 = vmatmul.mubr.f32.gmra.mxu0 %v401
  %v570 = vpop.f32.mrf.mxu0
  %v571 = vadd.f32 %v384, %v570
  %v572 = vpop.f32.mrf.mxu0
  %v573 = vadd.f32 %v384, %v572
  %574 = vmatprep.mubr.f32.mxu0 0.0
  %575 = vmatmul.mubr.f32.gmra.mxu0 %v404
  %v576 = vpop.f32.mrf.mxu0
  %v577 = vadd.f32 %v389, %v576
  %v578 = vpop.f32.mrf.mxu0
  %v579 = vadd.f32 %v389, %v578
  %580 = vmatprep.mubr.f32.mxu0 0.0
  %581 = vmatmul.mubr.f32.gmra.mxu0 %v407
  %v582 = vpop.f32.mrf.mxu0
  %v583 = vadd.f32 %v394, %v582
  %v584 = vpop.f32.mrf.mxu0
  %v585 = vadd.f32 %v394, %v584
  %586 = vdwg.mxu0
  %587 = vmatprep.subr.mxu0 0.0
  %588 = vmatpush1.msra.mxu0 0.0
  %589 = vmatprep.subr.mxu0 0.0
  %590 = vmatpush1.msra.mxu0 0.0
  %591 = vmatprep.subr.mxu0 0.0
  %592 = vmatpush1.msra.mxu0 0.0
  %593 = vmatprep.subr.mxu0 0.0
  %594 = vmatpush1.msra.mxu0 0.0
  %595 = vmatprep.subr.mxu0 0.0
  %596 = vmatpush1.msra.mxu0 0.0
  %597 = vmatprep.subr.mxu0 0.0
  %598 = vmatpush1.msra.mxu0 0.0
  %599 = vmatprep.subr.mxu0 0.0
  %600 = vmatpush1.msra.mxu0 0.0
  %601 = vmatprep.subr.mxu0 0.0
  %602 = vmatpush1.msra.mxu0 %v371
  %603 = vmatprep.subr.mxu0 0.0
  %604 = vmatpush1.msra.mxu0 %v366
  %605 = vmatprep.subr.mxu0 0.0
  %606 = vmatpush1.msra.mxu0 %v361
  %607 = vmatprep.subr.mxu0 0.0
  %608 = vmatpush1.msra.mxu0 %v356
  %609 = vmatprep.subr.mxu0 0.0
  %610 = vmatpush1.msra.mxu0 %v351
  %611 = vmatprep.subr.mxu0 0.0
  %612 = vmatpush1.msra.mxu0 %v346
  %613 = vmatprep.subr.mxu0 0.0
  %614 = vmatpush1.msra.mxu0 %v341
  %615 = vmatprep.subr.mxu0 0.0
  %616 = vmatpush1.msra.mxu0 %v336
  %617 = vmatprep.subr.mxu0 0.0
  %618 = vmatpush1.msra.mxu0 %v331
  %619 = vmatprep.subr.mxu0 0.0
  %620 = vmatpush2.msra.mxu0 0.0
  %621 = vmatprep.subr.mxu0 0.0
  %622 = vmatpush2.msra.mxu0 0.0
  %623 = vmatprep.subr.mxu0 0.0
  %624 = vmatpush2.msra.mxu0 0.0
  %625 = vmatprep.subr.mxu0 0.0
  %626 = vmatpush2.msra.mxu0 0.0
  %627 = vmatprep.subr.mxu0 0.0
  %628 = vmatpush2.msra.mxu0 0.0
  %629 = vmatprep.subr.mxu0 0.0
  %630 = vmatpush2.msra.mxu0 0.0
  %631 = vmatprep.subr.mxu0 0.0
  %632 = vmatpush2.msra.mxu0 0.0
  %633 = vmatprep.subr.mxu0 0.0
  %634 = vmatpush2.msra.mxu0 0.0
  %635 = vmatprep.subr.mxu0 0.0
  %636 = vmatpush2.msra.mxu0 0.0
  %637 = vmatprep.subr.mxu0 0.0
  %638 = vmatpush2.msra.mxu0 0.0
  %639 = vmatprep.subr.mxu0 0.0
  %640 = vmatpush2.msra.mxu0 0.0
  %641 = vmatprep.subr.mxu0 0.0
  %642 = vmatpush2.msra.mxu0 0.0
  %643 = vmatprep.subr.mxu0 0.0
  %644 = vmatpush2.msra.mxu0 0.0
  %645 = vmatprep.subr.mxu0 0.0
  %646 = vmatpush2.msra.mxu0 0.0
  %647 = vmatprep.subr.mxu0 0.0
  %648 = vmatpush2.msra.mxu0 0.0
  %649 = vmatprep.subr.mxu0 0.0
  %650 = vmatpush2.msra.mxu0 0.0
  %651 = vmatprep.mubr.f32.mxu0 0.0
  %652 = vmatmul.mubr.f32.gmra.mxu0 %v398
  %v653 = vpop.f32.mrf.mxu0
  %v654 = vadd.f32 %v379, %v653
  %v655 = vpop.f32.mrf.mxu0
  %656 = vmatprep.mubr.f32.mxu0 0.0
  %657 = vmatmul.mubr.f32.gmra.mxu0 %v401
  %v658 = vpop.f32.mrf.mxu0
  %v659 = vadd.f32 %v384, %v658
  %v660 = vpop.f32.mrf.mxu0
  %661 = vmatprep.mubr.f32.mxu0 0.0
  %662 = vmatmul.mubr.f32.gmra.mxu0 %v404
  %v663 = vpop.f32.mrf.mxu0
  %v664 = vadd.f32 %v389, %v663
  %v665 = vpop.f32.mrf.mxu0
  %666 = vmatprep.mubr.f32.mxu0 0.0
  %667 = vmatmul.mubr.f32.gmra.mxu0 %v407
  %v668 = vpop.f32.mrf.mxu0
  %v669 = vadd.f32 %v394, %v668
  %v670 = vpop.f32.mrf.mxu0
  %671 = vdwg.mxu0
  %v672 = vld [vmem:[%s2] sm:$0x1f]
  %v674 = vlaneseq
  %v675 = vshrl.u32 %v674, 7
  %v676 = vsub.s32 0, %v675
  %v677 = vrot.slane %v672, %v676
  %v678 = vlaneseq
  %v679 = vshrl.u32 %v678, 7
  %v680 = vsub.s32 1, %v679
  %v681 = vrot.slane %v672, %v680
  %v682 = vlaneseq
  %v683 = vshrl.u32 %v682, 7
  %v684 = vsub.s32 2, %v683
  %v685 = vrot.slane %v672, %v684
  %v686 = vlaneseq
  %v687 = vshrl.u32 %v686, 7
  %v688 = vsub.s32 3, %v687
  %v689 = vrot.slane %v672, %v688
  %v690 = vlaneseq
  %v691 = vshrl.u32 %v690, 7
  %v692 = vsub.s32 4, %v691
  %v693 = vrot.slane %v672, %v692
  %v699 = vmul.f32 %v476, %v677
  %v700 = vmul.f32 %v478, %v681
  %v701 = vmul.f32 %v565, %v685
  %v702 = vmul.f32 %v567, %v689
  %v703 = vmul.f32 %v654, %v693
  %v704 = vmul.f32 %v482, %v677
  %v705 = vmul.f32 %v484, %v681
  %v706 = vmul.f32 %v571, %v685
  %v707 = vmul.f32 %v573, %v689
  %v708 = vmul.f32 %v659, %v693
  %v709 = vmul.f32 %v488, %v677
  %v710 = vmul.f32 %v490, %v681
  %v711 = vmul.f32 %v577, %v685
  %v712 = vmul.f32 %v579, %v689
  %v713 = vmul.f32 %v664, %v693
  %v714 = vmul.f32 %v494, %v677
  %v715 = vmul.f32 %v496, %v681
  %v716 = vmul.f32 %v583, %v685
  %v717 = vmul.f32 %v585, %v689
  %v718 = vmul.f32 %v669, %v693
  %vm719 = vcmask 154624
  %720 = vst.msk [vmem:[%s4] sm:$0xff] %vm719, 0.0
  %721 = vst.msk [vmem:[%s4 + $0x30] sm:$0xff] %vm719, 0.0
  %722 = vst.msk [vmem:[%s4 + $0x60] sm:$0xff] %vm719, 0.0
  %723 = vst.msk [vmem:[%s4 + $0x90] sm:$0xff] %vm719, 0.0
  %744 = vrot.lane.b32.xlu0 %v699, 19
  %v745 = vpop.permute.xlu0 %744
  %746 = vrot.lane.b32.xlu0 %v700, 19
  %v747 = vpop.permute.xlu0 %746
  %748 = vrot.lane.b32.xlu0 %v701, 19
  %v749 = vpop.permute.xlu0 %748
  %750 = vrot.lane.b32.xlu0 %v702, 19
  %v751 = vpop.permute.xlu0 %750
  %752 = vrot.lane.b32.xlu0 %v703, 19
  %v753 = vpop.permute.xlu0 %752
  %754 = vrot.lane.b32.xlu0 %v704, 19
  %v755 = vpop.permute.xlu0 %754
  %756 = vrot.lane.b32.xlu0 %v705, 19
  %v757 = vpop.permute.xlu0 %756
  %758 = vrot.lane.b32.xlu0 %v706, 19
  %v759 = vpop.permute.xlu0 %758
  %760 = vrot.lane.b32.xlu0 %v707, 19
  %v761 = vpop.permute.xlu0 %760
  %762 = vrot.lane.b32.xlu0 %v708, 19
  %v763 = vpop.permute.xlu0 %762
  %764 = vrot.lane.b32.xlu0 %v709, 19
  %v765 = vpop.permute.xlu0 %764
  %766 = vrot.lane.b32.xlu0 %v710, 19
  %v767 = vpop.permute.xlu0 %766
  %768 = vrot.lane.b32.xlu0 %v711, 19
  %v769 = vpop.permute.xlu0 %768
  %770 = vrot.lane.b32.xlu0 %v712, 19
  %v771 = vpop.permute.xlu0 %770
  %772 = vrot.lane.b32.xlu0 %v713, 19
  %v773 = vpop.permute.xlu0 %772
  %774 = vrot.lane.b32.xlu0 %v714, 19
  %v775 = vpop.permute.xlu0 %774
  %776 = vrot.lane.b32.xlu0 %v715, 19
  %v777 = vpop.permute.xlu0 %776
  %778 = vrot.lane.b32.xlu0 %v716, 19
  %v779 = vpop.permute.xlu0 %778
  %780 = vrot.lane.b32.xlu0 %v717, 19
  %v781 = vpop.permute.xlu0 %780
  %782 = vrot.lane.b32.xlu0 %v718, 19
  %v783 = vpop.permute.xlu0 %782
  %v784 = vsel %vm719, %v745, %v747
  %v785 = vsel %vm719, %v747, %v749
  %v786 = vsel %vm719, %v749, %v751
  %v787 = vsel %vm719, %v751, %v753
  %v788 = vsel %vm719, %v755, %v757
  %v789 = vsel %vm719, %v757, %v759
  %v790 = vsel %vm719, %v759, %v761
  %v791 = vsel %vm719, %v761, %v763
  %v792 = vsel %vm719, %v765, %v767
  %v793 = vsel %vm719, %v767, %v769
  %v794 = vsel %vm719, %v769, %v771
  %v795 = vsel %vm719, %v771, %v773
  %v796 = vsel %vm719, %v775, %v777
  %v797 = vsel %vm719, %v777, %v779
  %v798 = vsel %vm719, %v779, %v781
  %v799 = vsel %vm719, %v781, %v783
  %vm820 = vcmask 1047704
  %821 = vst.msk [vmem:[%s4] sm:$0xff] %vm820, %v745
  %822 = vst [vmem:[%s4 + $0x8] sm:$0xff] %v784
  %823 = vst [vmem:[%s4 + $0x10] sm:$0xff] %v785
  %824 = vst [vmem:[%s4 + $0x18] sm:$0xff] %v786
  %vm825 = vcmask 957440
  %826 = vst.msk [vmem:[%s4 + $0x20] sm:$0xff] %vm825, %v787
  %827 = vst.msk [vmem:[%s4 + $0x30] sm:$0xff] %vm820, %v755
  %828 = vst [vmem:[%s4 + $0x38] sm:$0xff] %v788
  %829 = vst [vmem:[%s4 + $0x40] sm:$0xff] %v789
  %830 = vst [vmem:[%s4 + $0x48] sm:$0xff] %v790
  %831 = vst.msk [vmem:[%s4 + $0x50] sm:$0xff] %vm825, %v791
  %832 = vst.msk [vmem:[%s4 + $0x60] sm:$0xff] %vm820, %v765
  %833 = vst [vmem:[%s4 + $0x68] sm:$0xff] %v792
  %834 = vst [vmem:[%s4 + $0x70] sm:$0xff] %v793
  %835 = vst [vmem:[%s4 + $0x78] sm:$0xff] %v794
  %836 = vst.msk [vmem:[%s4 + $0x80] sm:$0xff] %vm825, %v795
  %837 = vst.msk [vmem:[%s4 + $0x90] sm:$0xff] %vm820, %v775
  %838 = vst [vmem:[%s4 + $0x98] sm:$0xff] %v796
  %839 = vst [vmem:[%s4 + $0xa0] sm:$0xff] %v797
  %840 = vst [vmem:[%s4 + $0xa8] sm:$0xff] %v798
  %841 = vst.msk [vmem:[%s4 + $0xb0] sm:$0xff] %vm825, %v799
  %vm842 = vcmask 1048488
  %843 = vst.msk [vmem:[%s4 + $0x20] sm:$0xff] %vm842, 0.0
  %vm844 = vcmask 64512
  %845 = vst.msk [vmem:[%s4 + $0x28] sm:$0xff] %vm844, 0.0
  %846 = vst.msk [vmem:[%s4 + $0x50] sm:$0xff] %vm842, 0.0
  %847 = vst.msk [vmem:[%s4 + $0x58] sm:$0xff] %vm844, 0.0
  %848 = vst.msk [vmem:[%s4 + $0x80] sm:$0xff] %vm842, 0.0
  %849 = vst.msk [vmem:[%s4 + $0x88] sm:$0xff] %vm844, 0.0
  %850 = vst.msk [vmem:[%s4 + $0xb0] sm:$0xff] %vm842, 0.0
  %851 = vst.msk [vmem:[%s4 + $0xb8] sm:$0xff] %vm844, 0.0
  // Predicated region
  $region18: #{edsr_forward.10} parent=0 // pred_check
    _
  $region19: #{edsr_forward.10} parent=0 // pred_check_branch
    %853 = sbr.rel (0) target = $region21
  $region20: #{edsr_forward.10} parent=0 // pred_region
    _
  $region21: #{edsr_forward.10} parent=0 // pred_fallthru
    _
  // Predicated region
  $region22: #{edsr_forward.10} parent=0 // pred_check
    _
  $region23: #{edsr_forward.10} parent=0 // pred_check_branch
    %855 = sbr.rel (0) target = $region25
  $region24: #{edsr_forward.10} parent=0 // pred_region
    _
  $region25: #{edsr_forward.10} parent=0 // pred_fallthru
    _

// kernel: edsr_forward.7
$region0: #{edsr_forward.7}
  #allocation0 [shape = 'u32[]', space=smem, size = 0x4, offset = 0x4, fixed_abs, tag = 'smem constant byte address 0x4 - core index']
  #allocation1 [shape = 'u32[144,128]{1,0:T(1,128)}', space=vmem, size = 0x12000, scoped, tag = 'internal scratch']
  #allocation2 [shape = 'f32[72,610]{1,0:T(8,128)}', space=vmem, size = 0x2d000, scoped, tag = 'scratch operand']
  #allocation3 [shape = 'f32[8,648]{1,0:T(8,128)}', space=vmem, size = 0x6000, scoped, tag = 'scratch operand']
  %s0 = inlined_call_operand.vmem [shape: f32[8,648], index: 0, kind: input, shape index: {}]
  %s1 = inlined_call_operand.vmem [shape: f32[8,72], index: 1, kind: input, shape index: {}]
  %s2 = inlined_call_operand.vmem [shape: f32[8,72], index: 2, kind: input, shape index: {}]
  %s3 = inlined_call_operand.vmem [shape: f32[1,610], index: 3, kind: input, shape index: {}]
  %s4 = inlined_call_operand.vmem [shape: f32[8,648], index: 4, kind: output, shape index: {}]
  %s5 = sld [smem:[#allocation0]]
  $region26: #{edsr_forward.7} parent=0
    _
  %s7 = ssub.s32 1, %s5
  %s8 = scalar_select 0, %s7, %s5
  // Predicated region
  $region2: #{edsr_forward.7} parent=0 // pred_check
    _
  $region3: #{edsr_forward.7} parent=0 // pred_check_branch
    %10 = sbr.rel (0) target = $region5
  $region4: #{edsr_forward.7} parent=0 // pred_region
    _
  $region5: #{edsr_forward.7} parent=0 // pred_fallthru
    _
  // Predicated region
  $region6: #{edsr_forward.7} parent=0 // pred_check
    _
  $region7: #{edsr_forward.7} parent=0 // pred_check_branch
    %12 = sbr.rel (0) target = $region9
  $region8: #{edsr_forward.7} parent=0 // pred_region
    _
  $region9: #{edsr_forward.7} parent=0 // pred_fallthru
    _
  // Predicated region
  $region10: #{edsr_forward.7} parent=0 // pred_check
    _
  $region11: #{edsr_forward.7} parent=0 // pred_check_branch
    %14 = sbr.rel (0) target = $region13
  $region12: #{edsr_forward.7} parent=0 // pred_region
    _
  $region13: #{edsr_forward.7} parent=0 // pred_fallthru
    _
  // Predicated region
  $region14: #{edsr_forward.7} parent=0 // pred_check
    _
  $region15: #{edsr_forward.7} parent=0 // pred_check_branch
    %16 = sbr.rel (0) target = $region17
  $region16: #{edsr_forward.7} parent=0 // pred_region
    _
  $region17: #{edsr_forward.7} parent=0 // pred_fallthru
    _
  %v17 = vld [vmem:[%s0] sm:$0xff]
  %v18 = vld [vmem:[%s0 + $0x8] sm:$0xff]
  %v19 = vld [vmem:[%s0 + $0x10] sm:$0xff]
  %v20 = vld [vmem:[%s0 + $0x18] sm:$0xff]
  %v21 = vld [vmem:[%s0 + $0x20] sm:$0xff]
  %22 = vst [vmem:[#allocation2] sm:$0xff] %v17
  %23 = vst [vmem:[#allocation2 + $0x8] sm:$0xff] %v18
  %24 = vst [vmem:[#allocation2 + $0x10] sm:$0xff] %v19
  %25 = vst [vmem:[#allocation2 + $0x18] sm:$0xff] %v20
  %vm26 = vcmask 801792
  %27 = vst.msk [vmem:[#allocation2 + $0x20] sm:$0xff] %vm26, %v21
  %v28 = vld [vmem:[%s0] sm:$0xff]
  %v29 = vld [vmem:[%s0 + $0x8] sm:$0xff]
  %v30 = vld [vmem:[%s0 + $0x10] sm:$0xff]
  %v31 = vld [vmem:[%s0 + $0x18] sm:$0xff]
  %v32 = vld [vmem:[%s0 + $0x20] sm:$0xff]
  %38 = vrot.lane.b32.xlu0 %v28, 127
  %v39 = vpop.permute.xlu0 %38
  %40 = vrot.lane.b32.xlu0 %v29, 127
  %v41 = vpop.permute.xlu0 %40
  %42 = vrot.lane.b32.xlu0 %v30, 127
  %v43 = vpop.permute.xlu0 %42
  %44 = vrot.lane.b32.xlu0 %v31, 127
  %v45 = vpop.permute.xlu0 %44
  %46 = vrot.lane.b32.xlu0 %v32, 127
  %v47 = vpop.permute.xlu0 %46
  %vm48 = vcmask 1039360
  %v49 = vsel %vm48, %v39, %v41
  %v50 = vsel %vm48, %v41, %v43
  %v51 = vsel %vm48, %v43, %v45
  %v52 = vsel %vm48, %v45, %v47
  %58 = vst [vmem:[#allocation2 + $0x28] sm:$0xff] %v49
  %59 = vst [vmem:[#allocation2 + $0x30] sm:$0xff] %v50
  %60 = vst [vmem:[#allocation2 + $0x38] sm:$0xff] %v51
  %61 = vst [vmem:[#allocation2 + $0x40] sm:$0xff] %v52
  %62 = vst.msk [vmem:[#allocation2 + $0x48] sm:$0xff] %vm26, %v47
  %v63 = vld [vmem:[%s0] sm:$0xff]
  %v64 = vld [vmem:[%s0 + $0x8] sm:$0xff]
  %v65 = vld [vmem:[%s0 + $0x10] sm:$0xff]
  %v66 = vld [vmem:[%s0 + $0x18] sm:$0xff]
  %v67 = vld [vmem:[%s0 + $0x20] sm:$0xff]
  %73 = vrot.lane.b32.xlu0 %v63, 126
  %v74 = vpop.permute.xlu0 %73
  %75 = vrot.lane.b32.xlu0 %v64, 126
  %v76 = vpop.permute.xlu0 %75
  %77 = vrot.lane.b32.xlu0 %v65, 126
  %v78 = vpop.permute.xlu0 %77
  %79 = vrot.lane.b32.xlu0 %v66, 126
  %v80 = vpop.permute.xlu0 %79
  %81 = vrot.lane.b32.xlu0 %v67, 126
  %v82 = vpop.permute.xlu0 %81
  %vm83 = vcmask 1031168
  %v84 = vsel %vm83, %v74, %v76
  %v85 = vsel %vm83, %v76, %v78
  %v86 = vsel %vm83, %v78, %v80
  %v87 = vsel %vm83, %v80, %v82
  %93 = vst [vmem:[#allocation2 + $0x50] sm:$0xff] %v84
  %94 = vst [vmem:[#allocation2 + $0x58] sm:$0xff] %v85
  %95 = vst [vmem:[#allocation2 + $0x60] sm:$0xff] %v86
  %96 = vst [vmem:[#allocation2 + $0x68] sm:$0xff] %v87
  %97 = vst.msk [vmem:[#allocation2 + $0x70] sm:$0xff] %vm26, %v82
  %v98 = vld [vmem:[%s0] sm:$0xff]
  %v99 = vld [vmem:[%s0 + $0x8] sm:$0xff]
  %v100 = vld [vmem:[%s0 + $0x10] sm:$0xff]
  %v101 = vld [vmem:[%s0 + $0x18] sm:$0xff]
  %v102 = vld [vmem:[%s0 + $0x20] sm:$0xff]
  %108 = vrot.lane.b32.xlu0 %v98, 110
  %v109 = vpop.permute.xlu0 %108
  %110 = vrot.lane.b32.xlu0 %v99, 110
  %v111 = vpop.permute.xlu0 %110
  %112 = vrot.lane.b32.xlu0 %v100, 110
  %v113 = vpop.permute.xlu0 %112
  %114 = vrot.lane.b32.xlu0 %v101, 110
  %v115 = vpop.permute.xlu0 %114
  %116 = vrot.lane.b32.xlu0 %v102, 110
  %v117 = vpop.permute.xlu0 %116
  %vm118 = vcmask 900096
  %v119 = vsel %vm118, %v109, %v111
  %v120 = vsel %vm118, %v111, %v113
  %v121 = vsel %vm118, %v113, %v115
  %v122 = vsel %vm118, %v115, %v117
  %128 = vst [vmem:[#allocation2 + $0x78] sm:$0xff] %v119
  %129 = vst [vmem:[#allocation2 + $0x80] sm:$0xff] %v120
  %130 = vst [vmem:[#allocation2 + $0x88] sm:$0xff] %v121
  %131 = vst [vmem:[#allocation2 + $0x90] sm:$0xff] %v122
  %132 = vst.msk [vmem:[#allocation2 + $0x98] sm:$0xff] %vm26, %v117
  %v133 = vld [vmem:[%s0] sm:$0xff]
  %v134 = vld [vmem:[%s0 + $0x8] sm:$0xff]
  %v135 = vld [vmem:[%s0 + $0x10] sm:$0xff]
  %v136 = vld [vmem:[%s0 + $0x18] sm:$0xff]
  %v137 = vld [vmem:[%s0 + $0x20] sm:$0xff]
  %143 = vrot.lane.b32.xlu0 %v133, 109
  %v144 = vpop.permute.xlu0 %143
  %145 = vrot.lane.b32.xlu0 %v134, 109
  %v146 = vpop.permute.xlu0 %145
  %147 = vrot.lane.b32.xlu0 %v135, 109
  %v148 = vpop.permute.xlu0 %147
  %149 = vrot.lane.b32.xlu0 %v136, 109
  %v150 = vpop.permute.xlu0 %149
  %151 = vrot.lane.b32.xlu0 %v137, 109
  %v152 = vpop.permute.xlu0 %151
  %vm153 = vcmask 891904
  %v154 = vsel %vm153, %v144, %v146
  %v155 = vsel %vm153, %v146, %v148
  %v156 = vsel %vm153, %v148, %v150
  %v157 = vsel %vm153, %v150, %v152
  %163 = vst [vmem:[#allocation2 + $0xa0] sm:$0xff] %v154
  %164 = vst [vmem:[#allocation2 + $0xa8] sm:$0xff] %v155
  %165 = vst [vmem:[#allocation2 + $0xb0] sm:$0xff] %v156
  %166 = vst [vmem:[#allocation2 + $0xb8] sm:$0xff] %v157
  %167 = vst.msk [vmem:[#allocation2 + $0xc0] sm:$0xff] %vm26, %v152
  %v168 = vld [vmem:[%s0] sm:$0xff]
  %v169 = vld [vmem:[%s0 + $0x8] sm:$0xff]
  %v170 = vld [vmem:[%s0 + $0x10] sm:$0xff]
  %v171 = vld [vmem:[%s0 + $0x18] sm:$0xff]
  %v172 = vld [vmem:[%s0 + $0x20] sm:$0xff]
  %178 = vrot.lane.b32.xlu0 %v168, 108
  %v179 = vpop.permute.xlu0 %178
  %180 = vrot.lane.b32.xlu0 %v169, 108
  %v181 = vpop.permute.xlu0 %180
  %182 = vrot.lane.b32.xlu0 %v170, 108
  %v183 = vpop.permute.xlu0 %182
  %184 = vrot.lane.b32.xlu0 %v171, 108
  %v185 = vpop.permute.xlu0 %184
  %186 = vrot.lane.b32.xlu0 %v172, 108
  %v187 = vpop.permute.xlu0 %186
  %vm188 = vcmask 883712
  %v189 = vsel %vm188, %v179, %v181
  %v190 = vsel %vm188, %v181, %v183
  %v191 = vsel %vm188, %v183, %v185
  %v192 = vsel %vm188, %v185, %v187
  %198 = vst [vmem:[#allocation2 + $0xc8] sm:$0xff] %v189
  %199 = vst [vmem:[#allocation2 + $0xd0] sm:$0xff] %v190
  %200 = vst [vmem:[#allocation2 + $0xd8] sm:$0xff] %v191
  %201 = vst [vmem:[#allocation2 + $0xe0] sm:$0xff] %v192
  %202 = vst.msk [vmem:[#allocation2 + $0xe8] sm:$0xff] %vm26, %v187
  %v203 = vld [vmem:[%s0] sm:$0xff]
  %v204 = vld [vmem:[%s0 + $0x8] sm:$0xff]
  %v205 = vld [vmem:[%s0 + $0x10] sm:$0xff]
  %v206 = vld [vmem:[%s0 + $0x18] sm:$0xff]
  %v207 = vld [vmem:[%s0 + $0x20] sm:$0xff]
  %v208 = vld [vmem:[%s0 + $0x28] sm:$0xff]
  %215 = vrot.lane.b32.xlu0 %v203, 92
  %v216 = vpop.permute.xlu0 %215
  %217 = vrot.lane.b32.xlu0 %v204, 92
  %v218 = vpop.permute.xlu0 %217
  %219 = vrot.lane.b32.xlu0 %v205, 92
  %v220 = vpop.permute.xlu0 %219
  %221 = vrot.lane.b32.xlu0 %v206, 92
  %v222 = vpop.permute.xlu0 %221
  %223 = vrot.lane.b32.xlu0 %v207, 92
  %v224 = vpop.permute.xlu0 %223
  %225 = vrot.lane.b32.xlu0 %v208, 92
  %v226 = vpop.permute.xlu0 %225
  %vm227 = vcmask 752640
  %v228 = vsel %vm227, %v216, %v218
  %v229 = vsel %vm227, %v218, %v220
  %v230 = vsel %vm227, %v220, %v222
  %v231 = vsel %vm227, %v222, %v224
  %v232 = vsel %vm227, %v224, %v226
  %238 = vst [vmem:[#allocation2 + $0xf0] sm:$0xff] %v228
  %239 = vst [vmem:[#allocation2 + $0xf8] sm:$0xff] %v229
  %240 = vst [vmem:[#allocation2 + $0x100] sm:$0xff] %v230
  %241 = vst [vmem:[#allocation2 + $0x108] sm:$0xff] %v231
  %242 = vst.msk [vmem:[#allocation2 + $0x110] sm:$0xff] %vm26, %v232
  %v243 = vld [vmem:[%s0] sm:$0xff]
  %v244 = vld [vmem:[%s0 + $0x8] sm:$0xff]
  %v245 = vld [vmem:[%s0 + $0x10] sm:$0xff]
  %v246 = vld [vmem:[%s0 + $0x18] sm:$0xff]
  %v247 = vld [vmem:[%s0 + $0x20] sm:$0xff]
  %v248 = vld [vmem:[%s0 + $0x28] sm:$0xff]
  %255 = vrot.lane.b32.xlu0 %v243, 91
  %v256 = vpop.permute.xlu0 %255
  %257 = vrot.lane.b32.xlu0 %v244, 91
  %v258 = vpop.permute.xlu0 %257
  %259 = vrot.lane.b32.xlu0 %v245, 91
  %v260 = vpop.permute.xlu0 %259
  %261 = vrot.lane.b32.xlu0 %v246, 91
  %v262 = vpop.permute.xlu0 %261
  %263 = vrot.lane.b32.xlu0 %v247, 91
  %v264 = vpop.permute.xlu0 %263
  %265 = vrot.lane.b32.xlu0 %v248, 91
  %v266 = vpop.permute.xlu0 %265
  %vm267 = vcmask 744448
  %v268 = vsel %vm267, %v256, %v258
  %v269 = vsel %vm267, %v258, %v260
  %v270 = vsel %vm267, %v260, %v262
  %v271 = vsel %vm267, %v262, %v264
  %v272 = vsel %vm267, %v264, %v266
  %278 = vst [vmem:[#allocation2 + $0x118] sm:$0xff] %v268
  %279 = vst [vmem:[#allocation2 + $0x120] sm:$0xff] %v269
  %280 = vst [vmem:[#allocation2 + $0x128] sm:$0xff] %v270
  %281 = vst [vmem:[#allocation2 + $0x130] sm:$0xff] %v271
  %282 = vst.msk [vmem:[#allocation2 + $0x138] sm:$0xff] %vm26, %v272
  %v283 = vld [vmem:[%s0] sm:$0xff]
  %v284 = vld [vmem:[%s0 + $0x8] sm:$0xff]
  %v285 = vld [vmem:[%s0 + $0x10] sm:$0xff]
  %v286 = vld [vmem:[%s0 + $0x18] sm:$0xff]
  %v287 = vld [vmem:[%s0 + $0x20] sm:$0xff]
  %v288 = vld [vmem:[%s0 + $0x28] sm:$0xff]
  %295 = vrot.lane.b32.xlu0 %v283, 90
  %v296 = vpop.permute.xlu0 %295
  %297 = vrot.lane.b32.xlu0 %v284, 90
  %v298 = vpop.permute.xlu0 %297
  %299 = vrot.lane.b32.xlu0 %v285, 90
  %v300 = vpop.permute.xlu0 %299
  %301 = vrot.lane.b32.xlu0 %v286, 90
  %v302 = vpop.permute.xlu0 %301
  %303 = vrot.lane.b32.xlu0 %v287, 90
  %v304 = vpop.permute.xlu0 %303
  %305 = vrot.lane.b32.xlu0 %v288, 90
  %v306 = vpop.permute.xlu0 %305
  %vm307 = vcmask 736256
  %v308 = vsel %vm307, %v296, %v298
  %v309 = vsel %vm307, %v298, %v300
  %v310 = vsel %vm307, %v300, %v302
  %v311 = vsel %vm307, %v302, %v304
  %v312 = vsel %vm307, %v304, %v306
  %318 = vst [vmem:[#allocation2 + $0x140] sm:$0xff] %v308
  %319 = vst [vmem:[#allocation2 + $0x148] sm:$0xff] %v309
  %320 = vst [vmem:[#allocation2 + $0x150] sm:$0xff] %v310
  %321 = vst [vmem:[#allocation2 + $0x158] sm:$0xff] %v311
  %322 = vst.msk [vmem:[#allocation2 + $0x160] sm:$0xff] %vm26, %v312
  %v323 = vld [vmem:[%s1] sm:$0xff]
  %v324 = vld [vmem:[#allocation2] sm:$0xff]
  %v325 = vld [vmem:[#allocation2 + $0x8] sm:$0xff]
  %v326 = vld [vmem:[#allocation2 + $0x10] sm:$0xff]
  %v327 = vld [vmem:[#allocation2 + $0x18] sm:$0xff]
  %v328 = vld [vmem:[#allocation2 + $0x20] sm:$0xff]
  %v329 = vld [vmem:[#allocation2 + $0x28] sm:$0xff]
  %v330 = vld [vmem:[#allocation2 + $0x30] sm:$0xff]
  %v331 = vld [vmem:[#allocation2 + $0x38] sm:$0xff]
  %v332 = vld [vmem:[#allocation2 + $0x40] sm:$0xff]
  %v333 = vld [vmem:[#allocation2 + $0x48] sm:$0xff]
  %v334 = vld [vmem:[#allocation2 + $0x50] sm:$0xff]
  %v335 = vld [vmem:[#allocation2 + $0x58] sm:$0xff]
  %v336 = vld [vmem:[#allocation2 + $0x60] sm:$0xff]
  %v337 = vld [vmem:[#allocation2 + $0x68] sm:$0xff]
  %v338 = vld [vmem:[#allocation2 + $0x70] sm:$0xff]
  %v339 = vld [vmem:[#allocation2 + $0x78] sm:$0xff]
  %v340 = vld [vmem:[#allocation2 + $0x80] sm:$0xff]
  %v341 = vld [vmem:[#allocation2 + $0x88] sm:$0xff]
  %v342 = vld [vmem:[#allocation2 + $0x90] sm:$0xff]
  %v343 = vld [vmem:[#allocation2 + $0x98] sm:$0xff]
  %v344 = vld [vmem:[#allocation2 + $0xa0] sm:$0xff]
  %v345 = vld [vmem:[#allocation2 + $0xa8] sm:$0xff]
  %v346 = vld [vmem:[#allocation2 + $0xb0] sm:$0xff]
  %v347 = vld [vmem:[#allocation2 + $0xb8] sm:$0xff]
  %v348 = vld [vmem:[#allocation2 + $0xc0] sm:$0xff]
  %v349 = vld [vmem:[#allocation2 + $0xc8] sm:$0xff]
  %v350 = vld [vmem:[#allocation2 + $0xd0] sm:$0xff]
  %v351 = vld [vmem:[#allocation2 + $0xd8] sm:$0xff]
  %v352 = vld [vmem:[#allocation2 + $0xe0] sm:$0xff]
  %v353 = vld [vmem:[#allocation2 + $0xe8] sm:$0xff]
  %v354 = vld [vmem:[#allocation2 + $0xf0] sm:$0xff]
  %v355 = vld [vmem:[#allocation2 + $0xf8] sm:$0xff]
  %v356 = vld [vmem:[#allocation2 + $0x100] sm:$0xff]
  %v357 = vld [vmem:[#allocation2 + $0x108] sm:$0xff]
  %v358 = vld [vmem:[#allocation2 + $0x110] sm:$0xff]
  %v359 = vld [vmem:[#allocation2 + $0x118] sm:$0xff]
  %v360 = vld [vmem:[#allocation2 + $0x120] sm:$0xff]
  %v361 = vld [vmem:[#allocation2 + $0x128] sm:$0xff]
  %v362 = vld [vmem:[#allocation2 + $0x130] sm:$0xff]
  %v363 = vld [vmem:[#allocation2 + $0x138] sm:$0xff]
  %v364 = vld [vmem:[#allocation2 + $0x140] sm:$0xff]
  %v365 = vld [vmem:[#allocation2 + $0x148] sm:$0xff]
  %v366 = vld [vmem:[#allocation2 + $0x150] sm:$0xff]
  %v367 = vld [vmem:[#allocation2 + $0x158] sm:$0xff]
  %v368 = vld [vmem:[#allocation2 + $0x160] sm:$0xff]
  %vm369 = vcmask 588800
  %v371 = vsel %vm369, %v323, 0
  %373 = vmatprep.subr.mxu0 0.0
  %374 = vmatpush1.msra.mxu0 0.0
  %375 = vmatprep.subr.mxu0 0.0
  %376 = vmatpush1.msra.mxu0 0.0
  %377 = vmatprep.subr.mxu0 0.0
  %378 = vmatpush1.msra.mxu0 0.0
  %379 = vmatprep.subr.mxu0 0.0
  %380 = vmatpush1.msra.mxu0 0.0
  %381 = vmatprep.subr.mxu0 0.0
  %382 = vmatpush1.msra.mxu0 0.0
  %383 = vmatprep.subr.mxu0 0.0
  %384 = vmatpush1.msra.mxu0 0.0
  %385 = vmatprep.subr.mxu0 0.0
  %386 = vmatpush1.msra.mxu0 0.0
  %387 = vmatprep.subr.mxu0 %v365
  %388 = vmatpush1.msra.mxu0 %v364
  %389 = vmatprep.subr.mxu0 %v360
  %390 = vmatpush1.msra.mxu0 %v359
  %391 = vmatprep.subr.mxu0 %v355
  %392 = vmatpush1.msra.mxu0 %v354
  %393 = vmatprep.subr.mxu0 %v350
  %394 = vmatpush1.msra.mxu0 %v349
  %395 = vmatprep.subr.mxu0 %v345
  %396 = vmatpush1.msra.mxu0 %v344
  %397 = vmatprep.subr.mxu0 %v340
  %398 = vmatpush1.msra.mxu0 %v339
  %399 = vmatprep.subr.mxu0 %v335
  %400 = vmatpush1.msra.mxu0 %v334
  %401 = vmatprep.subr.mxu0 %v330
  %402 = vmatpush1.msra.mxu0 %v329
  %403 = vmatprep.subr.mxu0 %v325
  %404 = vmatpush1.msra.mxu0 %v324
  %405 = vmatprep.subr.mxu0 0.0
  %406 = vmatpush2.msra.mxu0 0.0
  %407 = vmatprep.subr.mxu0 0.0
  %408 = vmatpush2.msra.mxu0 0.0
  %409 = vmatprep.subr.mxu0 0.0
  %410 = vmatpush2.msra.mxu0 0.0
  %411 = vmatprep.subr.mxu0 0.0
  %412 = vmatpush2.msra.mxu0 0.0
  %413 = vmatprep.subr.mxu0 0.0
  %414 = vmatpush2.msra.mxu0 0.0
  %415 = vmatprep.subr.mxu0 0.0
  %416 = vmatpush2.msra.mxu0 0.0
  %417 = vmatprep.subr.mxu0 0.0
  %418 = vmatpush2.msra.mxu0 0.0
  %419 = vmatprep.subr.mxu0 0.0
  %420 = vmatpush2.msra.mxu0 0.0
  %421 = vmatprep.subr.mxu0 0.0
  %422 = vmatpush2.msra.mxu0 0.0
  %423 = vmatprep.subr.mxu0 0.0
  %424 = vmatpush2.msra.mxu0 0.0
  %425 = vmatprep.subr.mxu0 0.0
  %426 = vmatpush2.msra.mxu0 0.0
  %427 = vmatprep.subr.mxu0 0.0
  %428 = vmatpush2.msra.mxu0 0.0
  %429 = vmatprep.subr.mxu0 0.0
  %430 = vmatpush2.msra.mxu0 0.0
  %431 = vmatprep.subr.mxu0 0.0
  %432 = vmatpush2.msra.mxu0 0.0
  %433 = vmatprep.subr.mxu0 0.0
  %434 = vmatpush2.msra.mxu0 0.0
  %435 = vmatprep.subr.mxu0 0.0
  %436 = vmatpush2.msra.mxu0 0.0
  %437 = vmatprep.mubr.f32.mxu0 0.0
  %438 = vmatmul.mubr.f32.gmra.mxu0 %v371
  %v439 = vpop.f32.mrf.mxu0
  %v440 = vadd.f32 0.0, %v439
  %v441 = vpop.f32.mrf.mxu0
  %v442 = vadd.f32 0.0, %v441
  %443 = vdwg.mxu0
  %444 = vmatprep.subr.mxu0 0.0
  %445 = vmatpush1.msra.mxu0 0.0
  %446 = vmatprep.subr.mxu0 0.0
  %447 = vmatpush1.msra.mxu0 0.0
  %448 = vmatprep.subr.mxu0 0.0
  %449 = vmatpush1.msra.mxu0 0.0
  %450 = vmatprep.subr.mxu0 0.0
  %451 = vmatpush1.msra.mxu0 0.0
  %452 = vmatprep.subr.mxu0 0.0
  %453 = vmatpush1.msra.mxu0 0.0
  %454 = vmatprep.subr.mxu0 0.0
  %455 = vmatpush1.msra.mxu0 0.0
  %456 = vmatprep.subr.mxu0 0.0
  %457 = vmatpush1.msra.mxu0 0.0
  %458 = vmatprep.subr.mxu0 %v367
  %459 = vmatpush1.msra.mxu0 %v366
  %460 = vmatprep.subr.mxu0 %v362
  %461 = vmatpush1.msra.mxu0 %v361
  %462 = vmatprep.subr.mxu0 %v357
  %463 = vmatpush1.msra.mxu0 %v356
  %464 = vmatprep.subr.mxu0 %v352
  %465 = vmatpush1.msra.mxu0 %v351
  %466 = vmatprep.subr.mxu0 %v347
  %467 = vmatpush1.msra.mxu0 %v346
  %468 = vmatprep.subr.mxu0 %v342
  %469 = vmatpush1.msra.mxu0 %v341
  %470 = vmatprep.subr.mxu0 %v337
  %471 = vmatpush1.msra.mxu0 %v336
  %472 = vmatprep.subr.mxu0 %v332
  %473 = vmatpush1.msra.mxu0 %v331
  %474 = vmatprep.subr.mxu0 %v327
  %475 = vmatpush1.msra.mxu0 %v326
  %476 = vmatprep.subr.mxu0 0.0
  %477 = vmatpush2.msra.mxu0 0.0
  %478 = vmatprep.subr.mxu0 0.0
  %479 = vmatpush2.msra.mxu0 0.0
  %480 = vmatprep.subr.mxu0 0.0
  %481 = vmatpush2.msra.mxu0 0.0
  %482 = vmatprep.subr.mxu0 0.0
  %483 = vmatpush2.msra.mxu0 0.0
  %484 = vmatprep.subr.mxu0 0.0
  %485 = vmatpush2.msra.mxu0 0.0
  %486 = vmatprep.subr.mxu0 0.0
  %487 = vmatpush2.msra.mxu0 0.0
  %488 = vmatprep.subr.mxu0 0.0
  %489 = vmatpush2.msra.mxu0 0.0
  %490 = vmatprep.subr.mxu0 0.0
  %491 = vmatpush2.msra.mxu0 0.0
  %492 = vmatprep.subr.mxu0 0.0
  %493 = vmatpush2.msra.mxu0 0.0
  %494 = vmatprep.subr.mxu0 0.0
  %495 = vmatpush2.msra.mxu0 0.0
  %496 = vmatprep.subr.mxu0 0.0
  %497 = vmatpush2.msra.mxu0 0.0
  %498 = vmatprep.subr.mxu0 0.0
  %499 = vmatpush2.msra.mxu0 0.0
  %500 = vmatprep.subr.mxu0 0.0
  %501 = vmatpush2.msra.mxu0 0.0
  %502 = vmatprep.subr.mxu0 0.0
  %503 = vmatpush2.msra.mxu0 0.0
  %504 = vmatprep.subr.mxu0 0.0
  %505 = vmatpush2.msra.mxu0 0.0
  %506 = vmatprep.subr.mxu0 0.0
  %507 = vmatpush2.msra.mxu0 0.0
  %508 = vmatprep.mubr.f32.mxu0 0.0
  %509 = vmatmul.mubr.f32.gmra.mxu0 %v371
  %v510 = vpop.f32.mrf.mxu0
  %v511 = vadd.f32 0.0, %v510
  %v512 = vpop.f32.mrf.mxu0
  %v513 = vadd.f32 0.0, %v512
  %514 = vdwg.mxu0
  %515 = vmatprep.subr.mxu0 0.0
  %516 = vmatpush1.msra.mxu0 0.0
  %517 = vmatprep.subr.mxu0 0.0
  %518 = vmatpush1.msra.mxu0 0.0
  %519 = vmatprep.subr.mxu0 0.0
  %520 = vmatpush1.msra.mxu0 0.0
  %521 = vmatprep.subr.mxu0 0.0
  %522 = vmatpush1.msra.mxu0 0.0
  %523 = vmatprep.subr.mxu0 0.0
  %524 = vmatpush1.msra.mxu0 0.0
  %525 = vmatprep.subr.mxu0 0.0
  %526 = vmatpush1.msra.mxu0 0.0
  %527 = vmatprep.subr.mxu0 0.0
  %528 = vmatpush1.msra.mxu0 0.0
  %529 = vmatprep.subr.mxu0 0.0
  %530 = vmatpush1.msra.mxu0 %v368
  %531 = vmatprep.subr.mxu0 0.0
  %532 = vmatpush1.msra.mxu0 %v363
  %533 = vmatprep.subr.mxu0 0.0
  %534 = vmatpush1.msra.mxu0 %v358
  %535 = vmatprep.subr.mxu0 0.0
  %536 = vmatpush1.msra.mxu0 %v353
  %537 = vmatprep.subr.mxu0 0.0
  %538 = vmatpush1.msra.mxu0 %v348
  %539 = vmatprep.subr.mxu0 0.0
  %540 = vmatpush1.msra.mxu0 %v343
  %541 = vmatprep.subr.mxu0 0.0
  %542 = vmatpush1.msra.mxu0 %v338
  %543 = vmatprep.subr.mxu0 0.0
  %544 = vmatpush1.msra.mxu0 %v333
  %545 = vmatprep.subr.mxu0 0.0
  %546 = vmatpush1.msra.mxu0 %v328
  %547 = vmatprep.subr.mxu0 0.0
  %548 = vmatpush2.msra.mxu0 0.0
  %549 = vmatprep.subr.mxu0 0.0
  %550 = vmatpush2.msra.mxu0 0.0
  %551 = vmatprep.subr.mxu0 0.0
  %552 = vmatpush2.msra.mxu0 0.0
  %553 = vmatprep.subr.mxu0 0.0
  %554 = vmatpush2.msra.mxu0 0.0
  %555 = vmatprep.subr.mxu0 0.0
  %556 = vmatpush2.msra.mxu0 0.0
  %557 = vmatprep.subr.mxu0 0.0
  %558 = vmatpush2.msra.mxu0 0.0
  %559 = vmatprep.subr.mxu0 0.0
  %560 = vmatpush2.msra.mxu0 0.0
  %561 = vmatprep.subr.mxu0 0.0
  %562 = vmatpush2.msra.mxu0 0.0
  %563 = vmatprep.subr.mxu0 0.0
  %564 = vmatpush2.msra.mxu0 0.0
  %565 = vmatprep.subr.mxu0 0.0
  %566 = vmatpush2.msra.mxu0 0.0
  %567 = vmatprep.subr.mxu0 0.0
  %568 = vmatpush2.msra.mxu0 0.0
  %569 = vmatprep.subr.mxu0 0.0
  %570 = vmatpush2.msra.mxu0 0.0
  %571 = vmatprep.subr.mxu0 0.0
  %572 = vmatpush2.msra.mxu0 0.0
  %573 = vmatprep.subr.mxu0 0.0
  %574 = vmatpush2.msra.mxu0 0.0
  %575 = vmatprep.subr.mxu0 0.0
  %576 = vmatpush2.msra.mxu0 0.0
  %577 = vmatprep.subr.mxu0 0.0
  %578 = vmatpush2.msra.mxu0 0.0
  %579 = vmatprep.mubr.f32.mxu0 0.0
  %580 = vmatmul.mubr.f32.gmra.mxu0 %v371
  %v581 = vpop.f32.mrf.mxu0
  %v582 = vadd.f32 0.0, %v581
  %v583 = vpop.f32.mrf.mxu0
  %584 = vdwg.mxu0
  %v585 = vmax.f32 %v440, 0.0
  %v586 = vmax.f32 %v442, 0.0
  %v587 = vmax.f32 %v511, 0.0
  %v588 = vmax.f32 %v513, 0.0
  %v589 = vmax.f32 %v582, 0.0
  %v590 = vld [vmem:[%s3] sm:$0x1f]
  %v592 = vlaneseq
  %v593 = vshrl.u32 %v592, 7
  %v594 = vsub.s32 0, %v593
  %v595 = vrot.slane %v590, %v594
  %v596 = vlaneseq
  %v597 = vshrl.u32 %v596, 7
  %v598 = vsub.s32 1, %v597
  %v599 = vrot.slane %v590, %v598
  %v600 = vlaneseq
  %v601 = vshrl.u32 %v600, 7
  %v602 = vsub.s32 2, %v601
  %v603 = vrot.slane %v590, %v602
  %v604 = vlaneseq
  %v605 = vshrl.u32 %v604, 7
  %v606 = vsub.s32 3, %v605
  %v607 = vrot.slane %v590, %v606
  %v608 = vlaneseq
  %v609 = vshrl.u32 %v608, 7
  %v610 = vsub.s32 4, %v609
  %v611 = vrot.slane %v590, %v610
  %v617 = vmul.f32 %v585, %v595
  %v618 = vmul.f32 %v586, %v599
  %v619 = vmul.f32 %v587, %v603
  %v620 = vmul.f32 %v588, %v607
  %v621 = vmul.f32 %v589, %v611
  %vm622 = vcmask 154624
  %623 = vst.msk [vmem:[#allocation3] sm:$0xff] %vm622, 0.0
  %629 = vrot.lane.b32.xlu0 %v617, 19
  %v630 = vpop.permute.xlu0 %629
  %631 = vrot.lane.b32.xlu0 %v618, 19
  %v632 = vpop.permute.xlu0 %631
  %633 = vrot.lane.b32.xlu0 %v619, 19
  %v634 = vpop.permute.xlu0 %633
  %635 = vrot.lane.b32.xlu0 %v620, 19
  %v636 = vpop.permute.xlu0 %635
  %637 = vrot.lane.b32.xlu0 %v621, 19
  %v638 = vpop.permute.xlu0 %637
  %v639 = vsel %vm622, %v630, %v632
  %v640 = vsel %vm622, %v632, %v634
  %v641 = vsel %vm622, %v634, %v636
  %v642 = vsel %vm622, %v636, %v638
  %vm648 = vcmask 1047704
  %649 = vst.msk [vmem:[#allocation3] sm:$0xff] %vm648, %v630
  %650 = vst [vmem:[#allocation3 + $0x8] sm:$0xff] %v639
  %651 = vst [vmem:[#allocation3 + $0x10] sm:$0xff] %v640
  %652 = vst [vmem:[#allocation3 + $0x18] sm:$0xff] %v641
  %vm653 = vcmask 957440
  %654 = vst.msk [vmem:[#allocation3 + $0x20] sm:$0xff] %vm653, %v642
  %vm655 = vcmask 1048488
  %656 = vst.msk [vmem:[#allocation3 + $0x20] sm:$0xff] %vm655, 0.0
  %vm657 = vcmask 64512
  %658 = vst.msk [vmem:[#allocation3 + $0x28] sm:$0xff] %vm657, 0.0
  %v659 = vld [vmem:[#allocation3] sm:$0xff]
  %v660 = vld [vmem:[#allocation3 + $0x8] sm:$0xff]
  %v661 = vld [vmem:[#allocation3 + $0x10] sm:$0xff]
  %v662 = vld [vmem:[#allocation3 + $0x18] sm:$0xff]
  %v663 = vld [vmem:[#allocation3 + $0x20] sm:$0xff]
  %664 = vst [vmem:[#allocation2] sm:$0xff] %v659
  %665 = vst [vmem:[#allocation2 + $0x8] sm:$0xff] %v660
  %666 = vst [vmem:[#allocation2 + $0x10] sm:$0xff] %v661
  %667 = vst [vmem:[#allocation2 + $0x18] sm:$0xff] %v662
  %668 = vst.msk [vmem:[#allocation2 + $0x20] sm:$0xff] %vm26, %v663
  %v669 = vld [vmem:[#allocation3] sm:$0xff]
  %v670 = vld [vmem:[#allocation3 + $0x8] sm:$0xff]
  %v671 = vld [vmem:[#allocation3 + $0x10] sm:$0xff]
  %v672 = vld [vmem:[#allocation3 + $0x18] sm:$0xff]
  %v673 = vld [vmem:[#allocation3 + $0x20] sm:$0xff]
  %679 = vrot.lane.b32.xlu0 %v669, 127
  %v680 = vpop.permute.xlu0 %679
  %681 = vrot.lane.b32.xlu0 %v670, 127
  %v682 = vpop.permute.xlu0 %681
  %683 = vrot.lane.b32.xlu0 %v671, 127
  %v684 = vpop.permute.xlu0 %683
  %685 = vrot.lane.b32.xlu0 %v672, 127
  %v686 = vpop.permute.xlu0 %685
  %687 = vrot.lane.b32.xlu0 %v673, 127
  %v688 = vpop.permute.xlu0 %687
  %v689 = vsel %vm48, %v680, %v682
  %v690 = vsel %vm48, %v682, %v684
  %v691 = vsel %vm48, %v684, %v686
  %v692 = vsel %vm48, %v686, %v688
  %698 = vst [vmem:[#allocation2 + $0x28] sm:$0xff] %v689
  %699 = vst [vmem:[#allocation2 + $0x30] sm:$0xff] %v690
  %700 = vst [vmem:[#allocation2 + $0x38] sm:$0xff] %v691
  %701 = vst [vmem:[#allocation2 + $0x40] sm:$0xff] %v692
  %702 = vst.msk [vmem:[#allocation2 + $0x48] sm:$0xff] %vm26, %v688
  %v703 = vld [vmem:[#allocation3] sm:$0xff]
  %v704 = vld [vmem:[#allocation3 + $0x8] sm:$0xff]
  %v705 = vld [vmem:[#allocation3 + $0x10] sm:$0xff]
  %v706 = vld [vmem:[#allocation3 + $0x18] sm:$0xff]
  %v707 = vld [vmem:[#allocation3 + $0x20] sm:$0xff]
  %713 = vrot.lane.b32.xlu0 %v703, 126
  %v714 = vpop.permute.xlu0 %713
  %715 = vrot.lane.b32.xlu0 %v704, 126
  %v716 = vpop.permute.xlu0 %715
  %717 = vrot.lane.b32.xlu0 %v705, 126
  %v718 = vpop.permute.xlu0 %717
  %719 = vrot.lane.b32.xlu0 %v706, 126
  %v720 = vpop.permute.xlu0 %719
  %721 = vrot.lane.b32.xlu0 %v707, 126
  %v722 = vpop.permute.xlu0 %721
  %v723 = vsel %vm83, %v714, %v716
  %v724 = vsel %vm83, %v716, %v718
  %v725 = vsel %vm83, %v718, %v720
  %v726 = vsel %vm83, %v720, %v722
  %732 = vst [vmem:[#allocation2 + $0x50] sm:$0xff] %v723
  %733 = vst [vmem:[#allocation2 + $0x58] sm:$0xff] %v724
  %734 = vst [vmem:[#allocation2 + $0x60] sm:$0xff] %v725
  %735 = vst [vmem:[#allocation2 + $0x68] sm:$0xff] %v726
  %736 = vst.msk [vmem:[#allocation2 + $0x70] sm:$0xff] %vm26, %v722
  %v737 = vld [vmem:[#allocation3] sm:$0xff]
  %v738 = vld [vmem:[#allocation3 + $0x8] sm:$0xff]
  %v739 = vld [vmem:[#allocation3 + $0x10] sm:$0xff]
  %v740 = vld [vmem:[#allocation3 + $0x18] sm:$0xff]
  %v741 = vld [vmem:[#allocation3 + $0x20] sm:$0xff]
  %747 = vrot.lane.b32.xlu0 %v737, 110
  %v748 = vpop.permute.xlu0 %747
  %749 = vrot.lane.b32.xlu0 %v738, 110
  %v750 = vpop.permute.xlu0 %749
  %751 = vrot.lane.b32.xlu0 %v739, 110
  %v752 = vpop.permute.xlu0 %751
  %753 = vrot.lane.b32.xlu0 %v740, 110
  %v754 = vpop.permute.xlu0 %753
  %755 = vrot.lane.b32.xlu0 %v741, 110
  %v756 = vpop.permute.xlu0 %755
  %v757 = vsel %vm118, %v748, %v750
  %v758 = vsel %vm118, %v750, %v752
  %v759 = vsel %vm118, %v752, %v754
  %v760 = vsel %vm118, %v754, %v756
  %766 = vst [vmem:[#allocation2 + $0x78] sm:$0xff] %v757
  %767 = vst [vmem:[#allocation2 + $0x80] sm:$0xff] %v758
  %768 = vst [vmem:[#allocation2 + $0x88] sm:$0xff] %v759
  %769 = vst [vmem:[#allocation2 + $0x90] sm:$0xff] %v760
  %770 = vst.msk [vmem:[#allocation2 + $0x98] sm:$0xff] %vm26, %v756
  %v771 = vld [vmem:[#allocation3] sm:$0xff]
  %v772 = vld [vmem:[#allocation3 + $0x8] sm:$0xff]
  %v773 = vld [vmem:[#allocation3 + $0x10] sm:$0xff]
  %v774 = vld [vmem:[#allocation3 + $0x18] sm:$0xff]
  %v775 = vld [vmem:[#allocation3 + $0x20] sm:$0xff]
  %781 = vrot.lane.b32.xlu0 %v771, 109
  %v782 = vpop.permute.xlu0 %781
  %783 = vrot.lane.b32.xlu0 %v772, 109
  %v784 = vpop.permute.xlu0 %783
  %785 = vrot.lane.b32.xlu0 %v773, 109
  %v786 = vpop.permute.xlu0 %785
  %787 = vrot.lane.b32.xlu0 %v774, 109
  %v788 = vpop.permute.xlu0 %787
  %789 = vrot.lane.b32.xlu0 %v775, 109
  %v790 = vpop.permute.xlu0 %789
  %v791 = vsel %vm153, %v782, %v784
  %v792 = vsel %vm153, %v784, %v786
  %v793 = vsel %vm153, %v786, %v788
  %v794 = vsel %vm153, %v788, %v790
  %800 = vst [vmem:[#allocation2 + $0xa0] sm:$0xff] %v791
  %801 = vst [vmem:[#allocation2 + $0xa8] sm:$0xff] %v792
  %802 = vst [vmem:[#allocation2 + $0xb0] sm:$0xff] %v793
  %803 = vst [vmem:[#allocation2 + $0xb8] sm:$0xff] %v794
  %804 = vst.msk [vmem:[#allocation2 + $0xc0] sm:$0xff] %vm26, %v790
  %v805 = vld [vmem:[#allocation3] sm:$0xff]
  %v806 = vld [vmem:[#allocation3 + $0x8] sm:$0xff]
  %v807 = vld [vmem:[#allocation3 + $0x10] sm:$0xff]
  %v808 = vld [vmem:[#allocation3 + $0x18] sm:$0xff]
  %v809 = vld [vmem:[#allocation3 + $0x20] sm:$0xff]
  %815 = vrot.lane.b32.xlu0 %v805, 108
  %v816 = vpop.permute.xlu0 %815
  %817 = vrot.lane.b32.xlu0 %v806, 108
  %v818 = vpop.permute.xlu0 %817
  %819 = vrot.lane.b32.xlu0 %v807, 108
  %v820 = vpop.permute.xlu0 %819
  %821 = vrot.lane.b32.xlu0 %v808, 108
  %v822 = vpop.permute.xlu0 %821
  %823 = vrot.lane.b32.xlu0 %v809, 108
  %v824 = vpop.permute.xlu0 %823
  %v825 = vsel %vm188, %v816, %v818
  %v826 = vsel %vm188, %v818, %v820
  %v827 = vsel %vm188, %v820, %v822
  %v828 = vsel %vm188, %v822, %v824
  %834 = vst [vmem:[#allocation2 + $0xc8] sm:$0xff] %v825
  %835 = vst [vmem:[#allocation2 + $0xd0] sm:$0xff] %v826
  %836 = vst [vmem:[#allocation2 + $0xd8] sm:$0xff] %v827
  %837 = vst [vmem:[#allocation2 + $0xe0] sm:$0xff] %v828
  %838 = vst.msk [vmem:[#allocation2 + $0xe8] sm:$0xff] %vm26, %v824
  %v839 = vld [vmem:[#allocation3] sm:$0xff]
  %v840 = vld [vmem:[#allocation3 + $0x8] sm:$0xff]
  %v841 = vld [vmem:[#allocation3 + $0x10] sm:$0xff]
  %v842 = vld [vmem:[#allocation3 + $0x18] sm:$0xff]
  %v843 = vld [vmem:[#allocation3 + $0x20] sm:$0xff]
  %v844 = vld [vmem:[#allocation3 + $0x28] sm:$0xff]
  %851 = vrot.lane.b32.xlu0 %v839, 92
  %v852 = vpop.permute.xlu0 %851
  %853 = vrot.lane.b32.xlu0 %v840, 92
  %v854 = vpop.permute.xlu0 %853
  %855 = vrot.lane.b32.xlu0 %v841, 92
  %v856 = vpop.permute.xlu0 %855
  %857 = vrot.lane.b32.xlu0 %v842, 92
  %v858 = vpop.permute.xlu0 %857
  %859 = vrot.lane.b32.xlu0 %v843, 92
  %v860 = vpop.permute.xlu0 %859
  %861 = vrot.lane.b32.xlu0 %v844, 92
  %v862 = vpop.permute.xlu0 %861
  %v863 = vsel %vm227, %v852, %v854
  %v864 = vsel %vm227, %v854, %v856
  %v865 = vsel %vm227, %v856, %v858
  %v866 = vsel %vm227, %v858, %v860
  %v867 = vsel %vm227, %v860, %v862
  %873 = vst [vmem:[#allocation2 + $0xf0] sm:$0xff] %v863
  %874 = vst [vmem:[#allocation2 + $0xf8] sm:$0xff] %v864
  %875 = vst [vmem:[#allocation2 + $0x100] sm:$0xff] %v865
  %876 = vst [vmem:[#allocation2 + $0x108] sm:$0xff] %v866
  %877 = vst.msk [vmem:[#allocation2 + $0x110] sm:$0xff] %vm26, %v867
  %v878 = vld [vmem:[#allocation3] sm:$0xff]
  %v879 = vld [vmem:[#allocation3 + $0x8] sm:$0xff]
  %v880 = vld [vmem:[#allocation3 + $0x10] sm:$0xff]
  %v881 = vld [vmem:[#allocation3 + $0x18] sm:$0xff]
  %v882 = vld [vmem:[#allocation3 + $0x20] sm:$0xff]
  %v883 = vld [vmem:[#allocation3 + $0x28] sm:$0xff]
  %890 = vrot.lane.b32.xlu0 %v878, 91
  %v891 = vpop.permute.xlu0 %890
  %892 = vrot.lane.b32.xlu0 %v879, 91
  %v893 = vpop.permute.xlu0 %892
  %894 = vrot.lane.b32.xlu0 %v880, 91
  %v895 = vpop.permute.xlu0 %894
  %896 = vrot.lane.b32.xlu0 %v881, 91
  %v897 = vpop.permute.xlu0 %896
  %898 = vrot.lane.b32.xlu0 %v882, 91
  %v899 = vpop.permute.xlu0 %898
  %900 = vrot.lane.b32.xlu0 %v883, 91
  %v901 = vpop.permute.xlu0 %900
  %v902 = vsel %vm267, %v891, %v893
  %v903 = vsel %vm267, %v893, %v895
  %v904 = vsel %vm267, %v895, %v897
  %v905 = vsel %vm267, %v897, %v899
  %v906 = vsel %vm267, %v899, %v901
  %912 = vst [vmem:[#allocation2 + $0x118] sm:$0xff] %v902
  %913 = vst [vmem:[#allocation2 + $0x120] sm:$0xff] %v903
  %914 = vst [vmem:[#allocation2 + $0x128] sm:$0xff] %v904
  %915 = vst [vmem:[#allocation2 + $0x130] sm:$0xff] %v905
  %916 = vst.msk [vmem:[#allocation2 + $0x138] sm:$0xff] %vm26, %v906
  %v917 = vld [vmem:[#allocation3] sm:$0xff]
  %v918 = vld [vmem:[#allocation3 + $0x8] sm:$0xff]
  %v919 = vld [vmem:[#allocation3 + $0x10] sm:$0xff]
  %v920 = vld [vmem:[#allocation3 + $0x18] sm:$0xff]
  %v921 = vld [vmem:[#allocation3 + $0x20] sm:$0xff]
  %v922 = vld [vmem:[#allocation3 + $0x28] sm:$0xff]
  %929 = vrot.lane.b32.xlu0 %v917, 90
  %v930 = vpop.permute.xlu0 %929
  %931 = vrot.lane.b32.xlu0 %v918, 90
  %v932 = vpop.permute.xlu0 %931
  %933 = vrot.lane.b32.xlu0 %v919, 90
  %v934 = vpop.permute.xlu0 %933
  %935 = vrot.lane.b32.xlu0 %v920, 90
  %v936 = vpop.permute.xlu0 %935
  %937 = vrot.lane.b32.xlu0 %v921, 90
  %v938 = vpop.permute.xlu0 %937
  %939 = vrot.lane.b32.xlu0 %v922, 90
  %v940 = vpop.permute.xlu0 %939
  %v941 = vsel %vm307, %v930, %v932
  %v942 = vsel %vm307, %v932, %v934
  %v943 = vsel %vm307, %v934, %v936
  %v944 = vsel %vm307, %v936, %v938
  %v945 = vsel %vm307, %v938, %v940
  %951 = vst [vmem:[#allocation2 + $0x140] sm:$0xff] %v941
  %952 = vst [vmem:[#allocation2 + $0x148] sm:$0xff] %v942
  %953 = vst [vmem:[#allocation2 + $0x150] sm:$0xff] %v943
  %954 = vst [vmem:[#allocation2 + $0x158] sm:$0xff] %v944
  %955 = vst.msk [vmem:[#allocation2 + $0x160] sm:$0xff] %vm26, %v945
  %v956 = vld [vmem:[%s2] sm:$0xff]
  %v957 = vld [vmem:[#allocation2] sm:$0xff]
  %v958 = vld [vmem:[#allocation2 + $0x8] sm:$0xff]
  %v959 = vld [vmem:[#allocation2 + $0x10] sm:$0xff]
  %v960 = vld [vmem:[#allocation2 + $0x18] sm:$0xff]
  %v961 = vld [vmem:[#allocation2 + $0x20] sm:$0xff]
  %v962 = vld [vmem:[#allocation2 + $0x28] sm:$0xff]
  %v963 = vld [vmem:[#allocation2 + $0x30] sm:$0xff]
  %v964 = vld [vmem:[#allocation2 + $0x38] sm:$0xff]
  %v965 = vld [vmem:[#allocation2 + $0x40] sm:$0xff]
  %v966 = vld [vmem:[#allocation2 + $0x48] sm:$0xff]
  %v967 = vld [vmem:[#allocation2 + $0x50] sm:$0xff]
  %v968 = vld [vmem:[#allocation2 + $0x58] sm:$0xff]
  %v969 = vld [vmem:[#allocation2 + $0x60] sm:$0xff]
  %v970 = vld [vmem:[#allocation2 + $0x68] sm:$0xff]
  %v971 = vld [vmem:[#allocation2 + $0x70] sm:$0xff]
  %v972 = vld [vmem:[#allocation2 + $0x78] sm:$0xff]
  %v973 = vld [vmem:[#allocation2 + $0x80] sm:$0xff]
  %v974 = vld [vmem:[#allocation2 + $0x88] sm:$0xff]
  %v975 = vld [vmem:[#allocation2 + $0x90] sm:$0xff]
  %v976 = vld [vmem:[#allocation2 + $0x98] sm:$0xff]
  %v977 = vld [vmem:[#allocation2 + $0xa0] sm:$0xff]
  %v978 = vld [vmem:[#allocation2 + $0xa8] sm:$0xff]
  %v979 = vld [vmem:[#allocation2 + $0xb0] sm:$0xff]
  %v980 = vld [vmem:[#allocation2 + $0xb8] sm:$0xff]
  %v981 = vld [vmem:[#allocation2 + $0xc0] sm:$0xff]
  %v982 = vld [vmem:[#allocation2 + $0xc8] sm:$0xff]
  %v983 = vld [vmem:[#allocation2 + $0xd0] sm:$0xff]
  %v984 = vld [vmem:[#allocation2 + $0xd8] sm:$0xff]
  %v985 = vld [vmem:[#allocation2 + $0xe0] sm:$0xff]
  %v986 = vld [vmem:[#allocation2 + $0xe8] sm:$0xff]
  %v987 = vld [vmem:[#allocation2 + $0xf0] sm:$0xff]
  %v988 = vld [vmem:[#allocation2 + $0xf8] sm:$0xff]
  %v989 = vld [vmem:[#allocation2 + $0x100] sm:$0xff]
  %v990 = vld [vmem:[#allocation2 + $0x108] sm:$0xff]
  %v991 = vld [vmem:[#allocation2 + $0x110] sm:$0xff]
  %v992 = vld [vmem:[#allocation2 + $0x118] sm:$0xff]
  %v993 = vld [vmem:[#allocation2 + $0x120] sm:$0xff]
  %v994 = vld [vmem:[#allocation2 + $0x128] sm:$0xff]
  %v995 = vld [vmem:[#allocation2 + $0x130] sm:$0xff]
  %v996 = vld [vmem:[#allocation2 + $0x138] sm:$0xff]
  %v997 = vld [vmem:[#allocation2 + $0x140] sm:$0xff]
  %v998 = vld [vmem:[#allocation2 + $0x148] sm:$0xff]
  %v999 = vld [vmem:[#allocation2 + $0x150] sm:$0xff]
  %v1000 = vld [vmem:[#allocation2 + $0x158] sm:$0xff]
  %v1001 = vld [vmem:[#allocation2 + $0x160] sm:$0xff]
  %v1003 = vsel %vm369, %v956, 0
  %1005 = vmatprep.subr.mxu0 0.0
  %1006 = vmatpush1.msra.mxu0 0.0
  %1007 = vmatprep.subr.mxu0 0.0
  %1008 = vmatpush1.msra.mxu0 0.0
  %1009 = vmatprep.subr.mxu0 0.0
  %1010 = vmatpush1.msra.mxu0 0.0
  %1011 = vmatprep.subr.mxu0 0.0
  %1012 = vmatpush1.msra.mxu0 0.0
  %1013 = vmatprep.subr.mxu0 0.0
  %1014 = vmatpush1.msra.mxu0 0.0
  %1015 = vmatprep.subr.mxu0 0.0
  %1016 = vmatpush1.msra.mxu0 0.0
  %1017 = vmatprep.subr.mxu0 0.0
  %1018 = vmatpush1.msra.mxu0 0.0
  %1019 = vmatprep.subr.mxu0 %v998
  %1020 = vmatpush1.msra.mxu0 %v997
  %1021 = vmatprep.subr.mxu0 %v993
  %1022 = vmatpush1.msra.mxu0 %v992
  %1023 = vmatprep.subr.mxu0 %v988
  %1024 = vmatpush1.msra.mxu0 %v987
  %1025 = vmatprep.subr.mxu0 %v983
  %1026 = vmatpush1.msra.mxu0 %v982
  %1027 = vmatprep.subr.mxu0 %v978
  %1028 = vmatpush1.msra.mxu0 %v977
  %1029 = vmatprep.subr.mxu0 %v973
  %1030 = vmatpush1.msra.mxu0 %v972
  %1031 = vmatprep.subr.mxu0 %v968
  %1032 = vmatpush1.msra.mxu0 %v967
  %1033 = vmatprep.subr.mxu0 %v963
  %1034 = vmatpush1.msra.mxu0 %v962
  %1035 = vmatprep.subr.mxu0 %v958
  %1036 = vmatpush1.msra.mxu0 %v957
  %1037 = vmatprep.subr.mxu0 0.0
  %1038 = vmatpush2.msra.mxu0 0.0
  %1039 = vmatprep.subr.mxu0 0.0
  %1040 = vmatpush2.msra.mxu0 0.0
  %1041 = vmatprep.subr.mxu0 0.0
  %1042 = vmatpush2.msra.mxu0 0.0
  %1043 = vmatprep.subr.mxu0 0.0
  %1044 = vmatpush2.msra.mxu0 0.0
  %1045 = vmatprep.subr.mxu0 0.0
  %1046 = vmatpush2.msra.mxu0 0.0
  %1047 = vmatprep.subr.mxu0 0.0
  %1048 = vmatpush2.msra.mxu0 0.0
  %1049 = vmatprep.subr.mxu0 0.0
  %1050 = vmatpush2.msra.mxu0 0.0
  %1051 = vmatprep.subr.mxu0 0.0
  %1052 = vmatpush2.msra.mxu0 0.0
  %1053 = vmatprep.subr.mxu0 0.0
  %1054 = vmatpush2.msra.mxu0 0.0
  %1055 = vmatprep.subr.mxu0 0.0
  %1056 = vmatpush2.msra.mxu0 0.0
  %1057 = vmatprep.subr.mxu0 0.0
  %1058 = vmatpush2.msra.mxu0 0.0
  %1059 = vmatprep.subr.mxu0 0.0
  %1060 = vmatpush2.msra.mxu0 0.0
  %1061 = vmatprep.subr.mxu0 0.0
  %1062 = vmatpush2.msra.mxu0 0.0
  %1063 = vmatprep.subr.mxu0 0.0
  %1064 = vmatpush2.msra.mxu0 0.0
  %1065 = vmatprep.subr.mxu0 0.0
  %1066 = vmatpush2.msra.mxu0 0.0
  %1067 = vmatprep.subr.mxu0 0.0
  %1068 = vmatpush2.msra.mxu0 0.0
  %1069 = vmatprep.mubr.f32.mxu0 0.0
  %1070 = vmatmul.mubr.f32.gmra.mxu0 %v1003
  %v1071 = vpop.f32.mrf.mxu0
  %v1072 = vadd.f32 0.0, %v1071
  %v1073 = vpop.f32.mrf.mxu0
  %v1074 = vadd.f32 0.0, %v1073
  %1075 = vdwg.mxu0
  %1076 = vmatprep.subr.mxu0 0.0
  %1077 = vmatpush1.msra.mxu0 0.0
  %1078 = vmatprep.subr.mxu0 0.0
  %1079 = vmatpush1.msra.mxu0 0.0
  %1080 = vmatprep.subr.mxu0 0.0
  %1081 = vmatpush1.msra.mxu0 0.0
  %1082 = vmatprep.subr.mxu0 0.0
  %1083 = vmatpush1.msra.mxu0 0.0
  %1084 = vmatprep.subr.mxu0 0.0
  %1085 = vmatpush1.msra.mxu0 0.0
  %1086 = vmatprep.subr.mxu0 0.0
  %1087 = vmatpush1.msra.mxu0 0.0
  %1088 = vmatprep.subr.mxu0 0.0
  %1089 = vmatpush1.msra.mxu0 0.0
  %1090 = vmatprep.subr.mxu0 %v1000
  %1091 = vmatpush1.msra.mxu0 %v999
  %1092 = vmatprep.subr.mxu0 %v995
  %1093 = vmatpush1.msra.mxu0 %v994
  %1094 = vmatprep.subr.mxu0 %v990
  %1095 = vmatpush1.msra.mxu0 %v989
  %1096 = vmatprep.subr.mxu0 %v985
  %1097 = vmatpush1.msra.mxu0 %v984
  %1098 = vmatprep.subr.mxu0 %v980
  %1099 = vmatpush1.msra.mxu0 %v979
  %1100 = vmatprep.subr.mxu0 %v975
  %1101 = vmatpush1.msra.mxu0 %v974
  %1102 = vmatprep.subr.mxu0 %v970
  %1103 = vmatpush1.msra.mxu0 %v969
  %1104 = vmatprep.subr.mxu0 %v965
  %1105 = vmatpush1.msra.mxu0 %v964
  %1106 = vmatprep.subr.mxu0 %v960
  %1107 = vmatpush1.msra.mxu0 %v959
  %1108 = vmatprep.subr.mxu0 0.0
  %1109 = vmatpush2.msra.mxu0 0.0
  %1110 = vmatprep.subr.mxu0 0.0
  %1111 = vmatpush2.msra.mxu0 0.0
  %1112 = vmatprep.subr.mxu0 0.0
  %1113 = vmatpush2.msra.mxu0 0.0
  %1114 = vmatprep.subr.mxu0 0.0
  %1115 = vmatpush2.msra.mxu0 0.0
  %1116 = vmatprep.subr.mxu0 0.0
  %1117 = vmatpush2.msra.mxu0 0.0
  %1118 = vmatprep.subr.mxu0 0.0
  %1119 = vmatpush2.msra.mxu0 0.0
  %1120 = vmatprep.subr.mxu0 0.0
  %1121 = vmatpush2.msra.mxu0 0.0
  %1122 = vmatprep.subr.mxu0 0.0
  %1123 = vmatpush2.msra.mxu0 0.0
  %1124 = vmatprep.subr.mxu0 0.0
  %1125 = vmatpush2.msra.mxu0 0.0
  %1126 = vmatprep.subr.mxu0 0.0
  %1127 = vmatpush2.msra.mxu0 0.0
  %1128 = vmatprep.subr.mxu0 0.0
  %1129 = vmatpush2.msra.mxu0 0.0
  %1130 = vmatprep.subr.mxu0 0.0
  %1131 = vmatpush2.msra.mxu0 0.0
  %1132 = vmatprep.subr.mxu0 0.0
  %1133 = vmatpush2.msra.mxu0 0.0
  %1134 = vmatprep.subr.mxu0 0.0
  %1135 = vmatpush2.msra.mxu0 0.0
  %1136 = vmatprep.subr.mxu0 0.0
  %1137 = vmatpush2.msra.mxu0 0.0
  %1138 = vmatprep.subr.mxu0 0.0
  %1139 = vmatpush2.msra.mxu0 0.0
  %1140 = vmatprep.mubr.f32.mxu0 0.0
  %1141 = vmatmul.mubr.f32.gmra.mxu0 %v1003
  %v1142 = vpop.f32.mrf.mxu0
  %v1143 = vadd.f32 0.0, %v1142
  %v1144 = vpop.f32.mrf.mxu0
  %v1145 = vadd.f32 0.0, %v1144
  %1146 = vdwg.mxu0
  %1147 = vmatprep.subr.mxu0 0.0
  %1148 = vmatpush1.msra.mxu0 0.0
  %1149 = vmatprep.subr.mxu0 0.0
  %1150 = vmatpush1.msra.mxu0 0.0
  %1151 = vmatprep.subr.mxu0 0.0
  %1152 = vmatpush1.msra.mxu0 0.0
  %1153 = vmatprep.subr.mxu0 0.0
  %1154 = vmatpush1.msra.mxu0 0.0
  %1155 = vmatprep.subr.mxu0 0.0
  %1156 = vmatpush1.msra.mxu0 0.0
  %1157 = vmatprep.subr.mxu0 0.0
  %1158 = vmatpush1.msra.mxu0 0.0
  %1159 = vmatprep.subr.mxu0 0.0
  %1160 = vmatpush1.msra.mxu0 0.0
  %1161 = vmatprep.subr.mxu0 0.0
  %1162 = vmatpush1.msra.mxu0 %v1001
  %1163 = vmatprep.subr.mxu0 0.0
  %1164 = vmatpush1.msra.mxu0 %v996
  %1165 = vmatprep.subr.mxu0 0.0
  %1166 = vmatpush1.msra.mxu0 %v991
  %1167 = vmatprep.subr.mxu0 0.0
  %1168 = vmatpush1.msra.mxu0 %v986
  %1169 = vmatprep.subr.mxu0 0.0
  %1170 = vmatpush1.msra.mxu0 %v981
  %1171 = vmatprep.subr.mxu0 0.0
  %1172 = vmatpush1.msra.mxu0 %v976
  %1173 = vmatprep.subr.mxu0 0.0
  %1174 = vmatpush1.msra.mxu0 %v971
  %1175 = vmatprep.subr.mxu0 0.0
  %1176 = vmatpush1.msra.mxu0 %v966
  %1177 = vmatprep.subr.mxu0 0.0
  %1178 = vmatpush1.msra.mxu0 %v961
  %1179 = vmatprep.subr.mxu0 0.0
  %1180 = vmatpush2.msra.mxu0 0.0
  %1181 = vmatprep.subr.mxu0 0.0
  %1182 = vmatpush2.msra.mxu0 0.0
  %1183 = vmatprep.subr.mxu0 0.0
  %1184 = vmatpush2.msra.mxu0 0.0
  %1185 = vmatprep.subr.mxu0 0.0
  %1186 = vmatpush2.msra.mxu0 0.0
  %1187 = vmatprep.subr.mxu0 0.0
  %1188 = vmatpush2.msra.mxu0 0.0
  %1189 = vmatprep.subr.mxu0 0.0
  %1190 = vmatpush2.msra.mxu0 0.0
  %1191 = vmatprep.subr.mxu0 0.0
  %1192 = vmatpush2.msra.mxu0 0.0
  %1193 = vmatprep.subr.mxu0 0.0
  %1194 = vmatpush2.msra.mxu0 0.0
  %1195 = vmatprep.subr.mxu0 0.0
  %1196 = vmatpush2.msra.mxu0 0.0
  %1197 = vmatprep.subr.mxu0 0.0
  %1198 = vmatpush2.msra.mxu0 0.0
  %1199 = vmatprep.subr.mxu0 0.0
  %1200 = vmatpush2.msra.mxu0 0.0
  %1201 = vmatprep.subr.mxu0 0.0
  %1202 = vmatpush2.msra.mxu0 0.0
  %1203 = vmatprep.subr.mxu0 0.0
  %1204 = vmatpush2.msra.mxu0 0.0
  %1205 = vmatprep.subr.mxu0 0.0
  %1206 = vmatpush2.msra.mxu0 0.0
  %1207 = vmatprep.subr.mxu0 0.0
  %1208 = vmatpush2.msra.mxu0 0.0
  %1209 = vmatprep.subr.mxu0 0.0
  %1210 = vmatpush2.msra.mxu0 0.0
  %1211 = vmatprep.mubr.f32.mxu0 0.0
  %1212 = vmatmul.mubr.f32.gmra.mxu0 %v1003
  %v1213 = vpop.f32.mrf.mxu0
  %v1214 = vadd.f32 0.0, %v1213
  %v1215 = vpop.f32.mrf.mxu0
  %1216 = vdwg.mxu0
  %v1217 = vmul.f32 %v1072, 0.1
  %v1218 = vmul.f32 %v1074, 0.1
  %v1219 = vmul.f32 %v1143, 0.1
  %v1220 = vmul.f32 %v1145, 0.1
  %v1221 = vmul.f32 %v1214, 0.1
  %v1222 = vld [vmem:[%s0] sm:$0xff]
  %v1223 = vld [vmem:[%s0 + $0x8] sm:$0xff]
  %v1224 = vld [vmem:[%s0 + $0x10] sm:$0xff]
  %v1225 = vld [vmem:[%s0 + $0x18] sm:$0xff]
  %v1226 = vld [vmem:[%s0 + $0x20] sm:$0xff]
  %1232 = vrot.lane.b32.xlu0 %v1222, 109
  %v1233 = vpop.permute.xlu0 %1232
  %1234 = vrot.lane.b32.xlu0 %v1223, 109
  %v1235 = vpop.permute.xlu0 %1234
  %1236 = vrot.lane.b32.xlu0 %v1224, 109
  %v1237 = vpop.permute.xlu0 %1236
  %1238 = vrot.lane.b32.xlu0 %v1225, 109
  %v1239 = vpop.permute.xlu0 %1238
  %1240 = vrot.lane.b32.xlu0 %v1226, 109
  %v1241 = vpop.permute.xlu0 %1240
  %v1242 = vsel %vm153, %v1233, %v1235
  %v1243 = vsel %vm153, %v1235, %v1237
  %v1244 = vsel %vm153, %v1237, %v1239
  %v1245 = vsel %vm153, %v1239, %v1241
  %v1251 = vadd.f32 %v1217, %v1242
  %v1252 = vadd.f32 %v1218, %v1243
  %v1253 = vadd.f32 %v1219, %v1244
  %v1254 = vadd.f32 %v1220, %v1245
  %v1255 = vadd.f32 %v1221, %v1241
  %v1256 = vld [vmem:[%s3] sm:$0x1f]
  %v1258 = vlaneseq
  %v1259 = vshrl.u32 %v1258, 7
  %v1260 = vsub.s32 0, %v1259
  %v1261 = vrot.slane %v1256, %v1260
  %v1262 = vlaneseq
  %v1263 = vshrl.u32 %v1262, 7
  %v1264 = vsub.s32 1, %v1263
  %v1265 = vrot.slane %v1256, %v1264
  %v1266 = vlaneseq
  %v1267 = vshrl.u32 %v1266, 7
  %v1268 = vsub.s32 2, %v1267
  %v1269 = vrot.slane %v1256, %v1268
  %v1270 = vlaneseq
  %v1271 = vshrl.u32 %v1270, 7
  %v1272 = vsub.s32 3, %v1271
  %v1273 = vrot.slane %v1256, %v1272
  %v1274 = vlaneseq
  %v1275 = vshrl.u32 %v1274, 7
  %v1276 = vsub.s32 4, %v1275
  %v1277 = vrot.slane %v1256, %v1276
  %v1283 = vmul.f32 %v1251, %v1261
  %v1284 = vmul.f32 %v1252, %v1265
  %v1285 = vmul.f32 %v1253, %v1269
  %v1286 = vmul.f32 %v1254, %v1273
  %v1287 = vmul.f32 %v1255, %v1277
  %1288 = vst.msk [vmem:[%s4] sm:$0xff] %vm622, 0.0
  %1294 = vrot.lane.b32.xlu0 %v1283, 19
  %v1295 = vpop.permute.xlu0 %1294
  %1296 = vrot.lane.b32.xlu0 %v1284, 19
  %v1297 = vpop.permute.xlu0 %1296
  %1298 = vrot.lane.b32.xlu0 %v1285, 19
  %v1299 = vpop.permute.xlu0 %1298
  %1300 = vrot.lane.b32.xlu0 %v1286, 19
  %v1301 = vpop.permute.xlu0 %1300
  %1302 = vrot.lane.b32.xlu0 %v1287, 19
  %v1303 = vpop.permute.xlu0 %1302
  %v1304 = vsel %vm622, %v1295, %v1297
  %v1305 = vsel %vm622, %v1297, %v1299
  %v1306 = vsel %vm622, %v1299, %v1301
  %v1307 = vsel %vm622, %v1301, %v1303
  %1313 = vst.msk [vmem:[%s4] sm:$0xff] %vm648, %v1295
  %1314 = vst [vmem:[%s4 + $0x8] sm:$0xff] %v1304
  %1315 = vst [vmem:[%s4 + $0x10] sm:$0xff] %v1305
  %1316 = vst [vmem:[%s4 + $0x18] sm:$0xff] %v1306
  %1317 = vst.msk [vmem:[%s4 + $0x20] sm:$0xff] %vm653, %v1307
  %1318 = vst.msk [vmem:[%s4 + $0x20] sm:$0xff] %vm655, 0.0
  %1319 = vst.msk [vmem:[%s4 + $0x28] sm:$0xff] %vm657, 0.0
  // Predicated region
  $region18: #{edsr_forward.7} parent=0 // pred_check
    _
  $region19: #{edsr_forward.7} parent=0 // pred_check_branch
    %1321 = sbr.rel (0) target = $region21
  $region20: #{edsr_forward.7} parent=0 // pred_region
    _
  $region21: #{edsr_forward.7} parent=0 // pred_fallthru
    _
  // Predicated region
  $region22: #{edsr_forward.7} parent=0 // pred_check
    _
  $region23: #{edsr_forward.7} parent=0 // pred_check_branch
    %1323 = sbr.rel (0) target = $region25
  $region24: #{edsr_forward.7} parent=0 // pred_region
    _
  $region25: #{edsr_forward.7} parent=0 // pred_fallthru
    _

// kernel: edsr_forward.11
$region0: #{edsr_forward.11}
  #allocation0 [shape = 'u32[]', space=smem, size = 0x4, offset = 0x4, fixed_abs, tag = 'smem constant byte address 0x4 - core index']
  #allocation1 [shape = 'u32[144,128]{1,0:T(1,128)}', space=vmem, size = 0x12000, scoped, tag = 'internal scratch']
  #allocation2 [shape = 'f32[72,2242]{1,0:T(8,128)}', space=vmem, size = 0xa2000, scoped, tag = 'scratch operand']
  %s0 = inlined_call_operand.vmem [shape: f32[8,2312], index: 0, kind: input, shape index: {}]
  %s1 = inlined_call_operand.vmem [shape: f32[3,72], index: 1, kind: input, shape index: {}]
  %s2 = inlined_call_operand.vmem [shape: f32[1,2242], index: 2, kind: input, shape index: {}]
  %s3 = inlined_call_operand.vmem [shape: f32[3,1], index: 3, kind: input, shape index: {}]
  %s4 = inlined_call_operand.vmem [shape: f32[3,2312], index: 4, kind: output, shape index: {}]
  %s5 = sld [smem:[#allocation0]]
  $region26: #{edsr_forward.11} parent=0
    _
  %s7 = ssub.s32 1, %s5
  %s8 = scalar_select 0, %s7, %s5
  // Predicated region
  $region2: #{edsr_forward.11} parent=0 // pred_check
    _
  $region3: #{edsr_forward.11} parent=0 // pred_check_branch
    %10 = sbr.rel (0) target = $region5
  $region4: #{edsr_forward.11} parent=0 // pred_region
    _
  $region5: #{edsr_forward.11} parent=0 // pred_fallthru
    _
  // Predicated region
  $region6: #{edsr_forward.11} parent=0 // pred_check
    _
  $region7: #{edsr_forward.11} parent=0 // pred_check_branch
    %12 = sbr.rel (0) target = $region9
  $region8: #{edsr_forward.11} parent=0 // pred_region
    _
  $region9: #{edsr_forward.11} parent=0 // pred_fallthru
    _
  // Predicated region
  $region10: #{edsr_forward.11} parent=0 // pred_check
    _
  $region11: #{edsr_forward.11} parent=0 // pred_check_branch
    %14 = sbr.rel (0) target = $region13
  $region12: #{edsr_forward.11} parent=0 // pred_region
    _
  $region13: #{edsr_forward.11} parent=0 // pred_fallthru
    _
  // Predicated region
  $region14: #{edsr_forward.11} parent=0 // pred_check
    _
  $region15: #{edsr_forward.11} parent=0 // pred_check_branch
    %16 = sbr.rel (0) target = $region17
  $region16: #{edsr_forward.11} parent=0 // pred_region
    _
  $region17: #{edsr_forward.11} parent=0 // pred_fallthru
    _
  %v17 = vld [vmem:[%s0] sm:$0xff]
  %v18 = vld [vmem:[%s0 + $0x8] sm:$0xff]
  %v19 = vld [vmem:[%s0 + $0x10] sm:$0xff]
  %v20 = vld [vmem:[%s0 + $0x18] sm:$0xff]
  %v21 = vld [vmem:[%s0 + $0x20] sm:$0xff]
  %v22 = vld [vmem:[%s0 + $0x28] sm:$0xff]
  %v23 = vld [vmem:[%s0 + $0x30] sm:$0xff]
  %v24 = vld [vmem:[%s0 + $0x38] sm:$0xff]
  %v25 = vld [vmem:[%s0 + $0x40] sm:$0xff]
  %v26 = vld [vmem:[%s0 + $0x48] sm:$0xff]
  %v27 = vld [vmem:[%s0 + $0x50] sm:$0xff]
  %v28 = vld [vmem:[%s0 + $0x58] sm:$0xff]
  %v29 = vld [vmem:[%s0 + $0x60] sm:$0xff]
  %v30 = vld [vmem:[%s0 + $0x68] sm:$0xff]
  %v31 = vld [vmem:[%s0 + $0x70] sm:$0xff]
  %v32 = vld [vmem:[%s0 + $0x78] sm:$0xff]
  %v33 = vld [vmem:[%s0 + $0x80] sm:$0xff]
  %v34 = vld [vmem:[%s0 + $0x88] sm:$0xff]
  %35 = vst [vmem:[#allocation2] sm:$0xff] %v17
  %36 = vst [vmem:[#allocation2 + $0x8] sm:$0xff] %v18
  %37 = vst [vmem:[#allocation2 + $0x10] sm:$0xff] %v19
  %38 = vst [vmem:[#allocation2 + $0x18] sm:$0xff] %v20
  %39 = vst [vmem:[#allocation2 + $0x20] sm:$0xff] %v21
  %40 = vst [vmem:[#allocation2 + $0x28] sm:$0xff] %v22
  %41 = vst [vmem:[#allocation2 + $0x30] sm:$0xff] %v23
  %42 = vst [vmem:[#allocation2 + $0x38] sm:$0xff] %v24
  %43 = vst [vmem:[#allocation2 + $0x40] sm:$0xff] %v25
  %44 = vst [vmem:[#allocation2 + $0x48] sm:$0xff] %v26
  %45 = vst [vmem:[#allocation2 + $0x50] sm:$0xff] %v27
  %46 = vst [vmem:[#allocation2 + $0x58] sm:$0xff] %v28
  %47 = vst [vmem:[#allocation2 + $0x60] sm:$0xff] %v29
  %48 = vst [vmem:[#allocation2 + $0x68] sm:$0xff] %v30
  %49 = vst [vmem:[#allocation2 + $0x70] sm:$0xff] %v31
  %50 = vst [vmem:[#allocation2 + $0x78] sm:$0xff] %v32
  %51 = vst [vmem:[#allocation2 + $0x80] sm:$0xff] %v33
  %vm52 = vcmask 539648
  %53 = vst.msk [vmem:[#allocation2 + $0x88] sm:$0xff] %vm52, %v34
  %v54 = vld [vmem:[%s0] sm:$0xff]
  %v55 = vld [vmem:[%s0 + $0x8] sm:$0xff]
  %v56 = vld [vmem:[%s0 + $0x10] sm:$0xff]
  %v57 = vld [vmem:[%s0 + $0x18] sm:$0xff]
  %v58 = vld [vmem:[%s0 + $0x20] sm:$0xff]
  %v59 = vld [vmem:[%s0 + $0x28] sm:$0xff]
  %v60 = vld [vmem:[%s0 + $0x30] sm:$0xff]
  %v61 = vld [vmem:[%s0 + $0x38] sm:$0xff]
  %v62 = vld [vmem:[%s0 + $0x40] sm:$0xff]
  %v63 = vld [vmem:[%s0 + $0x48] sm:$0xff]
  %v64 = vld [vmem:[%s0 + $0x50] sm:$0xff]
  %v65 = vld [vmem:[%s0 + $0x58] sm:$0xff]
  %v66 = vld [vmem:[%s0 + $0x60] sm:$0xff]
  %v67 = vld [vmem:[%s0 + $0x68] sm:$0xff]
  %v68 = vld [vmem:[%s0 + $0x70] sm:$0xff]
  %v69 = vld [vmem:[%s0 + $0x78] sm:$0xff]
  %v70 = vld [vmem:[%s0 + $0x80] sm:$0xff]
  %v71 = vld [vmem:[%s0 + $0x88] sm:$0xff]
  %90 = vrot.lane.b32.xlu0 %v54, 127
  %v91 = vpop.permute.xlu0 %90
  %92 = vrot.lane.b32.xlu0 %v55, 127
  %v93 = vpop.permute.xlu0 %92
  %94 = vrot.lane.b32.xlu0 %v56, 127
  %v95 = vpop.permute.xlu0 %94
  %96 = vrot.lane.b32.xlu0 %v57, 127
  %v97 = vpop.permute.xlu0 %96
  %98 = vrot.lane.b32.xlu0 %v58, 127
  %v99 = vpop.permute.xlu0 %98
  %100 = vrot.lane.b32.xlu0 %v59, 127
  %v101 = vpop.permute.xlu0 %100
  %102 = vrot.lane.b32.xlu0 %v60, 127
  %v103 = vpop.permute.xlu0 %102
  %104 = vrot.lane.b32.xlu0 %v61, 127
  %v105 = vpop.permute.xlu0 %104
  %106 = vrot.lane.b32.xlu0 %v62, 127
  %v107 = vpop.permute.xlu0 %106
  %108 = vrot.lane.b32.xlu0 %v63, 127
  %v109 = vpop.permute.xlu0 %108
  %110 = vrot.lane.b32.xlu0 %v64, 127
  %v111 = vpop.permute.xlu0 %110
  %112 = vrot.lane.b32.xlu0 %v65, 127
  %v113 = vpop.permute.xlu0 %112
  %114 = vrot.lane.b32.xlu0 %v66, 127
  %v115 = vpop.permute.xlu0 %114
  %116 = vrot.lane.b32.xlu0 %v67, 127
  %v117 = vpop.permute.xlu0 %116
  %118 = vrot.lane.b32.xlu0 %v68, 127
  %v119 = vpop.permute.xlu0 %118
  %120 = vrot.lane.b32.xlu0 %v69, 127
  %v121 = vpop.permute.xlu0 %120
  %122 = vrot.lane.b32.xlu0 %v70, 127
  %v123 = vpop.permute.xlu0 %122
  %124 = vrot.lane.b32.xlu0 %v71, 127
  %v125 = vpop.permute.xlu0 %124
  %vm126 = vcmask 1039360
  %v127 = vsel %vm126, %v91, %v93
  %v128 = vsel %vm126, %v93, %v95
  %v129 = vsel %vm126, %v95, %v97
  %v130 = vsel %vm126, %v97, %v99
  %v131 = vsel %vm126, %v99, %v101
  %v132 = vsel %vm126, %v101, %v103
  %v133 = vsel %vm126, %v103, %v105
  %v134 = vsel %vm126, %v105, %v107
  %v135 = vsel %vm126, %v107, %v109
  %v136 = vsel %vm126, %v109, %v111
  %v137 = vsel %vm126, %v111, %v113
  %v138 = vsel %vm126, %v113, %v115
  %v139 = vsel %vm126, %v115, %v117
  %v140 = vsel %vm126, %v117, %v119
  %v141 = vsel %vm126, %v119, %v121
  %v142 = vsel %vm126, %v121, %v123
  %v143 = vsel %vm126, %v123, %v125
  %162 = vst [vmem:[#allocation2 + $0x90] sm:$0xff] %v127
  %163 = vst [vmem:[#allocation2 + $0x98] sm:$0xff] %v128
  %164 = vst [vmem:[#allocation2 + $0xa0] sm:$0xff] %v129
  %165 = vst [vmem:[#allocation2 + $0xa8] sm:$0xff] %v130
  %166 = vst [vmem:[#allocation2 + $0xb0] sm:$0xff] %v131
  %167 = vst [vmem:[#allocation2 + $0xb8] sm:$0xff] %v132
  %168 = vst [vmem:[#allocation2 + $0xc0] sm:$0xff] %v133
  %169 = vst [vmem:[#allocation2 + $0xc8] sm:$0xff] %v134
  %170 = vst [vmem:[#allocation2 + $0xd0] sm:$0xff] %v135
  %171 = vst [vmem:[#allocation2 + $0xd8] sm:$0xff] %v136
  %172 = vst [vmem:[#allocation2 + $0xe0] sm:$0xff] %v137
  %173 = vst [vmem:[#allocation2 + $0xe8] sm:$0xff] %v138
  %174 = vst [vmem:[#allocation2 + $0xf0] sm:$0xff] %v139
  %175 = vst [vmem:[#allocation2 + $0xf8] sm:$0xff] %v140
  %176 = vst [vmem:[#allocation2 + $0x100] sm:$0xff] %v141
  %177 = vst [vmem:[#allocation2 + $0x108] sm:$0xff] %v142
  %178 = vst [vmem:[#allocation2 + $0x110] sm:$0xff] %v143
  %179 = vst.msk [vmem:[#allocation2 + $0x118] sm:$0xff] %vm52, %v125
  %v180 = vld [vmem:[%s0] sm:$0xff]
  %v181 = vld [vmem:[%s0 + $0x8] sm:$0xff]
  %v182 = vld [vmem:[%s0 + $0x10] sm:$0xff]
  %v183 = vld [vmem:[%s0 + $0x18] sm:$0xff]
  %v184 = vld [vmem:[%s0 + $0x20] sm:$0xff]
  %v185 = vld [vmem:[%s0 + $0x28] sm:$0xff]
  %v186 = vld [vmem:[%s0 + $0x30] sm:$0xff]
  %v187 = vld [vmem:[%s0 + $0x38] sm:$0xff]
  %v188 = vld [vmem:[%s0 + $0x40] sm:$0xff]
  %v189 = vld [vmem:[%s0 + $0x48] sm:$0xff]
  %v190 = vld [vmem:[%s0 + $0x50] sm:$0xff]
  %v191 = vld [vmem:[%s0 + $0x58] sm:$0xff]
  %v192 = vld [vmem:[%s0 + $0x60] sm:$0xff]
  %v193 = vld [vmem:[%s0 + $0x68] sm:$0xff]
  %v194 = vld [vmem:[%s0 + $0x70] sm:$0xff]
  %v195 = vld [vmem:[%s0 + $0x78] sm:$0xff]
  %v196 = vld [vmem:[%s0 + $0x80] sm:$0xff]
  %v197 = vld [vmem:[%s0 + $0x88] sm:$0xff]
  %216 = vrot.lane.b32.xlu0 %v180, 126
  %v217 = vpop.permute.xlu0 %216
  %218 = vrot.lane.b32.xlu0 %v181, 126
  %v219 = vpop.permute.xlu0 %218
  %220 = vrot.lane.b32.xlu0 %v182, 126
  %v221 = vpop.permute.xlu0 %220
  %222 = vrot.lane.b32.xlu0 %v183, 126
  %v223 = vpop.permute.xlu0 %222
  %224 = vrot.lane.b32.xlu0 %v184, 126
  %v225 = vpop.permute.xlu0 %224
  %226 = vrot.lane.b32.xlu0 %v185, 126
  %v227 = vpop.permute.xlu0 %226
  %228 = vrot.lane.b32.xlu0 %v186, 126
  %v229 = vpop.permute.xlu0 %228
  %230 = vrot.lane.b32.xlu0 %v187, 126
  %v231 = vpop.permute.xlu0 %230
  %232 = vrot.lane.b32.xlu0 %v188, 126
  %v233 = vpop.permute.xlu0 %232
  %234 = vrot.lane.b32.xlu0 %v189, 126
  %v235 = vpop.permute.xlu0 %234
  %236 = vrot.lane.b32.xlu0 %v190, 126
  %v237 = vpop.permute.xlu0 %236
  %238 = vrot.lane.b32.xlu0 %v191, 126
  %v239 = vpop.permute.xlu0 %238
  %240 = vrot.lane.b32.xlu0 %v192, 126
  %v241 = vpop.permute.xlu0 %240
  %242 = vrot.lane.b32.xlu0 %v193, 126
  %v243 = vpop.permute.xlu0 %242
  %244 = vrot.lane.b32.xlu0 %v194, 126
  %v245 = vpop.permute.xlu0 %244
  %246 = vrot.lane.b32.xlu0 %v195, 126
  %v247 = vpop.permute.xlu0 %246
  %248 = vrot.lane.b32.xlu0 %v196, 126
  %v249 = vpop.permute.xlu0 %248
  %250 = vrot.lane.b32.xlu0 %v197, 126
  %v251 = vpop.permute.xlu0 %250
  %vm252 = vcmask 1031168
  %v253 = vsel %vm252, %v217, %v219
  %v254 = vsel %vm252, %v219, %v221
  %v255 = vsel %vm252, %v221, %v223
  %v256 = vsel %vm252, %v223, %v225
  %v257 = vsel %vm252, %v225, %v227
  %v258 = vsel %vm252, %v227, %v229
  %v259 = vsel %vm252, %v229, %v231
  %v260 = vsel %vm252, %v231, %v233
  %v261 = vsel %vm252, %v233, %v235
  %v262 = vsel %vm252, %v235, %v237
  %v263 = vsel %vm252, %v237, %v239
  %v264 = vsel %vm252, %v239, %v241
  %v265 = vsel %vm252, %v241, %v243
  %v266 = vsel %vm252, %v243, %v245
  %v267 = vsel %vm252, %v245, %v247
  %v268 = vsel %vm252, %v247, %v249
  %v269 = vsel %vm252, %v249, %v251
  %288 = vst [vmem:[#allocation2 + $0x120] sm:$0xff] %v253
  %289 = vst [vmem:[#allocation2 + $0x128] sm:$0xff] %v254
  %290 = vst [vmem:[#allocation2 + $0x130] sm:$0xff] %v255
  %291 = vst [vmem:[#allocation2 + $0x138] sm:$0xff] %v256
  %292 = vst [vmem:[#allocation2 + $0x140] sm:$0xff] %v257
  %293 = vst [vmem:[#allocation2 + $0x148] sm:$0xff] %v258
  %294 = vst [vmem:[#allocation2 + $0x150] sm:$0xff] %v259
  %295 = vst [vmem:[#allocation2 + $0x158] sm:$0xff] %v260
  %296 = vst [vmem:[#allocation2 + $0x160] sm:$0xff] %v261
  %297 = vst [vmem:[#allocation2 + $0x168] sm:$0xff] %v262
  %298 = vst [vmem:[#allocation2 + $0x170] sm:$0xff] %v263
  %299 = vst [vmem:[#allocation2 + $0x178] sm:$0xff] %v264
  %300 = vst [vmem:[#allocation2 + $0x180] sm:$0xff] %v265
  %301 = vst [vmem:[#allocation2 + $0x188] sm:$0xff] %v266
  %302 = vst [vmem:[#allocation2 + $0x190] sm:$0xff] %v267
  %303 = vst [vmem:[#allocation2 + $0x198] sm:$0xff] %v268
  %304 = vst [vmem:[#allocation2 + $0x1a0] sm:$0xff] %v269
  %305 = vst.msk [vmem:[#allocation2 + $0x1a8] sm:$0xff] %vm52, %v251
  %v306 = vld [vmem:[%s0] sm:$0xff]
  %v307 = vld [vmem:[%s0 + $0x8] sm:$0xff]
  %v308 = vld [vmem:[%s0 + $0x10] sm:$0xff]
  %v309 = vld [vmem:[%s0 + $0x18] sm:$0xff]
  %v310 = vld [vmem:[%s0 + $0x20] sm:$0xff]
  %v311 = vld [vmem:[%s0 + $0x28] sm:$0xff]
  %v312 = vld [vmem:[%s0 + $0x30] sm:$0xff]
  %v313 = vld [vmem:[%s0 + $0x38] sm:$0xff]
  %v314 = vld [vmem:[%s0 + $0x40] sm:$0xff]
  %v315 = vld [vmem:[%s0 + $0x48] sm:$0xff]
  %v316 = vld [vmem:[%s0 + $0x50] sm:$0xff]
  %v317 = vld [vmem:[%s0 + $0x58] sm:$0xff]
  %v318 = vld [vmem:[%s0 + $0x60] sm:$0xff]
  %v319 = vld [vmem:[%s0 + $0x68] sm:$0xff]
  %v320 = vld [vmem:[%s0 + $0x70] sm:$0xff]
  %v321 = vld [vmem:[%s0 + $0x78] sm:$0xff]
  %v322 = vld [vmem:[%s0 + $0x80] sm:$0xff]
  %v323 = vld [vmem:[%s0 + $0x88] sm:$0xff]
  %342 = vrot.lane.b32.xlu0 %v306, 94
  %v343 = vpop.permute.xlu0 %342
  %344 = vrot.lane.b32.xlu0 %v307, 94
  %v345 = vpop.permute.xlu0 %344
  %346 = vrot.lane.b32.xlu0 %v308, 94
  %v347 = vpop.permute.xlu0 %346
  %348 = vrot.lane.b32.xlu0 %v309, 94
  %v349 = vpop.permute.xlu0 %348
  %350 = vrot.lane.b32.xlu0 %v310, 94
  %v351 = vpop.permute.xlu0 %350
  %352 = vrot.lane.b32.xlu0 %v311, 94
  %v353 = vpop.permute.xlu0 %352
  %354 = vrot.lane.b32.xlu0 %v312, 94
  %v355 = vpop.permute.xlu0 %354
  %356 = vrot.lane.b32.xlu0 %v313, 94
  %v357 = vpop.permute.xlu0 %356
  %358 = vrot.lane.b32.xlu0 %v314, 94
  %v359 = vpop.permute.xlu0 %358
  %360 = vrot.lane.b32.xlu0 %v315, 94
  %v361 = vpop.permute.xlu0 %360
  %362 = vrot.lane.b32.xlu0 %v316, 94
  %v363 = vpop.permute.xlu0 %362
  %364 = vrot.lane.b32.xlu0 %v317, 94
  %v365 = vpop.permute.xlu0 %364
  %366 = vrot.lane.b32.xlu0 %v318, 94
  %v367 = vpop.permute.xlu0 %366
  %368 = vrot.lane.b32.xlu0 %v319, 94
  %v369 = vpop.permute.xlu0 %368
  %370 = vrot.lane.b32.xlu0 %v320, 94
  %v371 = vpop.permute.xlu0 %370
  %372 = vrot.lane.b32.xlu0 %v321, 94
  %v373 = vpop.permute.xlu0 %372
  %374 = vrot.lane.b32.xlu0 %v322, 94
  %v375 = vpop.permute.xlu0 %374
  %376 = vrot.lane.b32.xlu0 %v323, 94
  %v377 = vpop.permute.xlu0 %376
  %vm378 = vcmask 769024
  %v379 = vsel %vm378, %v343, %v345
  %v380 = vsel %vm378, %v345, %v347
  %v381 = vsel %vm378, %v347, %v349
  %v382 = vsel %vm378, %v349, %v351
  %v383 = vsel %vm378, %v351, %v353
  %v384 = vsel %vm378, %v353, %v355
  %v385 = vsel %vm378, %v355, %v357
  %v386 = vsel %vm378, %v357, %v359
  %v387 = vsel %vm378, %v359, %v361
  %v388 = vsel %vm378, %v361, %v363
  %v389 = vsel %vm378, %v363, %v365
  %v390 = vsel %vm378, %v365, %v367
  %v391 = vsel %vm378, %v367, %v369
  %v392 = vsel %vm378, %v369, %v371
  %v393 = vsel %vm378, %v371, %v373
  %v394 = vsel %vm378, %v373, %v375
  %v395 = vsel %vm378, %v375, %v377
  %414 = vst [vmem:[#allocation2 + $0x1b0] sm:$0xff] %v379
  %415 = vst [vmem:[#allocation2 + $0x1b8] sm:$0xff] %v380
  %416 = vst [vmem:[#allocation2 + $0x1c0] sm:$0xff] %v381
  %417 = vst [vmem:[#allocation2 + $0x1c8] sm:$0xff] %v382
  %418 = vst [vmem:[#allocation2 + $0x1d0] sm:$0xff] %v383
  %419 = vst [vmem:[#allocation2 + $0x1d8] sm:$0xff] %v384
  %420 = vst [vmem:[#allocation2 + $0x1e0] sm:$0xff] %v385
  %421 = vst [vmem:[#allocation2 + $0x1e8] sm:$0xff] %v386
  %422 = vst [vmem:[#allocation2 + $0x1f0] sm:$0xff] %v387
  %423 = vst [vmem:[#allocation2 + $0x1f8] sm:$0xff] %v388
  %424 = vst [vmem:[#allocation2 + $0x200] sm:$0xff] %v389
  %425 = vst [vmem:[#allocation2 + $0x208] sm:$0xff] %v390
  %426 = vst [vmem:[#allocation2 + $0x210] sm:$0xff] %v391
  %427 = vst [vmem:[#allocation2 + $0x218] sm:$0xff] %v392
  %428 = vst [vmem:[#allocation2 + $0x220] sm:$0xff] %v393
  %429 = vst [vmem:[#allocation2 + $0x228] sm:$0xff] %v394
  %430 = vst [vmem:[#allocation2 + $0x230] sm:$0xff] %v395
  %431 = vst.msk [vmem:[#allocation2 + $0x238] sm:$0xff] %vm52, %v377
  %v432 = vld [vmem:[%s0] sm:$0xff]
  %v433 = vld [vmem:[%s0 + $0x8] sm:$0xff]
  %v434 = vld [vmem:[%s0 + $0x10] sm:$0xff]
  %v435 = vld [vmem:[%s0 + $0x18] sm:$0xff]
  %v436 = vld [vmem:[%s0 + $0x20] sm:$0xff]
  %v437 = vld [vmem:[%s0 + $0x28] sm:$0xff]
  %v438 = vld [vmem:[%s0 + $0x30] sm:$0xff]
  %v439 = vld [vmem:[%s0 + $0x38] sm:$0xff]
  %v440 = vld [vmem:[%s0 + $0x40] sm:$0xff]
  %v441 = vld [vmem:[%s0 + $0x48] sm:$0xff]
  %v442 = vld [vmem:[%s0 + $0x50] sm:$0xff]
  %v443 = vld [vmem:[%s0 + $0x58] sm:$0xff]
  %v444 = vld [vmem:[%s0 + $0x60] sm:$0xff]
  %v445 = vld [vmem:[%s0 + $0x68] sm:$0xff]
  %v446 = vld [vmem:[%s0 + $0x70] sm:$0xff]
  %v447 = vld [vmem:[%s0 + $0x78] sm:$0xff]
  %v448 = vld [vmem:[%s0 + $0x80] sm:$0xff]
  %v449 = vld [vmem:[%s0 + $0x88] sm:$0xff]
  %468 = vrot.lane.b32.xlu0 %v432, 93
  %v469 = vpop.permute.xlu0 %468
  %470 = vrot.lane.b32.xlu0 %v433, 93
  %v471 = vpop.permute.xlu0 %470
  %472 = vrot.lane.b32.xlu0 %v434, 93
  %v473 = vpop.permute.xlu0 %472
  %474 = vrot.lane.b32.xlu0 %v435, 93
  %v475 = vpop.permute.xlu0 %474
  %476 = vrot.lane.b32.xlu0 %v436, 93
  %v477 = vpop.permute.xlu0 %476
  %478 = vrot.lane.b32.xlu0 %v437, 93
  %v479 = vpop.permute.xlu0 %478
  %480 = vrot.lane.b32.xlu0 %v438, 93
  %v481 = vpop.permute.xlu0 %480
  %482 = vrot.lane.b32.xlu0 %v439, 93
  %v483 = vpop.permute.xlu0 %482
  %484 = vrot.lane.b32.xlu0 %v440, 93
  %v485 = vpop.permute.xlu0 %484
  %486 = vrot.lane.b32.xlu0 %v441, 93
  %v487 = vpop.permute.xlu0 %486
  %488 = vrot.lane.b32.xlu0 %v442, 93
  %v489 = vpop.permute.xlu0 %488
  %490 = vrot.lane.b32.xlu0 %v443, 93
  %v491 = vpop.permute.xlu0 %490
  %492 = vrot.lane.b32.xlu0 %v444, 93
  %v493 = vpop.permute.xlu0 %492
  %494 = vrot.lane.b32.xlu0 %v445, 93
  %v495 = vpop.permute.xlu0 %494
  %496 = vrot.lane.b32.xlu0 %v446, 93
  %v497 = vpop.permute.xlu0 %496
  %498 = vrot.lane.b32.xlu0 %v447, 93
  %v499 = vpop.permute.xlu0 %498
  %500 = vrot.lane.b32.xlu0 %v448, 93
  %v501 = vpop.permute.xlu0 %500
  %502 = vrot.lane.b32.xlu0 %v449, 93
  %v503 = vpop.permute.xlu0 %502
  %vm504 = vcmask 760832
  %v505 = vsel %vm504, %v469, %v471
  %v506 = vsel %vm504, %v471, %v473
  %v507 = vsel %vm504, %v473, %v475
  %v508 = vsel %vm504, %v475, %v477
  %v509 = vsel %vm504, %v477, %v479
  %v510 = vsel %vm504, %v479, %v481
  %v511 = vsel %vm504, %v481, %v483
  %v512 = vsel %vm504, %v483, %v485
  %v513 = vsel %vm504, %v485, %v487
  %v514 = vsel %vm504, %v487, %v489
  %v515 = vsel %vm504, %v489, %v491
  %v516 = vsel %vm504, %v491, %v493
  %v517 = vsel %vm504, %v493, %v495
  %v518 = vsel %vm504, %v495, %v497
  %v519 = vsel %vm504, %v497, %v499
  %v520 = vsel %vm504, %v499, %v501
  %v521 = vsel %vm504, %v501, %v503
  %540 = vst [vmem:[#allocation2 + $0x240] sm:$0xff] %v505
  %541 = vst [vmem:[#allocation2 + $0x248] sm:$0xff] %v506
  %542 = vst [vmem:[#allocation2 + $0x250] sm:$0xff] %v507
  %543 = vst [vmem:[#allocation2 + $0x258] sm:$0xff] %v508
  %544 = vst [vmem:[#allocation2 + $0x260] sm:$0xff] %v509
  %545 = vst [vmem:[#allocation2 + $0x268] sm:$0xff] %v510
  %546 = vst [vmem:[#allocation2 + $0x270] sm:$0xff] %v511
  %547 = vst [vmem:[#allocation2 + $0x278] sm:$0xff] %v512
  %548 = vst [vmem:[#allocation2 + $0x280] sm:$0xff] %v513
  %549 = vst [vmem:[#allocation2 + $0x288] sm:$0xff] %v514
  %550 = vst [vmem:[#allocation2 + $0x290] sm:$0xff] %v515
  %551 = vst [vmem:[#allocation2 + $0x298] sm:$0xff] %v516
  %552 = vst [vmem:[#allocation2 + $0x2a0] sm:$0xff] %v517
  %553 = vst [vmem:[#allocation2 + $0x2a8] sm:$0xff] %v518
  %554 = vst [vmem:[#allocation2 + $0x2b0] sm:$0xff] %v519
  %555 = vst [vmem:[#allocation2 + $0x2b8] sm:$0xff] %v520
  %556 = vst [vmem:[#allocation2 + $0x2c0] sm:$0xff] %v521
  %557 = vst.msk [vmem:[#allocation2 + $0x2c8] sm:$0xff] %vm52, %v503
  %v558 = vld [vmem:[%s0] sm:$0xff]
  %v559 = vld [vmem:[%s0 + $0x8] sm:$0xff]
  %v560 = vld [vmem:[%s0 + $0x10] sm:$0xff]
  %v561 = vld [vmem:[%s0 + $0x18] sm:$0xff]
  %v562 = vld [vmem:[%s0 + $0x20] sm:$0xff]
  %v563 = vld [vmem:[%s0 + $0x28] sm:$0xff]
  %v564 = vld [vmem:[%s0 + $0x30] sm:$0xff]
  %v565 = vld [vmem:[%s0 + $0x38] sm:$0xff]
  %v566 = vld [vmem:[%s0 + $0x40] sm:$0xff]
  %v567 = vld [vmem:[%s0 + $0x48] sm:$0xff]
  %v568 = vld [vmem:[%s0 + $0x50] sm:$0xff]
  %v569 = vld [vmem:[%s0 + $0x58] sm:$0xff]
  %v570 = vld [vmem:[%s0 + $0x60] sm:$0xff]
  %v571 = vld [vmem:[%s0 + $0x68] sm:$0xff]
  %v572 = vld [vmem:[%s0 + $0x70] sm:$0xff]
  %v573 = vld [vmem:[%s0 + $0x78] sm:$0xff]
  %v574 = vld [vmem:[%s0 + $0x80] sm:$0xff]
  %v575 = vld [vmem:[%s0 + $0x88] sm:$0xff]
  %594 = vrot.lane.b32.xlu0 %v558, 92
  %v595 = vpop.permute.xlu0 %594
  %596 = vrot.lane.b32.xlu0 %v559, 92
  %v597 = vpop.permute.xlu0 %596
  %598 = vrot.lane.b32.xlu0 %v560, 92
  %v599 = vpop.permute.xlu0 %598
  %600 = vrot.lane.b32.xlu0 %v561, 92
  %v601 = vpop.permute.xlu0 %600
  %602 = vrot.lane.b32.xlu0 %v562, 92
  %v603 = vpop.permute.xlu0 %602
  %604 = vrot.lane.b32.xlu0 %v563, 92
  %v605 = vpop.permute.xlu0 %604
  %606 = vrot.lane.b32.xlu0 %v564, 92
  %v607 = vpop.permute.xlu0 %606
  %608 = vrot.lane.b32.xlu0 %v565, 92
  %v609 = vpop.permute.xlu0 %608
  %610 = vrot.lane.b32.xlu0 %v566, 92
  %v611 = vpop.permute.xlu0 %610
  %612 = vrot.lane.b32.xlu0 %v567, 92
  %v613 = vpop.permute.xlu0 %612
  %614 = vrot.lane.b32.xlu0 %v568, 92
  %v615 = vpop.permute.xlu0 %614
  %616 = vrot.lane.b32.xlu0 %v569, 92
  %v617 = vpop.permute.xlu0 %616
  %618 = vrot.lane.b32.xlu0 %v570, 92
  %v619 = vpop.permute.xlu0 %618
  %620 = vrot.lane.b32.xlu0 %v571, 92
  %v621 = vpop.permute.xlu0 %620
  %622 = vrot.lane.b32.xlu0 %v572, 92
  %v623 = vpop.permute.xlu0 %622
  %624 = vrot.lane.b32.xlu0 %v573, 92
  %v625 = vpop.permute.xlu0 %624
  %626 = vrot.lane.b32.xlu0 %v574, 92
  %v627 = vpop.permute.xlu0 %626
  %628 = vrot.lane.b32.xlu0 %v575, 92
  %v629 = vpop.permute.xlu0 %628
  %vm630 = vcmask 752640
  %v631 = vsel %vm630, %v595, %v597
  %v632 = vsel %vm630, %v597, %v599
  %v633 = vsel %vm630, %v599, %v601
  %v634 = vsel %vm630, %v601, %v603
  %v635 = vsel %vm630, %v603, %v605
  %v636 = vsel %vm630, %v605, %v607
  %v637 = vsel %vm630, %v607, %v609
  %v638 = vsel %vm630, %v609, %v611
  %v639 = vsel %vm630, %v611, %v613
  %v640 = vsel %vm630, %v613, %v615
  %v641 = vsel %vm630, %v615, %v617
  %v642 = vsel %vm630, %v617, %v619
  %v643 = vsel %vm630, %v619, %v621
  %v644 = vsel %vm630, %v621, %v623
  %v645 = vsel %vm630, %v623, %v625
  %v646 = vsel %vm630, %v625, %v627
  %v647 = vsel %vm630, %v627, %v629
  %666 = vst [vmem:[#allocation2 + $0x2d0] sm:$0xff] %v631
  %667 = vst [vmem:[#allocation2 + $0x2d8] sm:$0xff] %v632
  %668 = vst [vmem:[#allocation2 + $0x2e0] sm:$0xff] %v633
  %669 = vst [vmem:[#allocation2 + $0x2e8] sm:$0xff] %v634
  %670 = vst [vmem:[#allocation2 + $0x2f0] sm:$0xff] %v635
  %671 = vst [vmem:[#allocation2 + $0x2f8] sm:$0xff] %v636
  %672 = vst [vmem:[#allocation2 + $0x300] sm:$0xff] %v637
  %673 = vst [vmem:[#allocation2 + $0x308] sm:$0xff] %v638
  %674 = vst [vmem:[#allocation2 + $0x310] sm:$0xff] %v639
  %675 = vst [vmem:[#allocation2 + $0x318] sm:$0xff] %v640
  %676 = vst [vmem:[#allocation2 + $0x320] sm:$0xff] %v641
  %677 = vst [vmem:[#allocation2 + $0x328] sm:$0xff] %v642
  %678 = vst [vmem:[#allocation2 + $0x330] sm:$0xff] %v643
  %679 = vst [vmem:[#allocation2 + $0x338] sm:$0xff] %v644
  %680 = vst [vmem:[#allocation2 + $0x340] sm:$0xff] %v645
  %681 = vst [vmem:[#allocation2 + $0x348] sm:$0xff] %v646
  %682 = vst [vmem:[#allocation2 + $0x350] sm:$0xff] %v647
  %683 = vst.msk [vmem:[#allocation2 + $0x358] sm:$0xff] %vm52, %v629
  %v684 = vld [vmem:[%s0] sm:$0xff]
  %v685 = vld [vmem:[%s0 + $0x8] sm:$0xff]
  %v686 = vld [vmem:[%s0 + $0x10] sm:$0xff]
  %v687 = vld [vmem:[%s0 + $0x18] sm:$0xff]
  %v688 = vld [vmem:[%s0 + $0x20] sm:$0xff]
  %v689 = vld [vmem:[%s0 + $0x28] sm:$0xff]
  %v690 = vld [vmem:[%s0 + $0x30] sm:$0xff]
  %v691 = vld [vmem:[%s0 + $0x38] sm:$0xff]
  %v692 = vld [vmem:[%s0 + $0x40] sm:$0xff]
  %v693 = vld [vmem:[%s0 + $0x48] sm:$0xff]
  %v694 = vld [vmem:[%s0 + $0x50] sm:$0xff]
  %v695 = vld [vmem:[%s0 + $0x58] sm:$0xff]
  %v696 = vld [vmem:[%s0 + $0x60] sm:$0xff]
  %v697 = vld [vmem:[%s0 + $0x68] sm:$0xff]
  %v698 = vld [vmem:[%s0 + $0x70] sm:$0xff]
  %v699 = vld [vmem:[%s0 + $0x78] sm:$0xff]
  %v700 = vld [vmem:[%s0 + $0x80] sm:$0xff]
  %v701 = vld [vmem:[%s0 + $0x88] sm:$0xff]
  %v702 = vld [vmem:[%s0 + $0x90] sm:$0xff]
  %722 = vrot.lane.b32.xlu0 %v684, 60
  %v723 = vpop.permute.xlu0 %722
  %724 = vrot.lane.b32.xlu0 %v685, 60
  %v725 = vpop.permute.xlu0 %724
  %726 = vrot.lane.b32.xlu0 %v686, 60
  %v727 = vpop.permute.xlu0 %726
  %728 = vrot.lane.b32.xlu0 %v687, 60
  %v729 = vpop.permute.xlu0 %728
  %730 = vrot.lane.b32.xlu0 %v688, 60
  %v731 = vpop.permute.xlu0 %730
  %732 = vrot.lane.b32.xlu0 %v689, 60
  %v733 = vpop.permute.xlu0 %732
  %734 = vrot.lane.b32.xlu0 %v690, 60
  %v735 = vpop.permute.xlu0 %734
  %736 = vrot.lane.b32.xlu0 %v691, 60
  %v737 = vpop.permute.xlu0 %736
  %738 = vrot.lane.b32.xlu0 %v692, 60
  %v739 = vpop.permute.xlu0 %738
  %740 = vrot.lane.b32.xlu0 %v693, 60
  %v741 = vpop.permute.xlu0 %740
  %742 = vrot.lane.b32.xlu0 %v694, 60
  %v743 = vpop.permute.xlu0 %742
  %744 = vrot.lane.b32.xlu0 %v695, 60
  %v745 = vpop.permute.xlu0 %744
  %746 = vrot.lane.b32.xlu0 %v696, 60
  %v747 = vpop.permute.xlu0 %746
  %748 = vrot.lane.b32.xlu0 %v697, 60
  %v749 = vpop.permute.xlu0 %748
  %750 = vrot.lane.b32.xlu0 %v698, 60
  %v751 = vpop.permute.xlu0 %750
  %752 = vrot.lane.b32.xlu0 %v699, 60
  %v753 = vpop.permute.xlu0 %752
  %754 = vrot.lane.b32.xlu0 %v700, 60
  %v755 = vpop.permute.xlu0 %754
  %756 = vrot.lane.b32.xlu0 %v701, 60
  %v757 = vpop.permute.xlu0 %756
  %758 = vrot.lane.b32.xlu0 %v702, 60
  %v759 = vpop.permute.xlu0 %758
  %vm760 = vcmask 490496
  %v761 = vsel %vm760, %v723, %v725
  %v762 = vsel %vm760, %v725, %v727
  %v763 = vsel %vm760, %v727, %v729
  %v764 = vsel %vm760, %v729, %v731
  %v765 = vsel %vm760, %v731, %v733
  %v766 = vsel %vm760, %v733, %v735
  %v767 = vsel %vm760, %v735, %v737
  %v768 = vsel %vm760, %v737, %v739
  %v769 = vsel %vm760, %v739, %v741
  %v770 = vsel %vm760, %v741, %v743
  %v771 = vsel %vm760, %v743, %v745
  %v772 = vsel %vm760, %v745, %v747
  %v773 = vsel %vm760, %v747, %v749
  %v774 = vsel %vm760, %v749, %v751
  %v775 = vsel %vm760, %v751, %v753
  %v776 = vsel %vm760, %v753, %v755
  %v777 = vsel %vm760, %v755, %v757
  %v778 = vsel %vm760, %v757, %v759
  %797 = vst [vmem:[#allocation2 + $0x360] sm:$0xff] %v761
  %798 = vst [vmem:[#allocation2 + $0x368] sm:$0xff] %v762
  %799 = vst [vmem:[#allocation2 + $0x370] sm:$0xff] %v763
  %800 = vst [vmem:[#allocation2 + $0x378] sm:$0xff] %v764
  %801 = vst [vmem:[#allocation2 + $0x380] sm:$0xff] %v765
  %802 = vst [vmem:[#allocation2 + $0x388] sm:$0xff] %v766
  %803 = vst [vmem:[#allocation2 + $0x390] sm:$0xff] %v767
  %804 = vst [vmem:[#allocation2 + $0x398] sm:$0xff] %v768
  %805 = vst [vmem:[#allocation2 + $0x3a0] sm:$0xff] %v769
  %806 = vst [vmem:[#allocation2 + $0x3a8] sm:$0xff] %v770
  %807 = vst [vmem:[#allocation2 + $0x3b0] sm:$0xff] %v771
  %808 = vst [vmem:[#allocation2 + $0x3b8] sm:$0xff] %v772
  %809 = vst [vmem:[#allocation2 + $0x3c0] sm:$0xff] %v773
  %810 = vst [vmem:[#allocation2 + $0x3c8] sm:$0xff] %v774
  %811 = vst [vmem:[#allocation2 + $0x3d0] sm:$0xff] %v775
  %812 = vst [vmem:[#allocation2 + $0x3d8] sm:$0xff] %v776
  %813 = vst [vmem:[#allocation2 + $0x3e0] sm:$0xff] %v777
  %814 = vst.msk [vmem:[#allocation2 + $0x3e8] sm:$0xff] %vm52, %v778
  %v815 = vld [vmem:[%s0] sm:$0xff]
  %v816 = vld [vmem:[%s0 + $0x8] sm:$0xff]
  %v817 = vld [vmem:[%s0 + $0x10] sm:$0xff]
  %v818 = vld [vmem:[%s0 + $0x18] sm:$0xff]
  %v819 = vld [vmem:[%s0 + $0x20] sm:$0xff]
  %v820 = vld [vmem:[%s0 + $0x28] sm:$0xff]
  %v821 = vld [vmem:[%s0 + $0x30] sm:$0xff]
  %v822 = vld [vmem:[%s0 + $0x38] sm:$0xff]
  %v823 = vld [vmem:[%s0 + $0x40] sm:$0xff]
  %v824 = vld [vmem:[%s0 + $0x48] sm:$0xff]
  %v825 = vld [vmem:[%s0 + $0x50] sm:$0xff]
  %v826 = vld [vmem:[%s0 + $0x58] sm:$0xff]
  %v827 = vld [vmem:[%s0 + $0x60] sm:$0xff]
  %v828 = vld [vmem:[%s0 + $0x68] sm:$0xff]
  %v829 = vld [vmem:[%s0 + $0x70] sm:$0xff]
  %v830 = vld [vmem:[%s0 + $0x78] sm:$0xff]
  %v831 = vld [vmem:[%s0 + $0x80] sm:$0xff]
  %v832 = vld [vmem:[%s0 + $0x88] sm:$0xff]
  %v833 = vld [vmem:[%s0 + $0x90] sm:$0xff]
  %853 = vrot.lane.b32.xlu0 %v815, 59
  %v854 = vpop.permute.xlu0 %853
  %855 = vrot.lane.b32.xlu0 %v816, 59
  %v856 = vpop.permute.xlu0 %855
  %857 = vrot.lane.b32.xlu0 %v817, 59
  %v858 = vpop.permute.xlu0 %857
  %859 = vrot.lane.b32.xlu0 %v818, 59
  %v860 = vpop.permute.xlu0 %859
  %861 = vrot.lane.b32.xlu0 %v819, 59
  %v862 = vpop.permute.xlu0 %861
  %863 = vrot.lane.b32.xlu0 %v820, 59
  %v864 = vpop.permute.xlu0 %863
  %865 = vrot.lane.b32.xlu0 %v821, 59
  %v866 = vpop.permute.xlu0 %865
  %867 = vrot.lane.b32.xlu0 %v822, 59
  %v868 = vpop.permute.xlu0 %867
  %869 = vrot.lane.b32.xlu0 %v823, 59
  %v870 = vpop.permute.xlu0 %869
  %871 = vrot.lane.b32.xlu0 %v824, 59
  %v872 = vpop.permute.xlu0 %871
  %873 = vrot.lane.b32.xlu0 %v825, 59
  %v874 = vpop.permute.xlu0 %873
  %875 = vrot.lane.b32.xlu0 %v826, 59
  %v876 = vpop.permute.xlu0 %875
  %877 = vrot.lane.b32.xlu0 %v827, 59
  %v878 = vpop.permute.xlu0 %877
  %879 = vrot.lane.b32.xlu0 %v828, 59
  %v880 = vpop.permute.xlu0 %879
  %881 = vrot.lane.b32.xlu0 %v829, 59
  %v882 = vpop.permute.xlu0 %881
  %883 = vrot.lane.b32.xlu0 %v830, 59
  %v884 = vpop.permute.xlu0 %883
  %885 = vrot.lane.b32.xlu0 %v831, 59
  %v886 = vpop.permute.xlu0 %885
  %887 = vrot.lane.b32.xlu0 %v832, 59
  %v888 = vpop.permute.xlu0 %887
  %889 = vrot.lane.b32.xlu0 %v833, 59
  %v890 = vpop.permute.xlu0 %889
  %vm891 = vcmask 482304
  %v892 = vsel %vm891, %v854, %v856
  %v893 = vsel %vm891, %v856, %v858
  %v894 = vsel %vm891, %v858, %v860
  %v895 = vsel %vm891, %v860, %v862
  %v896 = vsel %vm891, %v862, %v864
  %v897 = vsel %vm891, %v864, %v866
  %v898 = vsel %vm891, %v866, %v868
  %v899 = vsel %vm891, %v868, %v870
  %v900 = vsel %vm891, %v870, %v872
  %v901 = vsel %vm891, %v872, %v874
  %v902 = vsel %vm891, %v874, %v876
  %v903 = vsel %vm891, %v876, %v878
  %v904 = vsel %vm891, %v878, %v880
  %v905 = vsel %vm891, %v880, %v882
  %v906 = vsel %vm891, %v882, %v884
  %v907 = vsel %vm891, %v884, %v886
  %v908 = vsel %vm891, %v886, %v888
  %v909 = vsel %vm891, %v888, %v890
  %928 = vst [vmem:[#allocation2 + $0x3f0] sm:$0xff] %v892
  %929 = vst [vmem:[#allocation2 + $0x3f8] sm:$0xff] %v893
  %930 = vst [vmem:[#allocation2 + $0x400] sm:$0xff] %v894
  %931 = vst [vmem:[#allocation2 + $0x408] sm:$0xff] %v895
  %932 = vst [vmem:[#allocation2 + $0x410] sm:$0xff] %v896
  %933 = vst [vmem:[#allocation2 + $0x418] sm:$0xff] %v897
  %934 = vst [vmem:[#allocation2 + $0x420] sm:$0xff] %v898
  %935 = vst [vmem:[#allocation2 + $0x428] sm:$0xff] %v899
  %936 = vst [vmem:[#allocation2 + $0x430] sm:$0xff] %v900
  %937 = vst [vmem:[#allocation2 + $0x438] sm:$0xff] %v901
  %938 = vst [vmem:[#allocation2 + $0x440] sm:$0xff] %v902
  %939 = vst [vmem:[#allocation2 + $0x448] sm:$0xff] %v903
  %940 = vst [vmem:[#allocation2 + $0x450] sm:$0xff] %v904
  %941 = vst [vmem:[#allocation2 + $0x458] sm:$0xff] %v905
  %942 = vst [vmem:[#allocation2 + $0x460] sm:$0xff] %v906
  %943 = vst [vmem:[#allocation2 + $0x468] sm:$0xff] %v907
  %944 = vst [vmem:[#allocation2 + $0x470] sm:$0xff] %v908
  %945 = vst.msk [vmem:[#allocation2 + $0x478] sm:$0xff] %vm52, %v909
  %v946 = vld [vmem:[%s0] sm:$0xff]
  %v947 = vld [vmem:[%s0 + $0x8] sm:$0xff]
  %v948 = vld [vmem:[%s0 + $0x10] sm:$0xff]
  %v949 = vld [vmem:[%s0 + $0x18] sm:$0xff]
  %v950 = vld [vmem:[%s0 + $0x20] sm:$0xff]
  %v951 = vld [vmem:[%s0 + $0x28] sm:$0xff]
  %v952 = vld [vmem:[%s0 + $0x30] sm:$0xff]
  %v953 = vld [vmem:[%s0 + $0x38] sm:$0xff]
  %v954 = vld [vmem:[%s0 + $0x40] sm:$0xff]
  %v955 = vld [vmem:[%s0 + $0x48] sm:$0xff]
  %v956 = vld [vmem:[%s0 + $0x50] sm:$0xff]
  %v957 = vld [vmem:[%s0 + $0x58] sm:$0xff]
  %v958 = vld [vmem:[%s0 + $0x60] sm:$0xff]
  %v959 = vld [vmem:[%s0 + $0x68] sm:$0xff]
  %v960 = vld [vmem:[%s0 + $0x70] sm:$0xff]
  %v961 = vld [vmem:[%s0 + $0x78] sm:$0xff]
  %v962 = vld [vmem:[%s0 + $0x80] sm:$0xff]
  %v963 = vld [vmem:[%s0 + $0x88] sm:$0xff]
  %v964 = vld [vmem:[%s0 + $0x90] sm:$0xff]
  %984 = vrot.lane.b32.xlu0 %v946, 58
  %v985 = vpop.permute.xlu0 %984
  %986 = vrot.lane.b32.xlu0 %v947, 58
  %v987 = vpop.permute.xlu0 %986
  %988 = vrot.lane.b32.xlu0 %v948, 58
  %v989 = vpop.permute.xlu0 %988
  %990 = vrot.lane.b32.xlu0 %v949, 58
  %v991 = vpop.permute.xlu0 %990
  %992 = vrot.lane.b32.xlu0 %v950, 58
  %v993 = vpop.permute.xlu0 %992
  %994 = vrot.lane.b32.xlu0 %v951, 58
  %v995 = vpop.permute.xlu0 %994
  %996 = vrot.lane.b32.xlu0 %v952, 58
  %v997 = vpop.permute.xlu0 %996
  %998 = vrot.lane.b32.xlu0 %v953, 58
  %v999 = vpop.permute.xlu0 %998
  %1000 = vrot.lane.b32.xlu0 %v954, 58
  %v1001 = vpop.permute.xlu0 %1000
  %1002 = vrot.lane.b32.xlu0 %v955, 58
  %v1003 = vpop.permute.xlu0 %1002
  %1004 = vrot.lane.b32.xlu0 %v956, 58
  %v1005 = vpop.permute.xlu0 %1004
  %1006 = vrot.lane.b32.xlu0 %v957, 58
  %v1007 = vpop.permute.xlu0 %1006
  %1008 = vrot.lane.b32.xlu0 %v958, 58
  %v1009 = vpop.permute.xlu0 %1008
  %1010 = vrot.lane.b32.xlu0 %v959, 58
  %v1011 = vpop.permute.xlu0 %1010
  %1012 = vrot.lane.b32.xlu0 %v960, 58
  %v1013 = vpop.permute.xlu0 %1012
  %1014 = vrot.lane.b32.xlu0 %v961, 58
  %v1015 = vpop.permute.xlu0 %1014
  %1016 = vrot.lane.b32.xlu0 %v962, 58
  %v1017 = vpop.permute.xlu0 %1016
  %1018 = vrot.lane.b32.xlu0 %v963, 58
  %v1019 = vpop.permute.xlu0 %1018
  %1020 = vrot.lane.b32.xlu0 %v964, 58
  %v1021 = vpop.permute.xlu0 %1020
  %vm1022 = vcmask 474112
  %v1023 = vsel %vm1022, %v985, %v987
  %v1024 = vsel %vm1022, %v987, %v989
  %v1025 = vsel %vm1022, %v989, %v991
  %v1026 = vsel %vm1022, %v991, %v993
  %v1027 = vsel %vm1022, %v993, %v995
  %v1028 = vsel %vm1022, %v995, %v997
  %v1029 = vsel %vm1022, %v997, %v999
  %v1030 = vsel %vm1022, %v999, %v1001
  %v1031 = vsel %vm1022, %v1001, %v1003
  %v1032 = vsel %vm1022, %v1003, %v1005
  %v1033 = vsel %vm1022, %v1005, %v1007
  %v1034 = vsel %vm1022, %v1007, %v1009
  %v1035 = vsel %vm1022, %v1009, %v1011
  %v1036 = vsel %vm1022, %v1011, %v1013
  %v1037 = vsel %vm1022, %v1013, %v1015
  %v1038 = vsel %vm1022, %v1015, %v1017
  %v1039 = vsel %vm1022, %v1017, %v1019
  %v1040 = vsel %vm1022, %v1019, %v1021
  %1059 = vst [vmem:[#allocation2 + $0x480] sm:$0xff] %v1023
  %1060 = vst [vmem:[#allocation2 + $0x488] sm:$0xff] %v1024
  %1061 = vst [vmem:[#allocation2 + $0x490] sm:$0xff] %v1025
  %1062 = vst [vmem:[#allocation2 + $0x498] sm:$0xff] %v1026
  %1063 = vst [vmem:[#allocation2 + $0x4a0] sm:$0xff] %v1027
  %1064 = vst [vmem:[#allocation2 + $0x4a8] sm:$0xff] %v1028
  %1065 = vst [vmem:[#allocation2 + $0x4b0] sm:$0xff] %v1029
  %1066 = vst [vmem:[#allocation2 + $0x4b8] sm:$0xff] %v1030
  %1067 = vst [vmem:[#allocation2 + $0x4c0] sm:$0xff] %v1031
  %1068 = vst [vmem:[#allocation2 + $0x4c8] sm:$0xff] %v1032
  %1069 = vst [vmem:[#allocation2 + $0x4d0] sm:$0xff] %v1033
  %1070 = vst [vmem:[#allocation2 + $0x4d8] sm:$0xff] %v1034
  %1071 = vst [vmem:[#allocation2 + $0x4e0] sm:$0xff] %v1035
  %1072 = vst [vmem:[#allocation2 + $0x4e8] sm:$0xff] %v1036
  %1073 = vst [vmem:[#allocation2 + $0x4f0] sm:$0xff] %v1037
  %1074 = vst [vmem:[#allocation2 + $0x4f8] sm:$0xff] %v1038
  %1075 = vst [vmem:[#allocation2 + $0x500] sm:$0xff] %v1039
  %1076 = vst.msk [vmem:[#allocation2 + $0x508] sm:$0xff] %vm52, %v1040
  %v1077 = vld [vmem:[%s1] sm:$0x7]
  %v1078 = vld [vmem:[#allocation2] sm:$0xff]
  %v1079 = vld [vmem:[#allocation2 + $0x8] sm:$0xff]
  %v1080 = vld [vmem:[#allocation2 + $0x10] sm:$0xff]
  %v1081 = vld [vmem:[#allocation2 + $0x18] sm:$0xff]
  %v1082 = vld [vmem:[#allocation2 + $0x20] sm:$0xff]
  %v1083 = vld [vmem:[#allocation2 + $0x28] sm:$0xff]
  %v1084 = vld [vmem:[#allocation2 + $0x30] sm:$0xff]
  %v1085 = vld [vmem:[#allocation2 + $0x38] sm:$0xff]
  %v1086 = vld [vmem:[#allocation2 + $0x40] sm:$0xff]
  %v1087 = vld [vmem:[#allocation2 + $0x48] sm:$0xff]
  %v1088 = vld [vmem:[#allocation2 + $0x50] sm:$0xff]
  %v1089 = vld [vmem:[#allocation2 + $0x58] sm:$0xff]
  %v1090 = vld [vmem:[#allocation2 + $0x60] sm:$0xff]
  %v1091 = vld [vmem:[#allocation2 + $0x68] sm:$0xff]
  %v1092 = vld [vmem:[#allocation2 + $0x70] sm:$0xff]
  %v1093 = vld [vmem:[#allocation2 + $0x78] sm:$0xff]
  %v1094 = vld [vmem:[#allocation2 + $0x80] sm:$0xff]
  %v1095 = vld [vmem:[#allocation2 + $0x88] sm:$0xff]
  %v1096 = vld [vmem:[#allocation2 + $0x90] sm:$0xff]
  %v1097 = vld [vmem:[#allocation2 + $0x98] sm:$0xff]
  %v1098 = vld [vmem:[#allocation2 + $0xa0] sm:$0xff]
  %v1099 = vld [vmem:[#allocation2 + $0xa8] sm:$0xff]
  %v1100 = vld [vmem:[#allocation2 + $0xb0] sm:$0xff]
  %v1101 = vld [vmem:[#allocation2 + $0xb8] sm:$0xff]
  %v1102 = vld [vmem:[#allocation2 + $0xc0] sm:$0xff]
  %v1103 = vld [vmem:[#allocation2 + $0xc8] sm:$0xff]
  %v1104 = vld [vmem:[#allocation2 + $0xd0] sm:$0xff]
  %v1105 = vld [vmem:[#allocation2 + $0xd8] sm:$0xff]
  %v1106 = vld [vmem:[#allocation2 + $0xe0] sm:$0xff]
  %v1107 = vld [vmem:[#allocation2 + $0xe8] sm:$0xff]
  %v1108 = vld [vmem:[#allocation2 + $0xf0] sm:$0xff]
  %v1109 = vld [vmem:[#allocation2 + $0xf8] sm:$0xff]
  %v1110 = vld [vmem:[#allocation2 + $0x100] sm:$0xff]
  %v1111 = vld [vmem:[#allocation2 + $0x108] sm:$0xff]
  %v1112 = vld [vmem:[#allocation2 + $0x110] sm:$0xff]
  %v1113 = vld [vmem:[#allocation2 + $0x118] sm:$0xff]
  %v1114 = vld [vmem:[#allocation2 + $0x120] sm:$0xff]
  %v1115 = vld [vmem:[#allocation2 + $0x128] sm:$0xff]
  %v1116 = vld [vmem:[#allocation2 + $0x130] sm:$0xff]
  %v1117 = vld [vmem:[#allocation2 + $0x138] sm:$0xff]
  %v1118 = vld [vmem:[#allocation2 + $0x140] sm:$0xff]
  %v1119 = vld [vmem:[#allocation2 + $0x148] sm:$0xff]
  %v1120 = vld [vmem:[#allocation2 + $0x150] sm:$0xff]
  %v1121 = vld [vmem:[#allocation2 + $0x158] sm:$0xff]
  %v1122 = vld [vmem:[#allocation2 + $0x160] sm:$0xff]
  %v1123 = vld [vmem:[#allocation2 + $0x168] sm:$0xff]
  %v1124 = vld [vmem:[#allocation2 + $0x170] sm:$0xff]
  %v1125 = vld [vmem:[#allocation2 + $0x178] sm:$0xff]
  %v1126 = vld [vmem:[#allocation2 + $0x180] sm:$0xff]
  %v1127 = vld [vmem:[#allocation2 + $0x188] sm:$0xff]
  %v1128 = vld [vmem:[#allocation2 + $0x190] sm:$0xff]
  %v1129 = vld [vmem:[#allocation2 + $0x198] sm:$0xff]
  %v1130 = vld [vmem:[#allocation2 + $0x1a0] sm:$0xff]
  %v1131 = vld [vmem:[#allocation2 + $0x1a8] sm:$0xff]
  %v1132 = vld [vmem:[#allocation2 + $0x1b0] sm:$0xff]
  %v1133 = vld [vmem:[#allocation2 + $0x1b8] sm:$0xff]
  %v1134 = vld [vmem:[#allocation2 + $0x1c0] sm:$0xff]
  %v1135 = vld [vmem:[#allocation2 + $0x1c8] sm:$0xff]
  %v1136 = vld [vmem:[#allocation2 + $0x1d0] sm:$0xff]
  %v1137 = vld [vmem:[#allocation2 + $0x1d8] sm:$0xff]
  %v1138 = vld [vmem:[#allocation2 + $0x1e0] sm:$0xff]
  %v1139 = vld [vmem:[#allocation2 + $0x1e8] sm:$0xff]
  %v1140 = vld [vmem:[#allocation2 + $0x1f0] sm:$0xff]
  %v1141 = vld [vmem:[#allocation2 + $0x1f8] sm:$0xff]
  %v1142 = vld [vmem:[#allocation2 + $0x200] sm:$0xff]
  %v1143 = vld [vmem:[#allocation2 + $0x208] sm:$0xff]
  %v1144 = vld [vmem:[#allocation2 + $0x210] sm:$0xff]
  %v1145 = vld [vmem:[#allocation2 + $0x218] sm:$0xff]
  %v1146 = vld [vmem:[#allocation2 + $0x220] sm:$0xff]
  %v1147 = vld [vmem:[#allocation2 + $0x228] sm:$0xff]
  %v1148 = vld [vmem:[#allocation2 + $0x230] sm:$0xff]
  %v1149 = vld [vmem:[#allocation2 + $0x238] sm:$0xff]
  %v1150 = vld [vmem:[#allocation2 + $0x240] sm:$0xff]
  %v1151 = vld [vmem:[#allocation2 + $0x248] sm:$0xff]
  %v1152 = vld [vmem:[#allocation2 + $0x250] sm:$0xff]
  %v1153 = vld [vmem:[#allocation2 + $0x258] sm:$0xff]
  %v1154 = vld [vmem:[#allocation2 + $0x260] sm:$0xff]
  %v1155 = vld [vmem:[#allocation2 + $0x268] sm:$0xff]
  %v1156 = vld [vmem:[#allocation2 + $0x270] sm:$0xff]
  %v1157 = vld [vmem:[#allocation2 + $0x278] sm:$0xff]
  %v1158 = vld [vmem:[#allocation2 + $0x280] sm:$0xff]
  %v1159 = vld [vmem:[#allocation2 + $0x288] sm:$0xff]
  %v1160 = vld [vmem:[#allocation2 + $0x290] sm:$0xff]
  %v1161 = vld [vmem:[#allocation2 + $0x298] sm:$0xff]
  %v1162 = vld [vmem:[#allocation2 + $0x2a0] sm:$0xff]
  %v1163 = vld [vmem:[#allocation2 + $0x2a8] sm:$0xff]
  %v1164 = vld [vmem:[#allocation2 + $0x2b0] sm:$0xff]
  %v1165 = vld [vmem:[#allocation2 + $0x2b8] sm:$0xff]
  %v1166 = vld [vmem:[#allocation2 + $0x2c0] sm:$0xff]
  %v1167 = vld [vmem:[#allocation2 + $0x2c8] sm:$0xff]
  %v1168 = vld [vmem:[#allocation2 + $0x2d0] sm:$0xff]
  %v1169 = vld [vmem:[#allocation2 + $0x2d8] sm:$0xff]
  %v1170 = vld [vmem:[#allocation2 + $0x2e0] sm:$0xff]
  %v1171 = vld [vmem:[#allocation2 + $0x2e8] sm:$0xff]
  %v1172 = vld [vmem:[#allocation2 + $0x2f0] sm:$0xff]
  %v1173 = vld [vmem:[#allocation2 + $0x2f8] sm:$0xff]
  %v1174 = vld [vmem:[#allocation2 + $0x300] sm:$0xff]
  %v1175 = vld [vmem:[#allocation2 + $0x308] sm:$0xff]
  %v1176 = vld [vmem:[#allocation2 + $0x310] sm:$0xff]
  %v1177 = vld [vmem:[#allocation2 + $0x318] sm:$0xff]
  %v1178 = vld [vmem:[#allocation2 + $0x320] sm:$0xff]
  %v1179 = vld [vmem:[#allocation2 + $0x328] sm:$0xff]
  %v1180 = vld [vmem:[#allocation2 + $0x330] sm:$0xff]
  %v1181 = vld [vmem:[#allocation2 + $0x338] sm:$0xff]
  %v1182 = vld [vmem:[#allocation2 + $0x340] sm:$0xff]
  %v1183 = vld [vmem:[#allocation2 + $0x348] sm:$0xff]
  %v1184 = vld [vmem:[#allocation2 + $0x350] sm:$0xff]
  %v1185 = vld [vmem:[#allocation2 + $0x358] sm:$0xff]
  %v1186 = vld [vmem:[#allocation2 + $0x360] sm:$0xff]
  %v1187 = vld [vmem:[#allocation2 + $0x368] sm:$0xff]
  %v1188 = vld [vmem:[#allocation2 + $0x370] sm:$0xff]
  %v1189 = vld [vmem:[#allocation2 + $0x378] sm:$0xff]
  %v1190 = vld [vmem:[#allocation2 + $0x380] sm:$0xff]
  %v1191 = vld [vmem:[#allocation2 + $0x388] sm:$0xff]
  %v1192 = vld [vmem:[#allocation2 + $0x390] sm:$0xff]
  %v1193 = vld [vmem:[#allocation2 + $0x398] sm:$0xff]
  %v1194 = vld [vmem:[#allocation2 + $0x3a0] sm:$0xff]
  %v1195 = vld [vmem:[#allocation2 + $0x3a8] sm:$0xff]
  %v1196 = vld [vmem:[#allocation2 + $0x3b0] sm:$0xff]
  %v1197 = vld [vmem:[#allocation2 + $0x3b8] sm:$0xff]
  %v1198 = vld [vmem:[#allocation2 + $0x3c0] sm:$0xff]
  %v1199 = vld [vmem:[#allocation2 + $0x3c8] sm:$0xff]
  %v1200 = vld [vmem:[#allocation2 + $0x3d0] sm:$0xff]
  %v1201 = vld [vmem:[#allocation2 + $0x3d8] sm:$0xff]
  %v1202 = vld [vmem:[#allocation2 + $0x3e0] sm:$0xff]
  %v1203 = vld [vmem:[#allocation2 + $0x3e8] sm:$0xff]
  %v1204 = vld [vmem:[#allocation2 + $0x3f0] sm:$0xff]
  %v1205 = vld [vmem:[#allocation2 + $0x3f8] sm:$0xff]
  %v1206 = vld [vmem:[#allocation2 + $0x400] sm:$0xff]
  %v1207 = vld [vmem:[#allocation2 + $0x408] sm:$0xff]
  %v1208 = vld [vmem:[#allocation2 + $0x410] sm:$0xff]
  %v1209 = vld [vmem:[#allocation2 + $0x418] sm:$0xff]
  %v1210 = vld [vmem:[#allocation2 + $0x420] sm:$0xff]
  %v1211 = vld [vmem:[#allocation2 + $0x428] sm:$0xff]
  %v1212 = vld [vmem:[#allocation2 + $0x430] sm:$0xff]
  %v1213 = vld [vmem:[#allocation2 + $0x438] sm:$0xff]
  %v1214 = vld [vmem:[#allocation2 + $0x440] sm:$0xff]
  %v1215 = vld [vmem:[#allocation2 + $0x448] sm:$0xff]
  %v1216 = vld [vmem:[#allocation2 + $0x450] sm:$0xff]
  %v1217 = vld [vmem:[#allocation2 + $0x458] sm:$0xff]
  %v1218 = vld [vmem:[#allocation2 + $0x460] sm:$0xff]
  %v1219 = vld [vmem:[#allocation2 + $0x468] sm:$0xff]
  %v1220 = vld [vmem:[#allocation2 + $0x470] sm:$0xff]
  %v1221 = vld [vmem:[#allocation2 + $0x478] sm:$0xff]
  %v1222 = vld [vmem:[#allocation2 + $0x480] sm:$0xff]
  %v1223 = vld [vmem:[#allocation2 + $0x488] sm:$0xff]
  %v1224 = vld [vmem:[#allocation2 + $0x490] sm:$0xff]
  %v1225 = vld [vmem:[#allocation2 + $0x498] sm:$0xff]
  %v1226 = vld [vmem:[#allocation2 + $0x4a0] sm:$0xff]
  %v1227 = vld [vmem:[#allocation2 + $0x4a8] sm:$0xff]
  %v1228 = vld [vmem:[#allocation2 + $0x4b0] sm:$0xff]
  %v1229 = vld [vmem:[#allocation2 + $0x4b8] sm:$0xff]
  %v1230 = vld [vmem:[#allocation2 + $0x4c0] sm:$0xff]
  %v1231 = vld [vmem:[#allocation2 + $0x4c8] sm:$0xff]
  %v1232 = vld [vmem:[#allocation2 + $0x4d0] sm:$0xff]
  %v1233 = vld [vmem:[#allocation2 + $0x4d8] sm:$0xff]
  %v1234 = vld [vmem:[#allocation2 + $0x4e0] sm:$0xff]
  %v1235 = vld [vmem:[#allocation2 + $0x4e8] sm:$0xff]
  %v1236 = vld [vmem:[#allocation2 + $0x4f0] sm:$0xff]
  %v1237 = vld [vmem:[#allocation2 + $0x4f8] sm:$0xff]
  %v1238 = vld [vmem:[#allocation2 + $0x500] sm:$0xff]
  %v1239 = vld [vmem:[#allocation2 + $0x508] sm:$0xff]
  %v1240 = vld [vmem:[%s3] sm:$0x7]
  %1242 = vset.pattern.permute.xlu0 0
  %1243 = vperm.xlu0 %1242, %v1240
  %v1244 = vpop.permute.xlu0 %1243
  %vm1246 = vcmask 588800
  %v1248 = vsel %vm1246, %v1077, 0
  %1250 = vmatprep.subr.mxu0 0.0
  %1251 = vmatpush1.msra.mxu0 0.0
  %1252 = vmatprep.subr.mxu0 0.0
  %1253 = vmatpush1.msra.mxu0 0.0
  %1254 = vmatprep.subr.mxu0 0.0
  %1255 = vmatpush1.msra.mxu0 0.0
  %1256 = vmatprep.subr.mxu0 0.0
  %1257 = vmatpush1.msra.mxu0 0.0
  %1258 = vmatprep.subr.mxu0 0.0
  %1259 = vmatpush1.msra.mxu0 0.0
  %1260 = vmatprep.subr.mxu0 0.0
  %1261 = vmatpush1.msra.mxu0 0.0
  %1262 = vmatprep.subr.mxu0 0.0
  %1263 = vmatpush1.msra.mxu0 0.0
  %1264 = vmatprep.subr.mxu0 %v1223
  %1265 = vmatpush1.msra.mxu0 %v1222
  %1266 = vmatprep.subr.mxu0 %v1205
  %1267 = vmatpush1.msra.mxu0 %v1204
  %1268 = vmatprep.subr.mxu0 %v1187
  %1269 = vmatpush1.msra.mxu0 %v1186
  %1270 = vmatprep.subr.mxu0 %v1169
  %1271 = vmatpush1.msra.mxu0 %v1168
  %1272 = vmatprep.subr.mxu0 %v1151
  %1273 = vmatpush1.msra.mxu0 %v1150
  %1274 = vmatprep.subr.mxu0 %v1133
  %1275 = vmatpush1.msra.mxu0 %v1132
  %1276 = vmatprep.subr.mxu0 %v1115
  %1277 = vmatpush1.msra.mxu0 %v1114
  %1278 = vmatprep.subr.mxu0 %v1097
  %1279 = vmatpush1.msra.mxu0 %v1096
  %1280 = vmatprep.subr.mxu0 %v1079
  %1281 = vmatpush1.msra.mxu0 %v1078
  %1282 = vmatprep.subr.mxu0 0.0
  %1283 = vmatpush2.msra.mxu0 0.0
  %1284 = vmatprep.subr.mxu0 0.0
  %1285 = vmatpush2.msra.mxu0 0.0
  %1286 = vmatprep.subr.mxu0 0.0
  %1287 = vmatpush2.msra.mxu0 0.0
  %1288 = vmatprep.subr.mxu0 0.0
  %1289 = vmatpush2.msra.mxu0 0.0
  %1290 = vmatprep.subr.mxu0 0.0
  %1291 = vmatpush2.msra.mxu0 0.0
  %1292 = vmatprep.subr.mxu0 0.0
  %1293 = vmatpush2.msra.mxu0 0.0
  %1294 = vmatprep.subr.mxu0 0.0
  %1295 = vmatpush2.msra.mxu0 0.0
  %1296 = vmatprep.subr.mxu0 0.0
  %1297 = vmatpush2.msra.mxu0 0.0
  %1298 = vmatprep.subr.mxu0 0.0
  %1299 = vmatpush2.msra.mxu0 0.0
  %1300 = vmatprep.subr.mxu0 0.0
  %1301 = vmatpush2.msra.mxu0 0.0
  %1302 = vmatprep.subr.mxu0 0.0
  %1303 = vmatpush2.msra.mxu0 0.0
  %1304 = vmatprep.subr.mxu0 0.0
  %1305 = vmatpush2.msra.mxu0 0.0
  %1306 = vmatprep.subr.mxu0 0.0
  %1307 = vmatpush2.msra.mxu0 0.0
  %1308 = vmatprep.subr.mxu0 0.0
  %1309 = vmatpush2.msra.mxu0 0.0
  %1310 = vmatprep.subr.mxu0 0.0
  %1311 = vmatpush2.msra.mxu0 0.0
  %1312 = vmatprep.subr.mxu0 0.0
  %1313 = vmatpush2.msra.mxu0 0.0
  %1314 = vmatprep.mubr.f32.mxu0 0.0
  %1315 = vmatmul.mubr.f32.gmra.mxu0 %v1248
  %v1316 = vpop.f32.mrf.mxu0
  %v1317 = vadd.f32 %v1244, %v1316
  %v1318 = vpop.f32.mrf.mxu0
  %v1319 = vadd.f32 %v1244, %v1318
  %1320 = vdwg.mxu0
  %1321 = vmatprep.subr.mxu0 0.0
  %1322 = vmatpush1.msra.mxu0 0.0
  %1323 = vmatprep.subr.mxu0 0.0
  %1324 = vmatpush1.msra.mxu0 0.0
  %1325 = vmatprep.subr.mxu0 0.0
  %1326 = vmatpush1.msra.mxu0 0.0
  %1327 = vmatprep.subr.mxu0 0.0
  %1328 = vmatpush1.msra.mxu0 0.0
  %1329 = vmatprep.subr.mxu0 0.0
  %1330 = vmatpush1.msra.mxu0 0.0
  %1331 = vmatprep.subr.mxu0 0.0
  %1332 = vmatpush1.msra.mxu0 0.0
  %1333 = vmatprep.subr.mxu0 0.0
  %1334 = vmatpush1.msra.mxu0 0.0
  %1335 = vmatprep.subr.mxu0 %v1225
  %1336 = vmatpush1.msra.mxu0 %v1224
  %1337 = vmatprep.subr.mxu0 %v1207
  %1338 = vmatpush1.msra.mxu0 %v1206
  %1339 = vmatprep.subr.mxu0 %v1189
  %1340 = vmatpush1.msra.mxu0 %v1188
  %1341 = vmatprep.subr.mxu0 %v1171
  %1342 = vmatpush1.msra.mxu0 %v1170
  %1343 = vmatprep.subr.mxu0 %v1153
  %1344 = vmatpush1.msra.mxu0 %v1152
  %1345 = vmatprep.subr.mxu0 %v1135
  %1346 = vmatpush1.msra.mxu0 %v1134
  %1347 = vmatprep.subr.mxu0 %v1117
  %1348 = vmatpush1.msra.mxu0 %v1116
  %1349 = vmatprep.subr.mxu0 %v1099
  %1350 = vmatpush1.msra.mxu0 %v1098
  %1351 = vmatprep.subr.mxu0 %v1081
  %1352 = vmatpush1.msra.mxu0 %v1080
  %1353 = vmatprep.subr.mxu0 0.0
  %1354 = vmatpush2.msra.mxu0 0.0
  %1355 = vmatprep.subr.mxu0 0.0
  %1356 = vmatpush2.msra.mxu0 0.0
  %1357 = vmatprep.subr.mxu0 0.0
  %1358 = vmatpush2.msra.mxu0 0.0
  %1359 = vmatprep.subr.mxu0 0.0
  %1360 = vmatpush2.msra.mxu0 0.0
  %1361 = vmatprep.subr.mxu0 0.0
  %1362 = vmatpush2.msra.mxu0 0.0
  %1363 = vmatprep.subr.mxu0 0.0
  %1364 = vmatpush2.msra.mxu0 0.0
  %1365 = vmatprep.subr.mxu0 0.0
  %1366 = vmatpush2.msra.mxu0 0.0
  %1367 = vmatprep.subr.mxu0 0.0
  %1368 = vmatpush2.msra.mxu0 0.0
  %1369 = vmatprep.subr.mxu0 0.0
  %1370 = vmatpush2.msra.mxu0 0.0
  %1371 = vmatprep.subr.mxu0 0.0
  %1372 = vmatpush2.msra.mxu0 0.0
  %1373 = vmatprep.subr.mxu0 0.0
  %1374 = vmatpush2.msra.mxu0 0.0
  %1375 = vmatprep.subr.mxu0 0.0
  %1376 = vmatpush2.msra.mxu0 0.0
  %1377 = vmatprep.subr.mxu0 0.0
  %1378 = vmatpush2.msra.mxu0 0.0
  %1379 = vmatprep.subr.mxu0 0.0
  %1380 = vmatpush2.msra.mxu0 0.0
  %1381 = vmatprep.subr.mxu0 0.0
  %1382 = vmatpush2.msra.mxu0 0.0
  %1383 = vmatprep.subr.mxu0 0.0
  %1384 = vmatpush2.msra.mxu0 0.0
  %1385 = vmatprep.mubr.f32.mxu0 0.0
  %1386 = vmatmul.mubr.f32.gmra.mxu0 %v1248
  %v1387 = vpop.f32.mrf.mxu0
  %v1388 = vadd.f32 %v1244, %v1387
  %v1389 = vpop.f32.mrf.mxu0
  %v1390 = vadd.f32 %v1244, %v1389
  %1391 = vdwg.mxu0
  %1392 = vmatprep.subr.mxu0 0.0
  %1393 = vmatpush1.msra.mxu0 0.0
  %1394 = vmatprep.subr.mxu0 0.0
  %1395 = vmatpush1.msra.mxu0 0.0
  %1396 = vmatprep.subr.mxu0 0.0
  %1397 = vmatpush1.msra.mxu0 0.0
  %1398 = vmatprep.subr.mxu0 0.0
  %1399 = vmatpush1.msra.mxu0 0.0
  %1400 = vmatprep.subr.mxu0 0.0
  %1401 = vmatpush1.msra.mxu0 0.0
  %1402 = vmatprep.subr.mxu0 0.0
  %1403 = vmatpush1.msra.mxu0 0.0
  %1404 = vmatprep.subr.mxu0 0.0
  %1405 = vmatpush1.msra.mxu0 0.0
  %1406 = vmatprep.subr.mxu0 %v1227
  %1407 = vmatpush1.msra.mxu0 %v1226
  %1408 = vmatprep.subr.mxu0 %v1209
  %1409 = vmatpush1.msra.mxu0 %v1208
  %1410 = vmatprep.subr.mxu0 %v1191
  %1411 = vmatpush1.msra.mxu0 %v1190
  %1412 = vmatprep.subr.mxu0 %v1173
  %1413 = vmatpush1.msra.mxu0 %v1172
  %1414 = vmatprep.subr.mxu0 %v1155
  %1415 = vmatpush1.msra.mxu0 %v1154
  %1416 = vmatprep.subr.mxu0 %v1137
  %1417 = vmatpush1.msra.mxu0 %v1136
  %1418 = vmatprep.subr.mxu0 %v1119
  %1419 = vmatpush1.msra.mxu0 %v1118
  %1420 = vmatprep.subr.mxu0 %v1101
  %1421 = vmatpush1.msra.mxu0 %v1100
  %1422 = vmatprep.subr.mxu0 %v1083
  %1423 = vmatpush1.msra.mxu0 %v1082
  %1424 = vmatprep.subr.mxu0 0.0
  %1425 = vmatpush2.msra.mxu0 0.0
  %1426 = vmatprep.subr.mxu0 0.0
  %1427 = vmatpush2.msra.mxu0 0.0
  %1428 = vmatprep.subr.mxu0 0.0
  %1429 = vmatpush2.msra.mxu0 0.0
  %1430 = vmatprep.subr.mxu0 0.0
  %1431 = vmatpush2.msra.mxu0 0.0
  %1432 = vmatprep.subr.mxu0 0.0
  %1433 = vmatpush2.msra.mxu0 0.0
  %1434 = vmatprep.subr.mxu0 0.0
  %1435 = vmatpush2.msra.mxu0 0.0
  %1436 = vmatprep.subr.mxu0 0.0
  %1437 = vmatpush2.msra.mxu0 0.0
  %1438 = vmatprep.subr.mxu0 0.0
  %1439 = vmatpush2.msra.mxu0 0.0
  %1440 = vmatprep.subr.mxu0 0.0
  %1441 = vmatpush2.msra.mxu0 0.0
  %1442 = vmatprep.subr.mxu0 0.0
  %1443 = vmatpush2.msra.mxu0 0.0
  %1444 = vmatprep.subr.mxu0 0.0
  %1445 = vmatpush2.msra.mxu0 0.0
  %1446 = vmatprep.subr.mxu0 0.0
  %1447 = vmatpush2.msra.mxu0 0.0
  %1448 = vmatprep.subr.mxu0 0.0
  %1449 = vmatpush2.msra.mxu0 0.0
  %1450 = vmatprep.subr.mxu0 0.0
  %1451 = vmatpush2.msra.mxu0 0.0
  %1452 = vmatprep.subr.mxu0 0.0
  %1453 = vmatpush2.msra.mxu0 0.0
  %1454 = vmatprep.subr.mxu0 0.0
  %1455 = vmatpush2.msra.mxu0 0.0
  %1456 = vmatprep.mubr.f32.mxu0 0.0
  %1457 = vmatmul.mubr.f32.gmra.mxu0 %v1248
  %v1458 = vpop.f32.mrf.mxu0
  %v1459 = vadd.f32 %v1244, %v1458
  %v1460 = vpop.f32.mrf.mxu0
  %v1461 = vadd.f32 %v1244, %v1460
  %1462 = vdwg.mxu0
  %1463 = vmatprep.subr.mxu0 0.0
  %1464 = vmatpush1.msra.mxu0 0.0
  %1465 = vmatprep.subr.mxu0 0.0
  %1466 = vmatpush1.msra.mxu0 0.0
  %1467 = vmatprep.subr.mxu0 0.0
  %1468 = vmatpush1.msra.mxu0 0.0
  %1469 = vmatprep.subr.mxu0 0.0
  %1470 = vmatpush1.msra.mxu0 0.0
  %1471 = vmatprep.subr.mxu0 0.0
  %1472 = vmatpush1.msra.mxu0 0.0
  %1473 = vmatprep.subr.mxu0 0.0
  %1474 = vmatpush1.msra.mxu0 0.0
  %1475 = vmatprep.subr.mxu0 0.0
  %1476 = vmatpush1.msra.mxu0 0.0
  %1477 = vmatprep.subr.mxu0 %v1229
  %1478 = vmatpush1.msra.mxu0 %v1228
  %1479 = vmatprep.subr.mxu0 %v1211
  %1480 = vmatpush1.msra.mxu0 %v1210
  %1481 = vmatprep.subr.mxu0 %v1193
  %1482 = vmatpush1.msra.mxu0 %v1192
  %1483 = vmatprep.subr.mxu0 %v1175
  %1484 = vmatpush1.msra.mxu0 %v1174
  %1485 = vmatprep.subr.mxu0 %v1157
  %1486 = vmatpush1.msra.mxu0 %v1156
  %1487 = vmatprep.subr.mxu0 %v1139
  %1488 = vmatpush1.msra.mxu0 %v1138
  %1489 = vmatprep.subr.mxu0 %v1121
  %1490 = vmatpush1.msra.mxu0 %v1120
  %1491 = vmatprep.subr.mxu0 %v1103
  %1492 = vmatpush1.msra.mxu0 %v1102
  %1493 = vmatprep.subr.mxu0 %v1085
  %1494 = vmatpush1.msra.mxu0 %v1084
  %1495 = vmatprep.subr.mxu0 0.0
  %1496 = vmatpush2.msra.mxu0 0.0
  %1497 = vmatprep.subr.mxu0 0.0
  %1498 = vmatpush2.msra.mxu0 0.0
  %1499 = vmatprep.subr.mxu0 0.0
  %1500 = vmatpush2.msra.mxu0 0.0
  %1501 = vmatprep.subr.mxu0 0.0
  %1502 = vmatpush2.msra.mxu0 0.0
  %1503 = vmatprep.subr.mxu0 0.0
  %1504 = vmatpush2.msra.mxu0 0.0
  %1505 = vmatprep.subr.mxu0 0.0
  %1506 = vmatpush2.msra.mxu0 0.0
  %1507 = vmatprep.subr.mxu0 0.0
  %1508 = vmatpush2.msra.mxu0 0.0
  %1509 = vmatprep.subr.mxu0 0.0
  %1510 = vmatpush2.msra.mxu0 0.0
  %1511 = vmatprep.subr.mxu0 0.0
  %1512 = vmatpush2.msra.mxu0 0.0
  %1513 = vmatprep.subr.mxu0 0.0
  %1514 = vmatpush2.msra.mxu0 0.0
  %1515 = vmatprep.subr.mxu0 0.0
  %1516 = vmatpush2.msra.mxu0 0.0
  %1517 = vmatprep.subr.mxu0 0.0
  %1518 = vmatpush2.msra.mxu0 0.0
  %1519 = vmatprep.subr.mxu0 0.0
  %1520 = vmatpush2.msra.mxu0 0.0
  %1521 = vmatprep.subr.mxu0 0.0
  %1522 = vmatpush2.msra.mxu0 0.0
  %1523 = vmatprep.subr.mxu0 0.0
  %1524 = vmatpush2.msra.mxu0 0.0
  %1525 = vmatprep.subr.mxu0 0.0
  %1526 = vmatpush2.msra.mxu0 0.0
  %1527 = vmatprep.mubr.f32.mxu0 0.0
  %1528 = vmatmul.mubr.f32.gmra.mxu0 %v1248
  %v1529 = vpop.f32.mrf.mxu0
  %v1530 = vadd.f32 %v1244, %v1529
  %v1531 = vpop.f32.mrf.mxu0
  %v1532 = vadd.f32 %v1244, %v1531
  %1533 = vdwg.mxu0
  %1534 = vmatprep.subr.mxu0 0.0
  %1535 = vmatpush1.msra.mxu0 0.0
  %1536 = vmatprep.subr.mxu0 0.0
  %1537 = vmatpush1.msra.mxu0 0.0
  %1538 = vmatprep.subr.mxu0 0.0
  %1539 = vmatpush1.msra.mxu0 0.0
  %1540 = vmatprep.subr.mxu0 0.0
  %1541 = vmatpush1.msra.mxu0 0.0
  %1542 = vmatprep.subr.mxu0 0.0
  %1543 = vmatpush1.msra.mxu0 0.0
  %1544 = vmatprep.subr.mxu0 0.0
  %1545 = vmatpush1.msra.mxu0 0.0
  %1546 = vmatprep.subr.mxu0 0.0
  %1547 = vmatpush1.msra.mxu0 0.0
  %1548 = vmatprep.subr.mxu0 %v1231
  %1549 = vmatpush1.msra.mxu0 %v1230
  %1550 = vmatprep.subr.mxu0 %v1213
  %1551 = vmatpush1.msra.mxu0 %v1212
  %1552 = vmatprep.subr.mxu0 %v1195
  %1553 = vmatpush1.msra.mxu0 %v1194
  %1554 = vmatprep.subr.mxu0 %v1177
  %1555 = vmatpush1.msra.mxu0 %v1176
  %1556 = vmatprep.subr.mxu0 %v1159
  %1557 = vmatpush1.msra.mxu0 %v1158
  %1558 = vmatprep.subr.mxu0 %v1141
  %1559 = vmatpush1.msra.mxu0 %v1140
  %1560 = vmatprep.subr.mxu0 %v1123
  %1561 = vmatpush1.msra.mxu0 %v1122
  %1562 = vmatprep.subr.mxu0 %v1105
  %1563 = vmatpush1.msra.mxu0 %v1104
  %1564 = vmatprep.subr.mxu0 %v1087
  %1565 = vmatpush1.msra.mxu0 %v1086
  %1566 = vmatprep.subr.mxu0 0.0
  %1567 = vmatpush2.msra.mxu0 0.0
  %1568 = vmatprep.subr.mxu0 0.0
  %1569 = vmatpush2.msra.mxu0 0.0
  %1570 = vmatprep.subr.mxu0 0.0
  %1571 = vmatpush2.msra.mxu0 0.0
  %1572 = vmatprep.subr.mxu0 0.0
  %1573 = vmatpush2.msra.mxu0 0.0
  %1574 = vmatprep.subr.mxu0 0.0
  %1575 = vmatpush2.msra.mxu0 0.0
  %1576 = vmatprep.subr.mxu0 0.0
  %1577 = vmatpush2.msra.mxu0 0.0
  %1578 = vmatprep.subr.mxu0 0.0
  %1579 = vmatpush2.msra.mxu0 0.0
  %1580 = vmatprep.subr.mxu0 0.0
  %1581 = vmatpush2.msra.mxu0 0.0
  %1582 = vmatprep.subr.mxu0 0.0
  %1583 = vmatpush2.msra.mxu0 0.0
  %1584 = vmatprep.subr.mxu0 0.0
  %1585 = vmatpush2.msra.mxu0 0.0
  %1586 = vmatprep.subr.mxu0 0.0
  %1587 = vmatpush2.msra.mxu0 0.0
  %1588 = vmatprep.subr.mxu0 0.0
  %1589 = vmatpush2.msra.mxu0 0.0
  %1590 = vmatprep.subr.mxu0 0.0
  %1591 = vmatpush2.msra.mxu0 0.0
  %1592 = vmatprep.subr.mxu0 0.0
  %1593 = vmatpush2.msra.mxu0 0.0
  %1594 = vmatprep.subr.mxu0 0.0
  %1595 = vmatpush2.msra.mxu0 0.0
  %1596 = vmatprep.subr.mxu0 0.0
  %1597 = vmatpush2.msra.mxu0 0.0
  %1598 = vmatprep.mubr.f32.mxu0 0.0
  %1599 = vmatmul.mubr.f32.gmra.mxu0 %v1248
  %v1600 = vpop.f32.mrf.mxu0
  %v1601 = vadd.f32 %v1244, %v1600
  %v1602 = vpop.f32.mrf.mxu0
  %v1603 = vadd.f32 %v1244, %v1602
  %1604 = vdwg.mxu0
  %1605 = vmatprep.subr.mxu0 0.0
  %1606 = vmatpush1.msra.mxu0 0.0
  %1607 = vmatprep.subr.mxu0 0.0
  %1608 = vmatpush1.msra.mxu0 0.0
  %1609 = vmatprep.subr.mxu0 0.0
  %1610 = vmatpush1.msra.mxu0 0.0
  %1611 = vmatprep.subr.mxu0 0.0
  %1612 = vmatpush1.msra.mxu0 0.0
  %1613 = vmatprep.subr.mxu0 0.0
  %1614 = vmatpush1.msra.mxu0 0.0
  %1615 = vmatprep.subr.mxu0 0.0
  %1616 = vmatpush1.msra.mxu0 0.0
  %1617 = vmatprep.subr.mxu0 0.0
  %1618 = vmatpush1.msra.mxu0 0.0
  %1619 = vmatprep.subr.mxu0 %v1233
  %1620 = vmatpush1.msra.mxu0 %v1232
  %1621 = vmatprep.subr.mxu0 %v1215
  %1622 = vmatpush1.msra.mxu0 %v1214
  %1623 = vmatprep.subr.mxu0 %v1197
  %1624 = vmatpush1.msra.mxu0 %v1196
  %1625 = vmatprep.subr.mxu0 %v1179
  %1626 = vmatpush1.msra.mxu0 %v1178
  %1627 = vmatprep.subr.mxu0 %v1161
  %1628 = vmatpush1.msra.mxu0 %v1160
  %1629 = vmatprep.subr.mxu0 %v1143
  %1630 = vmatpush1.msra.mxu0 %v1142
  %1631 = vmatprep.subr.mxu0 %v1125
  %1632 = vmatpush1.msra.mxu0 %v1124
  %1633 = vmatprep.subr.mxu0 %v1107
  %1634 = vmatpush1.msra.mxu0 %v1106
  %1635 = vmatprep.subr.mxu0 %v1089
  %1636 = vmatpush1.msra.mxu0 %v1088
  %1637 = vmatprep.subr.mxu0 0.0
  %1638 = vmatpush2.msra.mxu0 0.0
  %1639 = vmatprep.subr.mxu0 0.0
  %1640 = vmatpush2.msra.mxu0 0.0
  %1641 = vmatprep.subr.mxu0 0.0
  %1642 = vmatpush2.msra.mxu0 0.0
  %1643 = vmatprep.subr.mxu0 0.0
  %1644 = vmatpush2.msra.mxu0 0.0
  %1645 = vmatprep.subr.mxu0 0.0
  %1646 = vmatpush2.msra.mxu0 0.0
  %1647 = vmatprep.subr.mxu0 0.0
  %1648 = vmatpush2.msra.mxu0 0.0
  %1649 = vmatprep.subr.mxu0 0.0
  %1650 = vmatpush2.msra.mxu0 0.0
  %1651 = vmatprep.subr.mxu0 0.0
  %1652 = vmatpush2.msra.mxu0 0.0
  %1653 = vmatprep.subr.mxu0 0.0
  %1654 = vmatpush2.msra.mxu0 0.0
  %1655 = vmatprep.subr.mxu0 0.0
  %1656 = vmatpush2.msra.mxu0 0.0
  %1657 = vmatprep.subr.mxu0 0.0
  %1658 = vmatpush2.msra.mxu0 0.0
  %1659 = vmatprep.subr.mxu0 0.0
  %1660 = vmatpush2.msra.mxu0 0.0
  %1661 = vmatprep.subr.mxu0 0.0
  %1662 = vmatpush2.msra.mxu0 0.0
  %1663 = vmatprep.subr.mxu0 0.0
  %1664 = vmatpush2.msra.mxu0 0.0
  %1665 = vmatprep.subr.mxu0 0.0
  %1666 = vmatpush2.msra.mxu0 0.0
  %1667 = vmatprep.subr.mxu0 0.0
  %1668 = vmatpush2.msra.mxu0 0.0
  %1669 = vmatprep.mubr.f32.mxu0 0.0
  %1670 = vmatmul.mubr.f32.gmra.mxu0 %v1248
  %v1671 = vpop.f32.mrf.mxu0
  %v1672 = vadd.f32 %v1244, %v1671
  %v1673 = vpop.f32.mrf.mxu0
  %v1674 = vadd.f32 %v1244, %v1673
  %1675 = vdwg.mxu0
  %1676 = vmatprep.subr.mxu0 0.0
  %1677 = vmatpush1.msra.mxu0 0.0
  %1678 = vmatprep.subr.mxu0 0.0
  %1679 = vmatpush1.msra.mxu0 0.0
  %1680 = vmatprep.subr.mxu0 0.0
  %1681 = vmatpush1.msra.mxu0 0.0
  %1682 = vmatprep.subr.mxu0 0.0
  %1683 = vmatpush1.msra.mxu0 0.0
  %1684 = vmatprep.subr.mxu0 0.0
  %1685 = vmatpush1.msra.mxu0 0.0
  %1686 = vmatprep.subr.mxu0 0.0
  %1687 = vmatpush1.msra.mxu0 0.0
  %1688 = vmatprep.subr.mxu0 0.0
  %1689 = vmatpush1.msra.mxu0 0.0
  %1690 = vmatprep.subr.mxu0 %v1235
  %1691 = vmatpush1.msra.mxu0 %v1234
  %1692 = vmatprep.subr.mxu0 %v1217
  %1693 = vmatpush1.msra.mxu0 %v1216
  %1694 = vmatprep.subr.mxu0 %v1199
  %1695 = vmatpush1.msra.mxu0 %v1198
  %1696 = vmatprep.subr.mxu0 %v1181
  %1697 = vmatpush1.msra.mxu0 %v1180
  %1698 = vmatprep.subr.mxu0 %v1163
  %1699 = vmatpush1.msra.mxu0 %v1162
  %1700 = vmatprep.subr.mxu0 %v1145
  %1701 = vmatpush1.msra.mxu0 %v1144
  %1702 = vmatprep.subr.mxu0 %v1127
  %1703 = vmatpush1.msra.mxu0 %v1126
  %1704 = vmatprep.subr.mxu0 %v1109
  %1705 = vmatpush1.msra.mxu0 %v1108
  %1706 = vmatprep.subr.mxu0 %v1091
  %1707 = vmatpush1.msra.mxu0 %v1090
  %1708 = vmatprep.subr.mxu0 0.0
  %1709 = vmatpush2.msra.mxu0 0.0
  %1710 = vmatprep.subr.mxu0 0.0
  %1711 = vmatpush2.msra.mxu0 0.0
  %1712 = vmatprep.subr.mxu0 0.0
  %1713 = vmatpush2.msra.mxu0 0.0
  %1714 = vmatprep.subr.mxu0 0.0
  %1715 = vmatpush2.msra.mxu0 0.0
  %1716 = vmatprep.subr.mxu0 0.0
  %1717 = vmatpush2.msra.mxu0 0.0
  %1718 = vmatprep.subr.mxu0 0.0
  %1719 = vmatpush2.msra.mxu0 0.0
  %1720 = vmatprep.subr.mxu0 0.0
  %1721 = vmatpush2.msra.mxu0 0.0
  %1722 = vmatprep.subr.mxu0 0.0
  %1723 = vmatpush2.msra.mxu0 0.0
  %1724 = vmatprep.subr.mxu0 0.0
  %1725 = vmatpush2.msra.mxu0 0.0
  %1726 = vmatprep.subr.mxu0 0.0
  %1727 = vmatpush2.msra.mxu0 0.0
  %1728 = vmatprep.subr.mxu0 0.0
  %1729 = vmatpush2.msra.mxu0 0.0
  %1730 = vmatprep.subr.mxu0 0.0
  %1731 = vmatpush2.msra.mxu0 0.0
  %1732 = vmatprep.subr.mxu0 0.0
  %1733 = vmatpush2.msra.mxu0 0.0
  %1734 = vmatprep.subr.mxu0 0.0
  %1735 = vmatpush2.msra.mxu0 0.0
  %1736 = vmatprep.subr.mxu0 0.0
  %1737 = vmatpush2.msra.mxu0 0.0
  %1738 = vmatprep.subr.mxu0 0.0
  %1739 = vmatpush2.msra.mxu0 0.0
  %1740 = vmatprep.mubr.f32.mxu0 0.0
  %1741 = vmatmul.mubr.f32.gmra.mxu0 %v1248
  %v1742 = vpop.f32.mrf.mxu0
  %v1743 = vadd.f32 %v1244, %v1742
  %v1744 = vpop.f32.mrf.mxu0
  %v1745 = vadd.f32 %v1244, %v1744
  %1746 = vdwg.mxu0
  %1747 = vmatprep.subr.mxu0 0.0
  %1748 = vmatpush1.msra.mxu0 0.0
  %1749 = vmatprep.subr.mxu0 0.0
  %1750 = vmatpush1.msra.mxu0 0.0
  %1751 = vmatprep.subr.mxu0 0.0
  %1752 = vmatpush1.msra.mxu0 0.0
  %1753 = vmatprep.subr.mxu0 0.0
  %1754 = vmatpush1.msra.mxu0 0.0
  %1755 = vmatprep.subr.mxu0 0.0
  %1756 = vmatpush1.msra.mxu0 0.0
  %1757 = vmatprep.subr.mxu0 0.0
  %1758 = vmatpush1.msra.mxu0 0.0
  %1759 = vmatprep.subr.mxu0 0.0
  %1760 = vmatpush1.msra.mxu0 0.0
  %1761 = vmatprep.subr.mxu0 %v1237
  %1762 = vmatpush1.msra.mxu0 %v1236
  %1763 = vmatprep.subr.mxu0 %v1219
  %1764 = vmatpush1.msra.mxu0 %v1218
  %1765 = vmatprep.subr.mxu0 %v1201
  %1766 = vmatpush1.msra.mxu0 %v1200
  %1767 = vmatprep.subr.mxu0 %v1183
  %1768 = vmatpush1.msra.mxu0 %v1182
  %1769 = vmatprep.subr.mxu0 %v1165
  %1770 = vmatpush1.msra.mxu0 %v1164
  %1771 = vmatprep.subr.mxu0 %v1147
  %1772 = vmatpush1.msra.mxu0 %v1146
  %1773 = vmatprep.subr.mxu0 %v1129
  %1774 = vmatpush1.msra.mxu0 %v1128
  %1775 = vmatprep.subr.mxu0 %v1111
  %1776 = vmatpush1.msra.mxu0 %v1110
  %1777 = vmatprep.subr.mxu0 %v1093
  %1778 = vmatpush1.msra.mxu0 %v1092
  %1779 = vmatprep.subr.mxu0 0.0
  %1780 = vmatpush2.msra.mxu0 0.0
  %1781 = vmatprep.subr.mxu0 0.0
  %1782 = vmatpush2.msra.mxu0 0.0
  %1783 = vmatprep.subr.mxu0 0.0
  %1784 = vmatpush2.msra.mxu0 0.0
  %1785 = vmatprep.subr.mxu0 0.0
  %1786 = vmatpush2.msra.mxu0 0.0
  %1787 = vmatprep.subr.mxu0 0.0
  %1788 = vmatpush2.msra.mxu0 0.0
  %1789 = vmatprep.subr.mxu0 0.0
  %1790 = vmatpush2.msra.mxu0 0.0
  %1791 = vmatprep.subr.mxu0 0.0
  %1792 = vmatpush2.msra.mxu0 0.0
  %1793 = vmatprep.subr.mxu0 0.0
  %1794 = vmatpush2.msra.mxu0 0.0
  %1795 = vmatprep.subr.mxu0 0.0
  %1796 = vmatpush2.msra.mxu0 0.0
  %1797 = vmatprep.subr.mxu0 0.0
  %1798 = vmatpush2.msra.mxu0 0.0
  %1799 = vmatprep.subr.mxu0 0.0
  %1800 = vmatpush2.msra.mxu0 0.0
  %1801 = vmatprep.subr.mxu0 0.0
  %1802 = vmatpush2.msra.mxu0 0.0
  %1803 = vmatprep.subr.mxu0 0.0
  %1804 = vmatpush2.msra.mxu0 0.0
  %1805 = vmatprep.subr.mxu0 0.0
  %1806 = vmatpush2.msra.mxu0 0.0
  %1807 = vmatprep.subr.mxu0 0.0
  %1808 = vmatpush2.msra.mxu0 0.0
  %1809 = vmatprep.subr.mxu0 0.0
  %1810 = vmatpush2.msra.mxu0 0.0
  %1811 = vmatprep.mubr.f32.mxu0 0.0
  %1812 = vmatmul.mubr.f32.gmra.mxu0 %v1248
  %v1813 = vpop.f32.mrf.mxu0
  %v1814 = vadd.f32 %v1244, %v1813
  %v1815 = vpop.f32.mrf.mxu0
  %v1816 = vadd.f32 %v1244, %v1815
  %1817 = vdwg.mxu0
  %1818 = vmatprep.subr.mxu0 0.0
  %1819 = vmatpush1.msra.mxu0 0.0
  %1820 = vmatprep.subr.mxu0 0.0
  %1821 = vmatpush1.msra.mxu0 0.0
  %1822 = vmatprep.subr.mxu0 0.0
  %1823 = vmatpush1.msra.mxu0 0.0
  %1824 = vmatprep.subr.mxu0 0.0
  %1825 = vmatpush1.msra.mxu0 0.0
  %1826 = vmatprep.subr.mxu0 0.0
  %1827 = vmatpush1.msra.mxu0 0.0
  %1828 = vmatprep.subr.mxu0 0.0
  %1829 = vmatpush1.msra.mxu0 0.0
  %1830 = vmatprep.subr.mxu0 0.0
  %1831 = vmatpush1.msra.mxu0 0.0
  %1832 = vmatprep.subr.mxu0 %v1239
  %1833 = vmatpush1.msra.mxu0 %v1238
  %1834 = vmatprep.subr.mxu0 %v1221
  %1835 = vmatpush1.msra.mxu0 %v1220
  %1836 = vmatprep.subr.mxu0 %v1203
  %1837 = vmatpush1.msra.mxu0 %v1202
  %1838 = vmatprep.subr.mxu0 %v1185
  %1839 = vmatpush1.msra.mxu0 %v1184
  %1840 = vmatprep.subr.mxu0 %v1167
  %1841 = vmatpush1.msra.mxu0 %v1166
  %1842 = vmatprep.subr.mxu0 %v1149
  %1843 = vmatpush1.msra.mxu0 %v1148
  %1844 = vmatprep.subr.mxu0 %v1131
  %1845 = vmatpush1.msra.mxu0 %v1130
  %1846 = vmatprep.subr.mxu0 %v1113
  %1847 = vmatpush1.msra.mxu0 %v1112
  %1848 = vmatprep.subr.mxu0 %v1095
  %1849 = vmatpush1.msra.mxu0 %v1094
  %1850 = vmatprep.subr.mxu0 0.0
  %1851 = vmatpush2.msra.mxu0 0.0
  %1852 = vmatprep.subr.mxu0 0.0
  %1853 = vmatpush2.msra.mxu0 0.0
  %1854 = vmatprep.subr.mxu0 0.0
  %1855 = vmatpush2.msra.mxu0 0.0
  %1856 = vmatprep.subr.mxu0 0.0
  %1857 = vmatpush2.msra.mxu0 0.0
  %1858 = vmatprep.subr.mxu0 0.0
  %1859 = vmatpush2.msra.mxu0 0.0
  %1860 = vmatprep.subr.mxu0 0.0
  %1861 = vmatpush2.msra.mxu0 0.0
  %1862 = vmatprep.subr.mxu0 0.0
  %1863 = vmatpush2.msra.mxu0 0.0
  %1864 = vmatprep.subr.mxu0 0.0
  %1865 = vmatpush2.msra.mxu0 0.0
  %1866 = vmatprep.subr.mxu0 0.0
  %1867 = vmatpush2.msra.mxu0 0.0
  %1868 = vmatprep.subr.mxu0 0.0
  %1869 = vmatpush2.msra.mxu0 0.0
  %1870 = vmatprep.subr.mxu0 0.0
  %1871 = vmatpush2.msra.mxu0 0.0
  %1872 = vmatprep.subr.mxu0 0.0
  %1873 = vmatpush2.msra.mxu0 0.0
  %1874 = vmatprep.subr.mxu0 0.0
  %1875 = vmatpush2.msra.mxu0 0.0
  %1876 = vmatprep.subr.mxu0 0.0
  %1877 = vmatpush2.msra.mxu0 0.0
  %1878 = vmatprep.subr.mxu0 0.0
  %1879 = vmatpush2.msra.mxu0 0.0
  %1880 = vmatprep.subr.mxu0 0.0
  %1881 = vmatpush2.msra.mxu0 0.0
  %1882 = vmatprep.mubr.f32.mxu0 0.0
  %1883 = vmatmul.mubr.f32.gmra.mxu0 %v1248
  %v1884 = vpop.f32.mrf.mxu0
  %v1885 = vadd.f32 %v1244, %v1884
  %v1886 = vpop.f32.mrf.mxu0
  %v1887 = vadd.f32 %v1244, %v1886
  %1888 = vdwg.mxu0
  %v1889 = vld [vmem:[%s2] sm:$0xff]
  %v1890 = vld [vmem:[%s2 + $0x8] sm:$0xff]
  %v1891 = vld [vmem:[%s2 + $0x10] sm:$0x3]
  %v1895 = vlaneseq
  %v1896 = vshrl.u32 %v1895, 7
  %v1897 = vsub.s32 0, %v1896
  %v1898 = vrot.slane %v1889, %v1897
  %v1899 = vlaneseq
  %v1900 = vshrl.u32 %v1899, 7
  %v1901 = vsub.s32 1, %v1900
  %v1902 = vrot.slane %v1889, %v1901
  %v1903 = vlaneseq
  %v1904 = vshrl.u32 %v1903, 7
  %v1905 = vsub.s32 2, %v1904
  %v1906 = vrot.slane %v1889, %v1905
  %v1907 = vlaneseq
  %v1908 = vshrl.u32 %v1907, 7
  %v1909 = vsub.s32 3, %v1908
  %v1910 = vrot.slane %v1889, %v1909
  %v1911 = vlaneseq
  %v1912 = vshrl.u32 %v1911, 7
  %v1913 = vsub.s32 4, %v1912
  %v1914 = vrot.slane %v1889, %v1913
  %v1915 = vlaneseq
  %v1916 = vshrl.u32 %v1915, 7
  %v1917 = vsub.s32 5, %v1916
  %v1918 = vrot.slane %v1889, %v1917
  %v1919 = vlaneseq
  %v1920 = vshrl.u32 %v1919, 7
  %v1921 = vsub.s32 6, %v1920
  %v1922 = vrot.slane %v1889, %v1921
  %v1923 = vlaneseq
  %v1924 = vshrl.u32 %v1923, 7
  %v1925 = vsub.s32 7, %v1924
  %v1926 = vrot.slane %v1889, %v1925
  %v1927 = vlaneseq
  %v1928 = vshrl.u32 %v1927, 7
  %v1929 = vsub.s32 0, %v1928
  %v1930 = vrot.slane %v1890, %v1929
  %v1931 = vlaneseq
  %v1932 = vshrl.u32 %v1931, 7
  %v1933 = vsub.s32 1, %v1932
  %v1934 = vrot.slane %v1890, %v1933
  %v1935 = vlaneseq
  %v1936 = vshrl.u32 %v1935, 7
  %v1937 = vsub.s32 2, %v1936
  %v1938 = vrot.slane %v1890, %v1937
  %v1939 = vlaneseq
  %v1940 = vshrl.u32 %v1939, 7
  %v1941 = vsub.s32 3, %v1940
  %v1942 = vrot.slane %v1890, %v1941
  %v1943 = vlaneseq
  %v1944 = vshrl.u32 %v1943, 7
  %v1945 = vsub.s32 4, %v1944
  %v1946 = vrot.slane %v1890, %v1945
  %v1947 = vlaneseq
  %v1948 = vshrl.u32 %v1947, 7
  %v1949 = vsub.s32 5, %v1948
  %v1950 = vrot.slane %v1890, %v1949
  %v1951 = vlaneseq
  %v1952 = vshrl.u32 %v1951, 7
  %v1953 = vsub.s32 6, %v1952
  %v1954 = vrot.slane %v1890, %v1953
  %v1955 = vlaneseq
  %v1956 = vshrl.u32 %v1955, 7
  %v1957 = vsub.s32 7, %v1956
  %v1958 = vrot.slane %v1890, %v1957
  %v1959 = vlaneseq
  %v1960 = vshrl.u32 %v1959, 7
  %v1961 = vsub.s32 0, %v1960
  %v1962 = vrot.slane %v1891, %v1961
  %v1963 = vlaneseq
  %v1964 = vshrl.u32 %v1963, 7
  %v1965 = vsub.s32 1, %v1964
  %v1966 = vrot.slane %v1891, %v1965
  %v1985 = vmul.f32 %v1317, %v1898
  %v1986 = vmul.f32 %v1319, %v1902
  %v1987 = vmul.f32 %v1388, %v1906
  %v1988 = vmul.f32 %v1390, %v1910
  %v1989 = vmul.f32 %v1459, %v1914
  %v1990 = vmul.f32 %v1461, %v1918
  %v1991 = vmul.f32 %v1530, %v1922
  %v1992 = vmul.f32 %v1532, %v1926
  %v1993 = vmul.f32 %v1601, %v1930
  %v1994 = vmul.f32 %v1603, %v1934
  %v1995 = vmul.f32 %v1672, %v1938
  %v1996 = vmul.f32 %v1674, %v1942
  %v1997 = vmul.f32 %v1743, %v1946
  %v1998 = vmul.f32 %v1745, %v1950
  %v1999 = vmul.f32 %v1814, %v1954
  %v2000 = vmul.f32 %v1816, %v1958
  %v2001 = vmul.f32 %v1885, %v1962
  %v2002 = vmul.f32 %v1887, %v1966
  %vm2003 = vcmask 280576
  %2004 = vst.msk [vmem:[%s4] sm:$0x7] %vm2003, 0.0
  %v2023 = vcombine.low %v1985, %v1986
  %v2024 = vcombine.low %v1987, %v1988
  %v2025 = vcombine.low %v1989, %v1990
  %v2026 = vcombine.low %v1991, %v1992
  %v2027 = vcombine.low %v1993, %v1994
  %v2028 = vcombine.low %v1995, %v1996
  %v2029 = vcombine.low %v1997, %v1998
  %v2030 = vcombine.low %v1999, %v2000
  %v2031 = vcombine.low %v2001, %v2002
  %2032 = vrot.lane.b32.xlu0 %v2023, 35
  %v2033 = vpop.permute.xlu0 %2032
  %2034 = vrot.lane.b32.xlu0 %v2024, 35
  %v2035 = vpop.permute.xlu0 %2034
  %2036 = vrot.lane.b32.xlu0 %v2025, 35
  %v2037 = vpop.permute.xlu0 %2036
  %2038 = vrot.lane.b32.xlu0 %v2026, 35
  %v2039 = vpop.permute.xlu0 %2038
  %2040 = vrot.lane.b32.xlu0 %v2027, 35
  %v2041 = vpop.permute.xlu0 %2040
  %2042 = vrot.lane.b32.xlu0 %v2028, 35
  %v2043 = vpop.permute.xlu0 %2042
  %2044 = vrot.lane.b32.xlu0 %v2029, 35
  %v2045 = vpop.permute.xlu0 %2044
  %2046 = vrot.lane.b32.xlu0 %v2030, 35
  %v2047 = vpop.permute.xlu0 %2046
  %2048 = vrot.lane.b32.xlu0 %v2031, 35
  %v2049 = vpop.permute.xlu0 %2048
  %v2050 = vrot.slane %v2033, 4
  %v2051 = vrot.slane %v2035, 4
  %v2052 = vrot.slane %v2037, 4
  %v2053 = vrot.slane %v2039, 4
  %v2054 = vrot.slane %v2041, 4
  %v2055 = vrot.slane %v2043, 4
  %v2056 = vrot.slane %v2045, 4
  %v2057 = vrot.slane %v2047, 4
  %v2058 = vrot.slane %v2049, 4
  %vm2059 = vcmask 285696
  %v2060 = vsel %vm2059, %v2050, %v2033
  %vm2061 = vcmask 1043456
  %v2062 = vsel %vm2061, %v2050, %v2051
  %v2063 = vsel %vm2059, %v2062, %v2035
  %v2064 = vsel %vm2061, %v2051, %v2052
  %v2065 = vsel %vm2059, %v2064, %v2037
  %v2066 = vsel %vm2061, %v2052, %v2053
  %v2067 = vsel %vm2059, %v2066, %v2039
  %v2068 = vsel %vm2061, %v2053, %v2054
  %v2069 = vsel %vm2059, %v2068, %v2041
  %v2070 = vsel %vm2061, %v2054, %v2055
  %v2071 = vsel %vm2059, %v2070, %v2043
  %v2072 = vsel %vm2061, %v2055, %v2056
  %v2073 = vsel %vm2059, %v2072, %v2045
  %v2074 = vsel %vm2061, %v2056, %v2057
  %v2075 = vsel %vm2059, %v2074, %v2047
  %v2076 = vsel %vm2061, %v2057, %v2058
  %v2077 = vsel %vm2059, %v2076, %v2049
  %vm2087 = vcmask 1042712
  %vm2088 = vcmask 1046532
  %vm2089 = vmor %vm2088, %vm2087
  %2090 = vst.msk [vmem:[%s4] sm:$0x77] %vm2089, %v2060
  %2091 = vst [vmem:[%s4 + $0x8] sm:$0x77] %v2063
  %2092 = vst [vmem:[%s4 + $0x10] sm:$0x77] %v2065
  %2093 = vst [vmem:[%s4 + $0x18] sm:$0x77] %v2067
  %2094 = vst [vmem:[%s4 + $0x20] sm:$0x77] %v2069
  %2095 = vst [vmem:[%s4 + $0x28] sm:$0x77] %v2071
  %2096 = vst [vmem:[%s4 + $0x30] sm:$0x77] %v2073
  %2097 = vst [vmem:[%s4 + $0x38] sm:$0x77] %v2075
  %vm2098 = vcmask 1042432
  %vm2099 = vcmask 825348
  %vm2100 = vmor %vm2099, %vm2098
  %2101 = vst.msk [vmem:[%s4 + $0x40] sm:$0x77] %vm2100, %v2077
  %vm2102 = vcmask 1043240
  %vm2103 = vcmask 63492
  %vm2104 = vmor %vm2103, %vm2102
  %2105 = vst.msk [vmem:[%s4 + $0x44] sm:$0x77] %vm2104, 0.0
  // Predicated region
  $region18: #{edsr_forward.11} parent=0 // pred_check
    _
  $region19: #{edsr_forward.11} parent=0 // pred_check_branch
    %2107 = sbr.rel (0) target = $region21
  $region20: #{edsr_forward.11} parent=0 // pred_region
    _
  $region21: #{edsr_forward.11} parent=0 // pred_fallthru
    _
  // Predicated region
  $region22: #{edsr_forward.11} parent=0 // pred_check
    _
  $region23: #{edsr_forward.11} parent=0 // pred_check_branch
    %2109 = sbr.rel (0) target = $region25
  $region24: #{edsr_forward.11} parent=0 // pred_region
    _
  $region25: #{edsr_forward.11} parent=0 // pred_fallthru
    _

</llo_original>
